<compile_context>
chip_gen: v5e
topology: v5e:2x2
jax: 0.10.0
libtpu: 0.0.40
codegen_flags: <defaults>
</compile_context>

<pallas_src>
import jax
import jax.numpy as jnp
from jax import lax
from jax.experimental import pallas as pl
from jax.experimental.pallas import tpu as pltpu

BN_EPS = 1e-5


def _round_up(x, m):
    return (x + m - 1) // m * m


def _vmem_limit_bytes():
    """Per-generation VMEM limit: v5e/v6e have 128 MiB, v7x only 64 MiB per TC."""
    try:
        phys = int(pltpu.get_tpu_info().vmem_capacity_bytes)
    except Exception:
        phys = 64 * 1024 * 1024  # conservative (v7x-sized) fallback
    return min(int(phys * 0.75), 96 * 1024 * 1024)


def _pick_tile(s_out, cin, cout, c_max, n_batch, budget_bytes):
    """Largest multiple-of-128 spatial tile whose per-step footprint
    (double-buffered blocks of both passes + f32 accumulator) fits the budget."""
    cap = _round_up(s_out, 128)
    tm = _round_up(min(8 * 1024, cap), 128)

    def footprint(t):
        win = _round_up(t + c_max, 128)
        # pass 1: bf16 window in (x2 buffers) + bf16 conv out (x2) + f32 acc + temps
        p1 = 2 * cin * win * 2 + 2 * cout * t * 2 + cout * t * 4 + 4 * cin * t * 2
        # pass 2: bf16 in (x2) + f32 out (x2)
        p2 = 2 * cout * t * 2 + 2 * cout * t * 4
        return max(p1, p2)

    while tm > 128 and footprint(tm) > budget_bytes:
        tm = _round_up(tm // 2, 128)
    # v7x megacore: if there is no batch axis to split, keep >= 2 spatial tiles.
    if n_batch == 1 and tm > 128 and _round_up(s_out, tm) // tm < 2:
        tm = _round_up(tm // 2, 128)
    return tm


# ---------------- Pallas kernels ----------------

def _make_conv_stats_kernel(shifts, cout, tm):
    """Implicit-GEMM conv tile: accumulate kd*kh*kw small MXU matmuls over
    statically shifted windows, plus masked f32 partial BN statistics."""

    def kernel(xwin_ref, w_ref, mask_ref, out_ref, stats_ref):
        win = xwin_ref[0, 0]                                    # (Cin, WIN) bf16
        acc = jnp.zeros((cout, tm), jnp.float32)
        for idx, c in enumerate(shifts):                        # static unroll
            xs = win[:, c:c + tm]                               # (Cin, TM) bf16
            acc = acc + jnp.dot(w_ref[idx], xs,
                                preferred_element_type=jnp.float32)
        out_ref[0] = acc.astype(out_ref.dtype)                  # bf16 intermediate

        m = mask_ref[0]                                         # (1, TM) validity
        am = acc * m                                            # masked values
        s1 = am.sum(axis=1, keepdims=True)                      # (Cout, 1)
        s2 = (am * acc).sum(axis=1, keepdims=True)              # masked sum of sq.
        stats_ref[0, 0] = jnp.concatenate([s1, s2], axis=1)     # single (Cout,2) store

    return kernel


def _bn_relu_kernel(y_ref, scale_ref, shift_ref, out_ref):
    """Fused affine BN (precomputed per-channel scale/shift) + ReLU on
    lane-dense (Cout, TM) tiles; bf16 in, f32 math, f32 out."""
    y = y_ref[0].astype(jnp.float32)                            # (Cout, TM)
    out_ref[0] = jnp.maximum(y * scale_ref[...] + shift_ref[...], 0.0)


# ---------------- JAX glue ----------------

def cbr_forward(x, weight, gamma, beta, *, padding, dilation):
    """CBRModule.forward: Conv3d(bias=False) -> BatchNorm3d(batch stats) -> ReLU."""
    N, Cin, D, H, W = x.shape
    Cout, _, kd, kh, kw = weight.shape
    pd = ph = pw = padding
    dd = dh = dw = dilation

    Dp, Hp, Wp = D + 2 * pd, H + 2 * ph, W + 2 * pw
    Do, Ho, Wo = Dp - dd * (kd - 1), Hp - dh * (kh - 1), Wp - dw * (kw - 1)
    assert min(Do, Ho, Wo) > 0, "conv output must be non-empty"

    HW = Hp * Wp
    S_out = Do * HW                                 # flat padded-coord length covering all valid outputs
    c_max = dd * (kd - 1) * HW + dh * (kh - 1) * Wp + dw * (kw - 1)
    shifts = [dd * i * HW + dh * j * Wp + dw * l
              for i in range(kd) for j in range(kh) for l in range(kw)]
    KK = kd * kh * kw

    vmem_limit = _vmem_limit_bytes()
    TM = _pick_tile(S_out, Cin, Cout, c_max, N, int(vmem_limit * 0.75))
    S_pad = _round_up(S_out, TM)
    T = S_pad // TM
    WIN = _round_up(TM + c_max, 128)                # lane-aligned per-tile window

    # --- thin overlapping-window view of the padded input (bf16), streamed per tile.
    xp = jnp.pad(x, ((0, 0), (0, 0), (pd, pd), (ph, ph), (pw, pw)))
    P = Dp * HW
    L = (T - 1) * TM + WIN
    xflat = xp.reshape(N, Cin, P).astype(jnp.bfloat16)
    if L > P:
        xflat = jnp.pad(xflat, ((0, 0), (0, 0), (0, L - P)))
    idx = jnp.arange(T)[:, None] * TM + jnp.arange(WIN)[None, :]     # (T, WIN)
    xwin = jnp.take(xflat, idx, axis=2)                              # (N, Cin, T, WIN)
    xwin = jnp.transpose(xwin, (0, 2, 1, 3))                         # (N, T, Cin, WIN)

    # Weights as (kd*kh*kw, Cout, Cin), matching the `shifts` ordering.
    w2 = jnp.transpose(weight, (2, 3, 4, 0, 1)).reshape(KK, Cout, Cin)
    w2 = w2.astype(jnp.bfloat16)

    # Validity mask: 1.0 where the flat padded-coord position is a real output
    # (excludes the H/W halo columns and the lane-padding tail).
    p = jnp.arange(S_pad)
    valid = (p % Wp < Wo) & ((p // Wp) % Hp < Ho) & (p // HW < Do)
    mask = valid.astype(jnp.float32).reshape(T, 1, TM)

    # Pass 1: implicit-GEMM conv with lane-dense (Cout, TM) bf16 output tiles and
    # consolidated masked f32 partial BN statistics.
    conv_kernel = _make_conv_stats_kernel(shifts, Cout, TM)
    conv_out, stats = pl.pallas_call(
        conv_kernel,
        out_shape=(jax.ShapeDtypeStruct((N, Cout, S_pad), jnp.bfloat16),
                   jax.ShapeDtypeStruct((N, T, Cout, 2), jnp.float32)),
        grid_spec=pltpu.PrefetchScalarGridSpec(
            num_scalar_prefetch=0,
            grid=(N, T),
            in_specs=[pl.BlockSpec((1, 1, Cin, WIN), lambda n, t: (n, t, 0, 0)),
                      pl.BlockSpec((KK, Cout, Cin), lambda n, t: (0, 0, 0)),
                      pl.BlockSpec((1, 1, TM), lambda n, t: (t, 0, 0))],
            out_specs=(pl.BlockSpec((1, Cout, TM), lambda n, t: (n, 0, t)),
                       pl.BlockSpec((1, 1, Cout, 2), lambda n, t: (n, t, 0, 0)))),
        compiler_params=pltpu.CompilerParams(
            dimension_semantics=("parallel", "parallel"),
            vmem_limit_bytes=vmem_limit),
    )(xwin, w2, mask)

    # BatchNorm3d (training mode): biased variance over (N, D, H, W) per channel.
    M = jnp.float32(N * Do * Ho * Wo)
    totals = stats.sum(axis=(0, 1))                            # (Cout, 2)
    mean = totals[:, 0] / M
    var = jnp.maximum(totals[:, 1] / M - mean * mean, 0.0)     # clamp cancellation
    inv = gamma.astype(jnp.float32) / jnp.sqrt(var + BN_EPS)
    scale = inv.reshape(Cout, 1)
    shift = (beta.astype(jnp.float32) - mean * inv).reshape(Cout, 1)

    # Pass 2: fused BN + ReLU on lane-dense tiles (bf16 in, f32 out).
    y = pl.pallas_call(
        _bn_relu_kernel,
        out_shape=jax.ShapeDtypeStruct((N, Cout, S_pad), jnp.float32),
        grid_spec=pltpu.PrefetchScalarGridSpec(
            num_scalar_prefetch=0,
            grid=(N, T),
            in_specs=[pl.BlockSpec((1, Cout, TM), lambda n, t: (n, 0, t)),
                      pl.BlockSpec((Cout, 1), lambda n, t: (0, 0)),
                      pl.BlockSpec((Cout, 1), lambda n, t: (0, 0))],
            out_specs=pl.BlockSpec((1, Cout, TM), lambda n, t: (n, 0, t))),
        compiler_params=pltpu.CompilerParams(
            dimension_semantics=("parallel", "parallel"),
            vmem_limit_bytes=vmem_limit),
    )(conv_out, scale, shift)

    # Compact padded-coord flat layout -> NCDHW (cheap XLA slice).
    y = y[:, :, :S_out].reshape(N, Cout, Do, Hp, Wp)[:, :, :, :Ho, :Wo]
    return y


def cbr_reference(x, weight, gamma, beta, padding, dilation, conv_dtype=jnp.float32):
    conv = lax.conv_general_dilated(
        x.astype(conv_dtype), weight.astype(conv_dtype),
        window_strides=(1, 1, 1),
        padding=[(padding, padding)] * 3,
        rhs_dilation=(dilation,) * 3,
        dimension_numbers=('NCDHW', 'OIDHW', 'NCDHW'),
        preferred_element_type=jnp.float32)
    mean = conv.mean(axis=(0, 2, 3, 4), keepdims=True)
    var = conv.var(axis=(0, 2, 3, 4), keepdims=True)   # biased, like BN batch stats
    g = gamma.reshape(1, -1, 1, 1, 1)
    b = beta.reshape(1, -1, 1, 1, 1)
    return jnp.maximum((conv - mean) / jnp.sqrt(var + BN_EPS) * g + b, 0.0)


if __name__ == "__main__":
    key = jax.random.PRNGKey(0)
    N, Cin, Cout = 2, 4, 8
    D = H = W = 8
    ks, pad, dil = 3, 1, 1

    kx, kw_ = jax.random.split(key)
    x = jax.random.normal(kx, (N, Cin, D, H, W), jnp.float32)

    # Conv3d weight: kaiming_normal_ (fan_in = Cin*kd*kh*kw, gain = sqrt(2)), bias=False.
    fan_in = Cin * ks * ks * ks
    std = (2.0 / fan_in) ** 0.5
    weight = std * jax.random.normal(kw_, (Cout, Cin, ks, ks, ks), jnp.float32)

    # BatchNorm3d params per _init_weight: weight=1, bias=0.
    gamma = jnp.ones((Cout,), jnp.float32)
    beta = jnp.zeros((Cout,), jnp.float32)

    fwd = jax.jit(cbr_forward, static_argnames=("padding", "dilation"))
    out = jax.block_until_ready(fwd(x, weight, gamma, beta, padding=pad, dilation=dil))
    assert out.shape == (N, Cout, D, H, W)

    # Check vs a reference at matching MXU precision (bf16 inputs, f32 accumulation);
    # tolerance covers the bf16 conv intermediate.
    ref_bf16 = cbr_reference(x, weight, gamma, beta, pad, dil, conv_dtype=jnp.bfloat16)
    assert jnp.allclose(out, ref_bf16, atol=5e-3, rtol=5e-3), \
        "mismatch vs bf16-precision reference"

    # Looser check vs the full-f32 reference (difference only from bf16 rounding).
    ref_f32 = cbr_reference(x, weight, gamma, beta, pad, dil, conv_dtype=jnp.float32)
    assert jnp.allclose(out, ref_f32, atol=2e-2, rtol=2e-2), \
        "mismatch vs pure-f32 reference"

    print("KERNEL_OK")
</pallas_src>

<mosaic_0001>
module attributes {stable_mosaic.version = 11 : i64} {
  func.func @kernel(%arg0: i32, %arg1: i32, %arg2: memref<1x1x4x1152xbf16, #tpu.memory_space<vmem>>, %arg3: memref<27x8x4xbf16, #tpu.memory_space<vmem>>, %arg4: memref<1x1x896xf32, #tpu.memory_space<vmem>>, %arg5: memref<1x8x896xbf16, #tpu.memory_space<vmem>>, %arg6: memref<1x1x8x2xf32, #tpu.memory_space<vmem>>) attributes {dimension_semantics = [#tpu.dimension_semantics<parallel>, #tpu.dimension_semantics<parallel>], iteration_bounds = array<i64: 2, 1>, scalar_prefetch = 0 : i64, scratch_operands = 0 : i64, tpu.core_type = #tpu.core_type<tc>, window_params = [{transform_indices = @transform_0, window_bounds = array<i64: 1, 1, 4, 1152>}, {pipeline_mode = #tpu.pipeline_mode<synchronous>, transform_indices = @transform_1, window_bounds = array<i64: 27, 8, 4>}, {transform_indices = @transform_2, window_bounds = array<i64: 1, 1, 896>}, {transform_indices = @transform_3, window_bounds = array<i64: 1, 8, 896>}, {transform_indices = @transform_4, window_bounds = array<i64: 1, 1, 8, 2>}]} {
    %c0 = arith.constant 0 : index
    %c0_0 = arith.constant 0 : index
    %c0_1 = arith.constant 0 : index
    %c0_2 = arith.constant 0 : index
    %0 = vector.load %arg2[%c0, %c0_0, %c0_1, %c0_2] : memref<1x1x4x1152xbf16, #tpu.memory_space<vmem>>, vector<1x1x4x1152xbf16>
    %1 = vector.shape_cast %0 : vector<1x1x4x1152xbf16> to vector<4x1152xbf16>
    %cst = arith.constant 0.000000e+00 : f32
    %2 = vector.broadcast %cst : f32 to vector<8x896xf32>
    %3 = vector.extract_strided_slice %1 {offsets = [0, 0], sizes = [4, 896], strides = [1, 1]} : vector<4x1152xbf16> to vector<4x896xbf16>
    %c0_3 = arith.constant 0 : index
    %c0_4 = arith.constant 0 : index
    %c0_5 = arith.constant 0 : index
    %4 = vector.load %arg3[%c0_3, %c0_4, %c0_5] : memref<27x8x4xbf16, #tpu.memory_space<vmem>>, vector<1x8x4xbf16>
    %5 = vector.shape_cast %4 : vector<1x8x4xbf16> to vector<8x4xbf16>
    %cst_6 = arith.constant dense<0.000000e+00> : vector<8x896xf32>
    %6 = tpu.matmul %5, %3, %cst_6 {dimension_numbers = #tpu.dot_dimension_numbers<[1], [0], [0], [1], [0, 0, 1, 1], [], []>} : vector<8x4xbf16>, vector<4x896xbf16>, vector<8x896xf32> -> vector<8x896xf32>
    %7 = arith.addf %2, %6 : vector<8x896xf32>
    %8 = vector.extract_strided_slice %1 {offsets = [0, 1], sizes = [4, 896], strides = [1, 1]} : vector<4x1152xbf16> to vector<4x896xbf16>
    %c1 = arith.constant 1 : index
    %c0_7 = arith.constant 0 : index
    %c0_8 = arith.constant 0 : index
    %9 = vector.load %arg3[%c1, %c0_7, %c0_8] : memref<27x8x4xbf16, #tpu.memory_space<vmem>>, vector<1x8x4xbf16>
    %10 = vector.shape_cast %9 : vector<1x8x4xbf16> to vector<8x4xbf16>
    %cst_9 = arith.constant dense<0.000000e+00> : vector<8x896xf32>
    %11 = tpu.matmul %10, %8, %cst_9 {dimension_numbers = #tpu.dot_dimension_numbers<[1], [0], [0], [1], [0, 0, 1, 1], [], []>} : vector<8x4xbf16>, vector<4x896xbf16>, vector<8x896xf32> -> vector<8x896xf32>
    %12 = arith.addf %7, %11 : vector<8x896xf32>
    %13 = vector.extract_strided_slice %1 {offsets = [0, 2], sizes = [4, 896], strides = [1, 1]} : vector<4x1152xbf16> to vector<4x896xbf16>
    %c2 = arith.constant 2 : index
    %c0_10 = arith.constant 0 : index
    %c0_11 = arith.constant 0 : index
    %14 = vector.load %arg3[%c2, %c0_10, %c0_11] : memref<27x8x4xbf16, #tpu.memory_space<vmem>>, vector<1x8x4xbf16>
    %15 = vector.shape_cast %14 : vector<1x8x4xbf16> to vector<8x4xbf16>
    %cst_12 = arith.constant dense<0.000000e+00> : vector<8x896xf32>
    %16 = tpu.matmul %15, %13, %cst_12 {dimension_numbers = #tpu.dot_dimension_numbers<[1], [0], [0], [1], [0, 0, 1, 1], [], []>} : vector<8x4xbf16>, vector<4x896xbf16>, vector<8x896xf32> -> vector<8x896xf32>
    %17 = arith.addf %12, %16 : vector<8x896xf32>
    %18 = vector.extract_strided_slice %1 {offsets = [0, 10], sizes = [4, 896], strides = [1, 1]} : vector<4x1152xbf16> to vector<4x896xbf16>
    %c3 = arith.constant 3 : index
    %c0_13 = arith.constant 0 : index
    %c0_14 = arith.constant 0 : index
    %19 = vector.load %arg3[%c3, %c0_13, %c0_14] : memref<27x8x4xbf16, #tpu.memory_space<vmem>>, vector<1x8x4xbf16>
    %20 = vector.shape_cast %19 : vector<1x8x4xbf16> to vector<8x4xbf16>
    %cst_15 = arith.constant dense<0.000000e+00> : vector<8x896xf32>
    %21 = tpu.matmul %20, %18, %cst_15 {dimension_numbers = #tpu.dot_dimension_numbers<[1], [0], [0], [1], [0, 0, 1, 1], [], []>} : vector<8x4xbf16>, vector<4x896xbf16>, vector<8x896xf32> -> vector<8x896xf32>
    %22 = arith.addf %17, %21 : vector<8x896xf32>
    %23 = vector.extract_strided_slice %1 {offsets = [0, 11], sizes = [4, 896], strides = [1, 1]} : vector<4x1152xbf16> to vector<4x896xbf16>
    %c4 = arith.constant 4 : index
    %c0_16 = arith.constant 0 : index
    %c0_17 = arith.constant 0 : index
    %24 = vector.load %arg3[%c4, %c0_16, %c0_17] : memref<27x8x4xbf16, #tpu.memory_space<vmem>>, vector<1x8x4xbf16>
    %25 = vector.shape_cast %24 : vector<1x8x4xbf16> to vector<8x4xbf16>
    %cst_18 = arith.constant dense<0.000000e+00> : vector<8x896xf32>
    %26 = tpu.matmul %25, %23, %cst_18 {dimension_numbers = #tpu.dot_dimension_numbers<[1], [0], [0], [1], [0, 0, 1, 1], [], []>} : vector<8x4xbf16>, vector<4x896xbf16>, vector<8x896xf32> -> vector<8x896xf32>
    %27 = arith.addf %22, %26 : vector<8x896xf32>
    %28 = vector.extract_strided_slice %1 {offsets = [0, 12], sizes = [4, 896], strides = [1, 1]} : vector<4x1152xbf16> to vector<4x896xbf16>
    %c5 = arith.constant 5 : index
    %c0_19 = arith.constant 0 : index
    %c0_20 = arith.constant 0 : index
    %29 = vector.load %arg3[%c5, %c0_19, %c0_20] : memref<27x8x4xbf16, #tpu.memory_space<vmem>>, vector<1x8x4xbf16>
    %30 = vector.shape_cast %29 : vector<1x8x4xbf16> to vector<8x4xbf16>
    %cst_21 = arith.constant dense<0.000000e+00> : vector<8x896xf32>
    %31 = tpu.matmul %30, %28, %cst_21 {dimension_numbers = #tpu.dot_dimension_numbers<[1], [0], [0], [1], [0, 0, 1, 1], [], []>} : vector<8x4xbf16>, vector<4x896xbf16>, vector<8x896xf32> -> vector<8x896xf32>
    %32 = arith.addf %27, %31 : vector<8x896xf32>
    %33 = vector.extract_strided_slice %1 {offsets = [0, 20], sizes = [4, 896], strides = [1, 1]} : vector<4x1152xbf16> to vector<4x896xbf16>
    %c6 = arith.constant 6 : index
    %c0_22 = arith.constant 0 : index
    %c0_23 = arith.constant 0 : index
    %34 = vector.load %arg3[%c6, %c0_22, %c0_23] : memref<27x8x4xbf16, #tpu.memory_space<vmem>>, vector<1x8x4xbf16>
    %35 = vector.shape_cast %34 : vector<1x8x4xbf16> to vector<8x4xbf16>
    %cst_24 = arith.constant dense<0.000000e+00> : vector<8x896xf32>
    %36 = tpu.matmul %35, %33, %cst_24 {dimension_numbers = #tpu.dot_dimension_numbers<[1], [0], [0], [1], [0, 0, 1, 1], [], []>} : vector<8x4xbf16>, vector<4x896xbf16>, vector<8x896xf32> -> vector<8x896xf32>
    %37 = arith.addf %32, %36 : vector<8x896xf32>
    %38 = vector.extract_strided_slice %1 {offsets = [0, 21], sizes = [4, 896], strides = [1, 1]} : vector<4x1152xbf16> to vector<4x896xbf16>
    %c7 = arith.constant 7 : index
    %c0_25 = arith.constant 0 : index
    %c0_26 = arith.constant 0 : index
    %39 = vector.load %arg3[%c7, %c0_25, %c0_26] : memref<27x8x4xbf16, #tpu.memory_space<vmem>>, vector<1x8x4xbf16>
    %40 = vector.shape_cast %39 : vector<1x8x4xbf16> to vector<8x4xbf16>
    %cst_27 = arith.constant dense<0.000000e+00> : vector<8x896xf32>
    %41 = tpu.matmul %40, %38, %cst_27 {dimension_numbers = #tpu.dot_dimension_numbers<[1], [0], [0], [1], [0, 0, 1, 1], [], []>} : vector<8x4xbf16>, vector<4x896xbf16>, vector<8x896xf32> -> vector<8x896xf32>
    %42 = arith.addf %37, %41 : vector<8x896xf32>
    %43 = vector.extract_strided_slice %1 {offsets = [0, 22], sizes = [4, 896], strides = [1, 1]} : vector<4x1152xbf16> to vector<4x896xbf16>
    %c8 = arith.constant 8 : index
    %c0_28 = arith.constant 0 : index
    %c0_29 = arith.constant 0 : index
    %44 = vector.load %arg3[%c8, %c0_28, %c0_29] : memref<27x8x4xbf16, #tpu.memory_space<vmem>>, vector<1x8x4xbf16>
    %45 = vector.shape_cast %44 : vector<1x8x4xbf16> to vector<8x4xbf16>
    %cst_30 = arith.constant dense<0.000000e+00> : vector<8x896xf32>
    %46 = tpu.matmul %45, %43, %cst_30 {dimension_numbers = #tpu.dot_dimension_numbers<[1], [0], [0], [1], [0, 0, 1, 1], [], []>} : vector<8x4xbf16>, vector<4x896xbf16>, vector<8x896xf32> -> vector<8x896xf32>
    %47 = arith.addf %42, %46 : vector<8x896xf32>
    %48 = vector.extract_strided_slice %1 {offsets = [0, 100], sizes = [4, 896], strides = [1, 1]} : vector<4x1152xbf16> to vector<4x896xbf16>
    %c9 = arith.constant 9 : index
    %c0_31 = arith.constant 0 : index
    %c0_32 = arith.constant 0 : index
    %49 = vector.load %arg3[%c9, %c0_31, %c0_32] : memref<27x8x4xbf16, #tpu.memory_space<vmem>>, vector<1x8x4xbf16>
    %50 = vector.shape_cast %49 : vector<1x8x4xbf16> to vector<8x4xbf16>
    %cst_33 = arith.constant dense<0.000000e+00> : vector<8x896xf32>
    %51 = tpu.matmul %50, %48, %cst_33 {dimension_numbers = #tpu.dot_dimension_numbers<[1], [0], [0], [1], [0, 0, 1, 1], [], []>} : vector<8x4xbf16>, vector<4x896xbf16>, vector<8x896xf32> -> vector<8x896xf32>
    %52 = arith.addf %47, %51 : vector<8x896xf32>
    %53 = vector.extract_strided_slice %1 {offsets = [0, 101], sizes = [4, 896], strides = [1, 1]} : vector<4x1152xbf16> to vector<4x896xbf16>
    %c10 = arith.constant 10 : index
    %c0_34 = arith.constant 0 : index
    %c0_35 = arith.constant 0 : index
    %54 = vector.load %arg3[%c10, %c0_34, %c0_35] : memref<27x8x4xbf16, #tpu.memory_space<vmem>>, vector<1x8x4xbf16>
    %55 = vector.shape_cast %54 : vector<1x8x4xbf16> to vector<8x4xbf16>
    %cst_36 = arith.constant dense<0.000000e+00> : vector<8x896xf32>
    %56 = tpu.matmul %55, %53, %cst_36 {dimension_numbers = #tpu.dot_dimension_numbers<[1], [0], [0], [1], [0, 0, 1, 1], [], []>} : vector<8x4xbf16>, vector<4x896xbf16>, vector<8x896xf32> -> vector<8x896xf32>
    %57 = arith.addf %52, %56 : vector<8x896xf32>
    %58 = vector.extract_strided_slice %1 {offsets = [0, 102], sizes = [4, 896], strides = [1, 1]} : vector<4x1152xbf16> to vector<4x896xbf16>
    %c11 = arith.constant 11 : index
    %c0_37 = arith.constant 0 : index
    %c0_38 = arith.constant 0 : index
    %59 = vector.load %arg3[%c11, %c0_37, %c0_38] : memref<27x8x4xbf16, #tpu.memory_space<vmem>>, vector<1x8x4xbf16>
    %60 = vector.shape_cast %59 : vector<1x8x4xbf16> to vector<8x4xbf16>
    %cst_39 = arith.constant dense<0.000000e+00> : vector<8x896xf32>
    %61 = tpu.matmul %60, %58, %cst_39 {dimension_numbers = #tpu.dot_dimension_numbers<[1], [0], [0], [1], [0, 0, 1, 1], [], []>} : vector<8x4xbf16>, vector<4x896xbf16>, vector<8x896xf32> -> vector<8x896xf32>
    %62 = arith.addf %57, %61 : vector<8x896xf32>
    %63 = vector.extract_strided_slice %1 {offsets = [0, 110], sizes = [4, 896], strides = [1, 1]} : vector<4x1152xbf16> to vector<4x896xbf16>
    %c12 = arith.constant 12 : index
    %c0_40 = arith.constant 0 : index
    %c0_41 = arith.constant 0 : index
    %64 = vector.load %arg3[%c12, %c0_40, %c0_41] : memref<27x8x4xbf16, #tpu.memory_space<vmem>>, vector<1x8x4xbf16>
    %65 = vector.shape_cast %64 : vector<1x8x4xbf16> to vector<8x4xbf16>
    %cst_42 = arith.constant dense<0.000000e+00> : vector<8x896xf32>
    %66 = tpu.matmul %65, %63, %cst_42 {dimension_numbers = #tpu.dot_dimension_numbers<[1], [0], [0], [1], [0, 0, 1, 1], [], []>} : vector<8x4xbf16>, vector<4x896xbf16>, vector<8x896xf32> -> vector<8x896xf32>
    %67 = arith.addf %62, %66 : vector<8x896xf32>
    %68 = vector.extract_strided_slice %1 {offsets = [0, 111], sizes = [4, 896], strides = [1, 1]} : vector<4x1152xbf16> to vector<4x896xbf16>
    %c13 = arith.constant 13 : index
    %c0_43 = arith.constant 0 : index
    %c0_44 = arith.constant 0 : index
    %69 = vector.load %arg3[%c13, %c0_43, %c0_44] : memref<27x8x4xbf16, #tpu.memory_space<vmem>>, vector<1x8x4xbf16>
    %70 = vector.shape_cast %69 : vector<1x8x4xbf16> to vector<8x4xbf16>
    %cst_45 = arith.constant dense<0.000000e+00> : vector<8x896xf32>
    %71 = tpu.matmul %70, %68, %cst_45 {dimension_numbers = #tpu.dot_dimension_numbers<[1], [0], [0], [1], [0, 0, 1, 1], [], []>} : vector<8x4xbf16>, vector<4x896xbf16>, vector<8x896xf32> -> vector<8x896xf32>
    %72 = arith.addf %67, %71 : vector<8x896xf32>
    %73 = vector.extract_strided_slice %1 {offsets = [0, 112], sizes = [4, 896], strides = [1, 1]} : vector<4x1152xbf16> to vector<4x896xbf16>
    %c14 = arith.constant 14 : index
    %c0_46 = arith.constant 0 : index
    %c0_47 = arith.constant 0 : index
    %74 = vector.load %arg3[%c14, %c0_46, %c0_47] : memref<27x8x4xbf16, #tpu.memory_space<vmem>>, vector<1x8x4xbf16>
    %75 = vector.shape_cast %74 : vector<1x8x4xbf16> to vector<8x4xbf16>
    %cst_48 = arith.constant dense<0.000000e+00> : vector<8x896xf32>
    %76 = tpu.matmul %75, %73, %cst_48 {dimension_numbers = #tpu.dot_dimension_numbers<[1], [0], [0], [1], [0, 0, 1, 1], [], []>} : vector<8x4xbf16>, vector<4x896xbf16>, vector<8x896xf32> -> vector<8x896xf32>
    %77 = arith.addf %72, %76 : vector<8x896xf32>
    %78 = vector.extract_strided_slice %1 {offsets = [0, 120], sizes = [4, 896], strides = [1, 1]} : vector<4x1152xbf16> to vector<4x896xbf16>
    %c15 = arith.constant 15 : index
    %c0_49 = arith.constant 0 : index
    %c0_50 = arith.constant 0 : index
    %79 = vector.load %arg3[%c15, %c0_49, %c0_50] : memref<27x8x4xbf16, #tpu.memory_space<vmem>>, vector<1x8x4xbf16>
    %80 = vector.shape_cast %79 : vector<1x8x4xbf16> to vector<8x4xbf16>
    %cst_51 = arith.constant dense<0.000000e+00> : vector<8x896xf32>
    %81 = tpu.matmul %80, %78, %cst_51 {dimension_numbers = #tpu.dot_dimension_numbers<[1], [0], [0], [1], [0, 0, 1, 1], [], []>} : vector<8x4xbf16>, vector<4x896xbf16>, vector<8x896xf32> -> vector<8x896xf32>
    %82 = arith.addf %77, %81 : vector<8x896xf32>
    %83 = vector.extract_strided_slice %1 {offsets = [0, 121], sizes = [4, 896], strides = [1, 1]} : vector<4x1152xbf16> to vector<4x896xbf16>
    %c16 = arith.constant 16 : index
    %c0_52 = arith.constant 0 : index
    %c0_53 = arith.constant 0 : index
    %84 = vector.load %arg3[%c16, %c0_52, %c0_53] : memref<27x8x4xbf16, #tpu.memory_space<vmem>>, vector<1x8x4xbf16>
    %85 = vector.shape_cast %84 : vector<1x8x4xbf16> to vector<8x4xbf16>
    %cst_54 = arith.constant dense<0.000000e+00> : vector<8x896xf32>
    %86 = tpu.matmul %85, %83, %cst_54 {dimension_numbers = #tpu.dot_dimension_numbers<[1], [0], [0], [1], [0, 0, 1, 1], [], []>} : vector<8x4xbf16>, vector<4x896xbf16>, vector<8x896xf32> -> vector<8x896xf32>
    %87 = arith.addf %82, %86 : vector<8x896xf32>
    %88 = vector.extract_strided_slice %1 {offsets = [0, 122], sizes = [4, 896], strides = [1, 1]} : vector<4x1152xbf16> to vector<4x896xbf16>
    %c17 = arith.constant 17 : index
    %c0_55 = arith.constant 0 : index
    %c0_56 = arith.constant 0 : index
    %89 = vector.load %arg3[%c17, %c0_55, %c0_56] : memref<27x8x4xbf16, #tpu.memory_space<vmem>>, vector<1x8x4xbf16>
    %90 = vector.shape_cast %89 : vector<1x8x4xbf16> to vector<8x4xbf16>
    %cst_57 = arith.constant dense<0.000000e+00> : vector<8x896xf32>
    %91 = tpu.matmul %90, %88, %cst_57 {dimension_numbers = #tpu.dot_dimension_numbers<[1], [0], [0], [1], [0, 0, 1, 1], [], []>} : vector<8x4xbf16>, vector<4x896xbf16>, vector<8x896xf32> -> vector<8x896xf32>
    %92 = arith.addf %87, %91 : vector<8x896xf32>
    %93 = vector.extract_strided_slice %1 {offsets = [0, 200], sizes = [4, 896], strides = [1, 1]} : vector<4x1152xbf16> to vector<4x896xbf16>
    %c18 = arith.constant 18 : index
    %c0_58 = arith.constant 0 : index
    %c0_59 = arith.constant 0 : index
    %94 = vector.load %arg3[%c18, %c0_58, %c0_59] : memref<27x8x4xbf16, #tpu.memory_space<vmem>>, vector<1x8x4xbf16>
    %95 = vector.shape_cast %94 : vector<1x8x4xbf16> to vector<8x4xbf16>
    %cst_60 = arith.constant dense<0.000000e+00> : vector<8x896xf32>
    %96 = tpu.matmul %95, %93, %cst_60 {dimension_numbers = #tpu.dot_dimension_numbers<[1], [0], [0], [1], [0, 0, 1, 1], [], []>} : vector<8x4xbf16>, vector<4x896xbf16>, vector<8x896xf32> -> vector<8x896xf32>
    %97 = arith.addf %92, %96 : vector<8x896xf32>
    %98 = vector.extract_strided_slice %1 {offsets = [0, 201], sizes = [4, 896], strides = [1, 1]} : vector<4x1152xbf16> to vector<4x896xbf16>
    %c19 = arith.constant 19 : index
    %c0_61 = arith.constant 0 : index
    %c0_62 = arith.constant 0 : index
    %99 = vector.load %arg3[%c19, %c0_61, %c0_62] : memref<27x8x4xbf16, #tpu.memory_space<vmem>>, vector<1x8x4xbf16>
    %100 = vector.shape_cast %99 : vector<1x8x4xbf16> to vector<8x4xbf16>
    %cst_63 = arith.constant dense<0.000000e+00> : vector<8x896xf32>
    %101 = tpu.matmul %100, %98, %cst_63 {dimension_numbers = #tpu.dot_dimension_numbers<[1], [0], [0], [1], [0, 0, 1, 1], [], []>} : vector<8x4xbf16>, vector<4x896xbf16>, vector<8x896xf32> -> vector<8x896xf32>
    %102 = arith.addf %97, %101 : vector<8x896xf32>
    %103 = vector.extract_strided_slice %1 {offsets = [0, 202], sizes = [4, 896], strides = [1, 1]} : vector<4x1152xbf16> to vector<4x896xbf16>
    %c20 = arith.constant 20 : index
    %c0_64 = arith.constant 0 : index
    %c0_65 = arith.constant 0 : index
    %104 = vector.load %arg3[%c20, %c0_64, %c0_65] : memref<27x8x4xbf16, #tpu.memory_space<vmem>>, vector<1x8x4xbf16>
    %105 = vector.shape_cast %104 : vector<1x8x4xbf16> to vector<8x4xbf16>
    %cst_66 = arith.constant dense<0.000000e+00> : vector<8x896xf32>
    %106 = tpu.matmul %105, %103, %cst_66 {dimension_numbers = #tpu.dot_dimension_numbers<[1], [0], [0], [1], [0, 0, 1, 1], [], []>} : vector<8x4xbf16>, vector<4x896xbf16>, vector<8x896xf32> -> vector<8x896xf32>
    %107 = arith.addf %102, %106 : vector<8x896xf32>
    %108 = vector.extract_strided_slice %1 {offsets = [0, 210], sizes = [4, 896], strides = [1, 1]} : vector<4x1152xbf16> to vector<4x896xbf16>
    %c21 = arith.constant 21 : index
    %c0_67 = arith.constant 0 : index
    %c0_68 = arith.constant 0 : index
    %109 = vector.load %arg3[%c21, %c0_67, %c0_68] : memref<27x8x4xbf16, #tpu.memory_space<vmem>>, vector<1x8x4xbf16>
    %110 = vector.shape_cast %109 : vector<1x8x4xbf16> to vector<8x4xbf16>
    %cst_69 = arith.constant dense<0.000000e+00> : vector<8x896xf32>
    %111 = tpu.matmul %110, %108, %cst_69 {dimension_numbers = #tpu.dot_dimension_numbers<[1], [0], [0], [1], [0, 0, 1, 1], [], []>} : vector<8x4xbf16>, vector<4x896xbf16>, vector<8x896xf32> -> vector<8x896xf32>
    %112 = arith.addf %107, %111 : vector<8x896xf32>
    %113 = vector.extract_strided_slice %1 {offsets = [0, 211], sizes = [4, 896], strides = [1, 1]} : vector<4x1152xbf16> to vector<4x896xbf16>
    %c22 = arith.constant 22 : index
    %c0_70 = arith.constant 0 : index
    %c0_71 = arith.constant 0 : index
    %114 = vector.load %arg3[%c22, %c0_70, %c0_71] : memref<27x8x4xbf16, #tpu.memory_space<vmem>>, vector<1x8x4xbf16>
    %115 = vector.shape_cast %114 : vector<1x8x4xbf16> to vector<8x4xbf16>
    %cst_72 = arith.constant dense<0.000000e+00> : vector<8x896xf32>
    %116 = tpu.matmul %115, %113, %cst_72 {dimension_numbers = #tpu.dot_dimension_numbers<[1], [0], [0], [1], [0, 0, 1, 1], [], []>} : vector<8x4xbf16>, vector<4x896xbf16>, vector<8x896xf32> -> vector<8x896xf32>
    %117 = arith.addf %112, %116 : vector<8x896xf32>
    %118 = vector.extract_strided_slice %1 {offsets = [0, 212], sizes = [4, 896], strides = [1, 1]} : vector<4x1152xbf16> to vector<4x896xbf16>
    %c23 = arith.constant 23 : index
    %c0_73 = arith.constant 0 : index
    %c0_74 = arith.constant 0 : index
    %119 = vector.load %arg3[%c23, %c0_73, %c0_74] : memref<27x8x4xbf16, #tpu.memory_space<vmem>>, vector<1x8x4xbf16>
    %120 = vector.shape_cast %119 : vector<1x8x4xbf16> to vector<8x4xbf16>
    %cst_75 = arith.constant dense<0.000000e+00> : vector<8x896xf32>
    %121 = tpu.matmul %120, %118, %cst_75 {dimension_numbers = #tpu.dot_dimension_numbers<[1], [0], [0], [1], [0, 0, 1, 1], [], []>} : vector<8x4xbf16>, vector<4x896xbf16>, vector<8x896xf32> -> vector<8x896xf32>
    %122 = arith.addf %117, %121 : vector<8x896xf32>
    %123 = vector.extract_strided_slice %1 {offsets = [0, 220], sizes = [4, 896], strides = [1, 1]} : vector<4x1152xbf16> to vector<4x896xbf16>
    %c24 = arith.constant 24 : index
    %c0_76 = arith.constant 0 : index
    %c0_77 = arith.constant 0 : index
    %124 = vector.load %arg3[%c24, %c0_76, %c0_77] : memref<27x8x4xbf16, #tpu.memory_space<vmem>>, vector<1x8x4xbf16>
    %125 = vector.shape_cast %124 : vector<1x8x4xbf16> to vector<8x4xbf16>
    %cst_78 = arith.constant dense<0.000000e+00> : vector<8x896xf32>
    %126 = tpu.matmul %125, %123, %cst_78 {dimension_numbers = #tpu.dot_dimension_numbers<[1], [0], [0], [1], [0, 0, 1, 1], [], []>} : vector<8x4xbf16>, vector<4x896xbf16>, vector<8x896xf32> -> vector<8x896xf32>
    %127 = arith.addf %122, %126 : vector<8x896xf32>
    %128 = vector.extract_strided_slice %1 {offsets = [0, 221], sizes = [4, 896], strides = [1, 1]} : vector<4x1152xbf16> to vector<4x896xbf16>
    %c25 = arith.constant 25 : index
    %c0_79 = arith.constant 0 : index
    %c0_80 = arith.constant 0 : index
    %129 = vector.load %arg3[%c25, %c0_79, %c0_80] : memref<27x8x4xbf16, #tpu.memory_space<vmem>>, vector<1x8x4xbf16>
    %130 = vector.shape_cast %129 : vector<1x8x4xbf16> to vector<8x4xbf16>
    %cst_81 = arith.constant dense<0.000000e+00> : vector<8x896xf32>
    %131 = tpu.matmul %130, %128, %cst_81 {dimension_numbers = #tpu.dot_dimension_numbers<[1], [0], [0], [1], [0, 0, 1, 1], [], []>} : vector<8x4xbf16>, vector<4x896xbf16>, vector<8x896xf32> -> vector<8x896xf32>
    %132 = arith.addf %127, %131 : vector<8x896xf32>
    %133 = vector.extract_strided_slice %1 {offsets = [0, 222], sizes = [4, 896], strides = [1, 1]} : vector<4x1152xbf16> to vector<4x896xbf16>
    %c26 = arith.constant 26 : index
    %c0_82 = arith.constant 0 : index
    %c0_83 = arith.constant 0 : index
    %134 = vector.load %arg3[%c26, %c0_82, %c0_83] : memref<27x8x4xbf16, #tpu.memory_space<vmem>>, vector<1x8x4xbf16>
    %135 = vector.shape_cast %134 : vector<1x8x4xbf16> to vector<8x4xbf16>
    %cst_84 = arith.constant dense<0.000000e+00> : vector<8x896xf32>
    %136 = tpu.matmul %135, %133, %cst_84 {dimension_numbers = #tpu.dot_dimension_numbers<[1], [0], [0], [1], [0, 0, 1, 1], [], []>} : vector<8x4xbf16>, vector<4x896xbf16>, vector<8x896xf32> -> vector<8x896xf32>
    %137 = arith.addf %132, %136 : vector<8x896xf32>
    %138 = arith.truncf %137 : vector<8x896xf32> to vector<8x896xbf16>
    %c0_85 = arith.constant 0 : index
    %c0_86 = arith.constant 0 : index
    %c0_87 = arith.constant 0 : index
    %139 = vector.load %arg5[%c0_85, %c0_86, %c0_87] : memref<1x8x896xbf16, #tpu.memory_space<vmem>>, vector<1x8x896xbf16>
    %140 = vector.shape_cast %139 : vector<1x8x896xbf16> to vector<8x896xbf16>
    %141 = vector.shape_cast %138 : vector<8x896xbf16> to vector<1x8x896xbf16>
    tpu.vector_store %arg5[%c0_85, %c0_86, %c0_87], %141 {strides = array<i32>} : memref<1x8x896xbf16, #tpu.memory_space<vmem>>, vector<1x8x896xbf16>,
    %c0_88 = arith.constant 0 : index
    %c0_89 = arith.constant 0 : index
    %c0_90 = arith.constant 0 : index
    %142 = vector.load %arg4[%c0_88, %c0_89, %c0_90] : memref<1x1x896xf32, #tpu.memory_space<vmem>>, vector<1x1x896xf32>
    %143 = vector.shape_cast %142 : vector<1x1x896xf32> to vector<1x896xf32>
    %144 = vector.broadcast %143 : vector<1x896xf32> to vector<8x896xf32>
    %145 = arith.mulf %137, %144 : vector<8x896xf32>
    %cst_91 = arith.constant dense<0.000000e+00> : vector<8xf32>
    %146 = vector.multi_reduction <add>, %145, %cst_91 [1] : vector<8x896xf32> to vector<8xf32>
    %147 = vector.shape_cast %146 : vector<8xf32> to vector<8x1xf32>
    %148 = arith.mulf %145, %137 : vector<8x896xf32>
    %cst_92 = arith.constant dense<0.000000e+00> : vector<8xf32>
    %149 = vector.multi_reduction <add>, %148, %cst_92 [1] : vector<8x896xf32> to vector<8xf32>
    %150 = vector.shape_cast %149 : vector<8xf32> to vector<8x1xf32>
    %151 = tpu.concatenate %147, %150 in 1 : vector<8x1xf32>, vector<8x1xf32> -> vector<8x2xf32>
    %c0_93 = arith.constant 0 : index
    %c0_94 = arith.constant 0 : index
    %c0_95 = arith.constant 0 : index
    %c0_96 = arith.constant 0 : index
    %152 = vector.load %arg6[%c0_93, %c0_94, %c0_95, %c0_96] : memref<1x1x8x2xf32, #tpu.memory_space<vmem>>, vector<1x1x8x2xf32>
    %153 = vector.shape_cast %152 : vector<1x1x8x2xf32> to vector<8x2xf32>
    %154 = vector.shape_cast %151 : vector<8x2xf32> to vector<1x1x8x2xf32>
    tpu.vector_store %arg6[%c0_93, %c0_94, %c0_95, %c0_96], %154 {strides = array<i32>} : memref<1x1x8x2xf32, #tpu.memory_space<vmem>>, vector<1x1x8x2xf32>,
    return
  }
  func.func @transform_0(%arg0: i32, %arg1: i32) -> (i32, i32, i32, i32) {
    %c0_i32 = arith.constant 0 : i32
    %c0_i32_0 = arith.constant 0 : i32
    %c0_i32_1 = arith.constant 0 : i32
    return %arg0, %arg1, %c0_i32, %c0_i32_0 : i32, i32, i32, i32
  }
  func.func @transform_1(%arg0: i32, %arg1: i32) -> (i32, i32, i32) {
    %c0_i32 = arith.constant 0 : i32
    %c0_i32_0 = arith.constant 0 : i32
    %c0_i32_1 = arith.constant 0 : i32
    %c0_i32_2 = arith.constant 0 : i32
    return %c0_i32, %c0_i32_0, %c0_i32_1 : i32, i32, i32
  }
  func.func @transform_2(%arg0: i32, %arg1: i32) -> (i32, i32, i32) {
    %c0_i32 = arith.constant 0 : i32
    %c0_i32_0 = arith.constant 0 : i32
    %c0_i32_1 = arith.constant 0 : i32
    return %arg1, %c0_i32, %c0_i32_0 : i32, i32, i32
  }
  func.func @transform_3(%arg0: i32, %arg1: i32) -> (i32, i32, i32) {
    %c0_i32 = arith.constant 0 : i32
    %c0_i32_0 = arith.constant 0 : i32
    return %arg0, %c0_i32, %arg1 : i32, i32, i32
  }
  func.func @transform_4(%arg0: i32, %arg1: i32) -> (i32, i32, i32, i32) {
    %c0_i32 = arith.constant 0 : i32
    %c0_i32_0 = arith.constant 0 : i32
    %c0_i32_1 = arith.constant 0 : i32
    return %arg0, %arg1, %c0_i32, %c0_i32_0 : i32, i32, i32, i32
  }
}

module attributes {stable_mosaic.version = 11 : i64} {
  func.func @_bn_relu_kernel(%arg0: i32, %arg1: i32, %arg2: memref<1x8x896xbf16, #tpu.memory_space<vmem>>, %arg3: memref<8x1xf32, #tpu.memory_space<vmem>>, %arg4: memref<8x1xf32, #tpu.memory_space<vmem>>, %arg5: memref<1x8x896xf32, #tpu.memory_space<vmem>>) attributes {dimension_semantics = [#tpu.dimension_semantics<parallel>, #tpu.dimension_semantics<parallel>], iteration_bounds = array<i64: 2, 1>, scalar_prefetch = 0 : i64, scratch_operands = 0 : i64, tpu.core_type = #tpu.core_type<tc>, window_params = [{transform_indices = @transform_0, window_bounds = array<i64: 1, 8, 896>}, {pipeline_mode = #tpu.pipeline_mode<synchronous>, transform_indices = @transform_1, window_bounds = array<i64: 8, 1>}, {pipeline_mode = #tpu.pipeline_mode<synchronous>, transform_indices = @transform_2, window_bounds = array<i64: 8, 1>}, {transform_indices = @transform_3, window_bounds = array<i64: 1, 8, 896>}]} {
    %c0 = arith.constant 0 : index
    %c0_0 = arith.constant 0 : index
    %c0_1 = arith.constant 0 : index
    %0 = vector.load %arg2[%c0, %c0_0, %c0_1] : memref<1x8x896xbf16, #tpu.memory_space<vmem>>, vector<1x8x896xbf16>
    %1 = vector.shape_cast %0 : vector<1x8x896xbf16> to vector<8x896xbf16>
    %2 = arith.extf %1 : vector<8x896xbf16> to vector<8x896xf32>
    %c0_2 = arith.constant 0 : index
    %c0_3 = arith.constant 0 : index
    %3 = vector.load %arg3[%c0_2, %c0_3] : memref<8x1xf32, #tpu.memory_space<vmem>>, vector<8x1xf32>
    %4 = vector.broadcast %3 : vector<8x1xf32> to vector<8x896xf32>
    %5 = arith.mulf %2, %4 : vector<8x896xf32>
    %c0_4 = arith.constant 0 : index
    %c0_5 = arith.constant 0 : index
    %6 = vector.load %arg4[%c0_4, %c0_5] : memref<8x1xf32, #tpu.memory_space<vmem>>, vector<8x1xf32>
    %7 = vector.broadcast %6 : vector<8x1xf32> to vector<8x896xf32>
    %8 = arith.addf %5, %7 : vector<8x896xf32>
    %cst = arith.constant 0.000000e+00 : f32
    %9 = vector.broadcast %cst : f32 to vector<8x896xf32>
    %10 = arith.maximumf %8, %9 : vector<8x896xf32>
    %c0_6 = arith.constant 0 : index
    %c0_7 = arith.constant 0 : index
    %c0_8 = arith.constant 0 : index
    %11 = vector.load %arg5[%c0_6, %c0_7, %c0_8] : memref<1x8x896xf32, #tpu.memory_space<vmem>>, vector<1x8x896xf32>
    %12 = vector.shape_cast %11 : vector<1x8x896xf32> to vector<8x896xf32>
    %13 = vector.shape_cast %10 : vector<8x896xf32> to vector<1x8x896xf32>
    tpu.vector_store %arg5[%c0_6, %c0_7, %c0_8], %13 {strides = array<i32>} : memref<1x8x896xf32, #tpu.memory_space<vmem>>, vector<1x8x896xf32>,
    return
  }
  func.func @transform_0(%arg0: i32, %arg1: i32) -> (i32, i32, i32) {
    %c0_i32 = arith.constant 0 : i32
    %c0_i32_0 = arith.constant 0 : i32
    return %arg0, %c0_i32, %arg1 : i32, i32, i32
  }
  func.func @transform_1(%arg0: i32, %arg1: i32) -> (i32, i32) {
    %c0_i32 = arith.constant 0 : i32
    %c0_i32_0 = arith.constant 0 : i32
    %c0_i32_1 = arith.constant 0 : i32
    return %c0_i32, %c0_i32_0 : i32, i32
  }
  func.func @transform_2(%arg0: i32, %arg1: i32) -> (i32, i32) {
    %c0_i32 = arith.constant 0 : i32
    %c0_i32_0 = arith.constant 0 : i32
    %c0_i32_1 = arith.constant 0 : i32
    return %c0_i32, %c0_i32_0 : i32, i32
  }
  func.func @transform_3(%arg0: i32, %arg1: i32) -> (i32, i32, i32) {
    %c0_i32 = arith.constant 0 : i32
    %c0_i32_0 = arith.constant 0 : i32
    return %arg0, %c0_i32, %arg1 : i32, i32, i32
  }
}

</mosaic_0001>

<llo_original>
// kernel: cbr_forward.3
$region0: #{cbr_forward.3}
  #allocation0 [shape = 'u32[]', space=smem, size = 0x4, offset = 0x4, fixed_abs, tag = 'smem constant byte address 0x4 - core index']
  #allocation1 [shape = 'u32[72,128]{1,0:T(1,128)}', space=vmem, size = 0x9000, scoped, tag = 'internal scratch']
  %s0 = inlined_call_operand.vmem [shape: bf16[2,8,896], index: 0, kind: input, shape index: {}]
  %s1 = inlined_call_operand.vmem [shape: f32[8,1], index: 1, kind: input, shape index: {}]
  %s2 = inlined_call_operand.vmem [shape: f32[8,1], index: 2, kind: input, shape index: {}]
  %s3 = inlined_call_operand.vmem [shape: f32[2,8,896], index: 3, kind: output, shape index: {}]
  %s4 = sld [smem:[#allocation0]]
  $region45: #{cbr_forward.3} parent=0
    _
  %s6 = ssub.s32 1, %s4
  %s7 = scalar_select 0, %s6, %s4
  loop: start=0, step=1, limit=4
  $region2: #{cbr_forward.3} parent=0 // loop_pre_header
    _
  $region3: #{cbr_forward.3} parent=0 // loop_header
    %s9 = sphi 0, %s13
    %p10 = scmp.ge.s32.totalorder %s9, 4
    %s16 = sphi 0, %s28
    %s17 = sphi 0, %s24
    %s18 = sphi 0, %s16
    %s19 = sphi 0, %s17
    %s20 = sphi 0, %s18
    %s21 = sphi 0, %s19
    %s33 = sphi 0, %s35
    %s36 = sphi 0, %s33
    %s37 = sphi 0, %s36
    %s53 = sphi 0, %s37
    %s57 = sphi 0, %s57
    %s59 = sphi 0, %s57
    %s60 = sphi 0, %s59
    %s74 = sphi 0, %s60
    %s78 = sphi 0, %s78
    %s80 = sphi 0, %s78
    %s81 = sphi 0, %s80
    %s95 = sphi 0, %s81
    %s103 = sphi 0, %s105
    %s106 = sphi 0, %s103
    %s107 = sphi 0, %s106
    %s123 = sphi 0, %s107
  $region4: #{cbr_forward.3} parent=0 // loop_header_branch
    %12 = sbr.rel (%p10) target = $region8
  $region5: #{cbr_forward.3} parent=0 // loop_body
    %s14 = ssub.s32 %s9, 1
    %s15 = ssub.s32 %s9, 2
    %s22 = sadd.s32 1, %s17
    %p23 = scmp.ge.s32.totalorder %s22, 1
    %s24 = scalar_select %p23, 0, %s22
    %s25 = sadd.s32 1, %s16
    %s26 = scalar_select %p23, %s25, %s16
    %p27 = scmp.ge.s32.totalorder %s26, 2
    %s28 = scalar_select %p27, 0, %s26
    %s29 = ssub.s32 %s16, %s28
    %s30 = ssub.s32 %s17, %s24
    %s31 = sor.u32 %s29, %s30
    %p32 = scmp.eq.s32.totalorder %s31, 0
    %s34 = sadd.s32 %s33, 1
    %s35 = scalar_select %p32, %s33, %s34
    %p38 = pneg %p32
    %p39 = scmp.eq.s32.totalorder %s9, 1
    %p40 = por %p38, %p39
    %p41 = scmp.ne.s32.totalorder %s33, %s36
    %p42 = scmp.eq.s32.totalorder %s9, 0
    %p43 = por %p41, %p42
    %p44 = scmp.ne.s32.totalorder %s33, %s36
    %p45 = scmp.eq.s32.totalorder %s14, 1
    %p46 = por %p44, %p45
    %p47 = scmp.ne.s32.totalorder %s36, %s37
    %p48 = scmp.eq.s32.totalorder %s14, 0
    %p49 = por %p47, %p48
    %p50 = scmp.ne.s32.totalorder %s36, %s37
    %p51 = scmp.eq.s32.totalorder %s15, 1
    %p52 = por %p50, %p51
    %p54 = scmp.ne.s32.totalorder %s37, %s53
    %p55 = scmp.eq.s32.totalorder %s15, 0
    %p56 = por %p54, %p55
    %s58 = sadd.s32 %s57, 1
    %p61 = scmp.eq.s32.totalorder %s9, 1
    %p62 = scmp.ne.s32.totalorder %s57, %s59
    %p63 = scmp.eq.s32.totalorder %s9, 0
    %p64 = por %p62, %p63
    %p65 = scmp.ne.s32.totalorder %s57, %s59
    %p66 = scmp.eq.s32.totalorder %s14, 1
    %p67 = por %p65, %p66
    %p68 = scmp.ne.s32.totalorder %s59, %s60
    %p69 = scmp.eq.s32.totalorder %s14, 0
    %p70 = por %p68, %p69
    %p71 = scmp.ne.s32.totalorder %s59, %s60
    %p72 = scmp.eq.s32.totalorder %s15, 1
    %p73 = por %p71, %p72
    %p75 = scmp.ne.s32.totalorder %s60, %s74
    %p76 = scmp.eq.s32.totalorder %s15, 0
    %p77 = por %p75, %p76
    %s79 = sadd.s32 %s78, 1
    %p82 = scmp.eq.s32.totalorder %s9, 1
    %p83 = scmp.ne.s32.totalorder %s78, %s80
    %p84 = scmp.eq.s32.totalorder %s9, 0
    %p85 = por %p83, %p84
    %p86 = scmp.ne.s32.totalorder %s78, %s80
    %p87 = scmp.eq.s32.totalorder %s14, 1
    %p88 = por %p86, %p87
    %p89 = scmp.ne.s32.totalorder %s80, %s81
    %p90 = scmp.eq.s32.totalorder %s14, 0
    %p91 = por %p89, %p90
    %p92 = scmp.ne.s32.totalorder %s80, %s81
    %p93 = scmp.eq.s32.totalorder %s15, 1
    %p94 = por %p92, %p93
    %p96 = scmp.ne.s32.totalorder %s81, %s95
    %p97 = scmp.eq.s32.totalorder %s15, 0
    %p98 = por %p96, %p97
    %s99 = ssub.s32 %s16, %s28
    %s100 = ssub.s32 %s17, %s24
    %s101 = sor.u32 %s99, %s100
    %p102 = scmp.eq.s32.totalorder %s101, 0
    %s104 = sadd.s32 %s103, 1
    %s105 = scalar_select %p102, %s103, %s104
    %p108 = pneg %p102
    %p109 = scmp.eq.s32.totalorder %s9, 1
    %p110 = por %p108, %p109
    %p111 = scmp.ne.s32.totalorder %s103, %s106
    %p112 = scmp.eq.s32.totalorder %s9, 0
    %p113 = por %p111, %p112
    %p114 = scmp.ne.s32.totalorder %s103, %s106
    %p115 = scmp.eq.s32.totalorder %s14, 1
    %p116 = por %p114, %p115
    %p117 = scmp.ne.s32.totalorder %s106, %s107
    %p118 = scmp.eq.s32.totalorder %s14, 0
    %p119 = por %p117, %p118
    %p120 = scmp.ne.s32.totalorder %s106, %s107
    %p121 = scmp.eq.s32.totalorder %s15, 1
    %p122 = por %p120, %p121
    %p124 = scmp.ne.s32.totalorder %s107, %s123
    %p125 = scmp.eq.s32.totalorder %s15, 0
    %p126 = por %p124, %p125
    %p127 = scmp.le.s32.totalorder 1, %s9
    %p128 = scmp.lt.s32.totalorder %s9, 3
    %p129 = pnand %p127, %p128
    %p130 = pneg %p129
    // Predicated region
    $region9: #{cbr_forward.3} parent=5 // pred_check
      _
    $region10: #{cbr_forward.3} parent=5 // pred_check_branch
      %132 = sbr.rel (%p129) target = $region12
    $region11: #{cbr_forward.3} parent=5 // pred_region
      %s133 = ssub.s32 %s9, 1
      // Predicated region
      $region13: #{cbr_forward.3} parent=11 // pred_check
        %p134 = pneg %p70
      $region14: #{cbr_forward.3} parent=11 // pred_check_branch
        %136 = sbr.rel (%p134) target = $region16
      $region15: #{cbr_forward.3} parent=11 // pred_region
        _
      $region16: #{cbr_forward.3} parent=11 // pred_fallthru
        _
      // Predicated region
      $region17: #{cbr_forward.3} parent=11 // pred_check
        %p137 = pneg %p91
      $region18: #{cbr_forward.3} parent=11 // pred_check_branch
        %139 = sbr.rel (%p137) target = $region20
      $region19: #{cbr_forward.3} parent=11 // pred_region
        _
      $region20: #{cbr_forward.3} parent=11 // pred_fallthru
        _
    $region12: #{cbr_forward.3} parent=5 // pred_fallthru
      _
    %p140 = scmp.lt.s32.totalorder %s9, 2
    // Predicated region
    $region21: #{cbr_forward.3} parent=5 // pred_check
      %p141 = pneg %p140
    $region22: #{cbr_forward.3} parent=5 // pred_check_branch
      %143 = sbr.rel (%p141) target = $region24
    $region23: #{cbr_forward.3} parent=5 // pred_region
      // Predicated region
      $region25: #{cbr_forward.3} parent=23 // pred_check
        %p144 = pneg %p43
      $region26: #{cbr_forward.3} parent=23 // pred_check_branch
        %146 = sbr.rel (%p144) target = $region28
      $region27: #{cbr_forward.3} parent=23 // pred_region
        %s147 = smul.u32 7, %s17
        %p148 = scmp.lt.s32.totalorder %s16, 1
        %s149 = scalar_select %p148, %s16, 1
        %p150 = scmp.lt.s32.totalorder %s147, 6
        %s151 = scalar_select %p150, %s147, 6
        %s152 = smul.addr %s149, 7
        %s153 = sadd.s32 %s151, %s152
        %s154 = smul.addr %s153, 4
        %s155 = scalar_lea.vmem %s0, %s154
        %s156 = smul.u32 7, %s17
      $region28: #{cbr_forward.3} parent=23 // pred_fallthru
        _
    $region24: #{cbr_forward.3} parent=5 // pred_fallthru
      _
    %p157 = scmp.le.s32.totalorder 1, %s9
    %p158 = scmp.lt.s32.totalorder %s9, 3
    %p159 = pnand %p157, %p158
    %p160 = pneg %p159
    // Predicated region
    $region29: #{cbr_forward.3} parent=5 // pred_check
      _
    $region30: #{cbr_forward.3} parent=5 // pred_check_branch
      %162 = sbr.rel (%p159) target = $region32
    $region31: #{cbr_forward.3} parent=5 // pred_region
      %s163 = ssub.s32 %s9, 1
      %s164 = smul.u32 7, %s19
      %p165 = scmp.lt.s32.totalorder %s18, 1
      %s166 = scalar_select %p165, %s18, 1
      %p167 = scmp.lt.s32.totalorder %s164, 6
      %s168 = scalar_select %p167, %s164, 6
      %s169 = smul.addr %s166, 7
      %s170 = sadd.s32 %s168, %s169
      %s171 = smul.addr %s170, 4
      %s172 = scalar_lea.vmem %s0, %s171
      %p173 = pneg %p49
      %p174 = pneg %p46
      %p175 = pneg %p70
      %p176 = pneg %p67
      %p177 = pneg %p91
      %p178 = pneg %p88
      %p179 = pneg %p119
      %p180 = pneg %p116
      %s181 = smul.u32 7, %s19
      %p182 = scmp.lt.s32.totalorder %s18, 1
      %s183 = scalar_select %p182, %s18, 1
      %p184 = scmp.lt.s32.totalorder %s181, 6
      %s185 = scalar_select %p184, %s181, 6
      %s186 = smul.addr %s183, 7
      %s187 = sadd.s32 %s185, %s186
      %s188 = smul.addr %s187, 8
      %s189 = scalar_lea.vmem %s3, %s188
      %s190 = smul.u32 7, %s19
      %p191 = scmp.lt.s32.totalorder %s18, 1
      %s192 = scalar_select %p191, %s18, 1
      %p193 = scmp.lt.s32.totalorder %s190, 6
      %s194 = scalar_select %p193, %s190, 6
      %s195 = smul.addr %s192, 7
      %s196 = sadd.s32 %s194, %s195
      %s197 = smul.addr %s196, 4
      %s198 = scalar_lea.vmem %s0, %s197
      %s199 = smul.u32 7, %s19
      %s200 = smul.u32 7, %s19
      %p201 = scmp.lt.s32.totalorder %s18, 1
      %s202 = scalar_select %p201, %s18, 1
      %p203 = scmp.lt.s32.totalorder %s200, 6
      %s204 = scalar_select %p203, %s200, 6
      %s205 = smul.addr %s202, 7
      %s206 = sadd.s32 %s204, %s205
      %s207 = smul.addr %s206, 8
      %s208 = scalar_lea.vmem %s3, %s207
      %s209 = smul.u32 7, %s19
      %v210 = vld [vmem:[%s198] sm:$0xff]
      %v211 = vld [vmem:[%s198 + $0x8] sm:$0xff]
      %v212 = vld [vmem:[%s198 + $0x10] sm:$0xff]
      %v213 = vld [vmem:[%s198 + $0x18] sm:$0xf]
      %v214 = vunpack.c.l.bf16 %v210
      %v215 = vunpack.c.h.bf16 %v210
      %v216 = vunpack.c.l.bf16 %v211
      %v217 = vunpack.c.h.bf16 %v211
      %v218 = vunpack.c.l.bf16 %v212
      %v219 = vunpack.c.h.bf16 %v212
      %v220 = vunpack.c.l.bf16 %v213
      %v221 = vld [vmem:[%s1] sm:$0xff]
      %223 = vset.pattern.permute.xlu0 0
      %224 = vperm.xlu0 %223, %v221
      %v225 = vpop.permute.xlu0 %224
      %v227 = vmul.f32 %v214, %v225
      %v228 = vmul.f32 %v215, %v225
      %v229 = vmul.f32 %v216, %v225
      %v230 = vmul.f32 %v217, %v225
      %v231 = vmul.f32 %v218, %v225
      %v232 = vmul.f32 %v219, %v225
      %v233 = vmul.f32 %v220, %v225
      %v234 = vld [vmem:[%s2] sm:$0xff]
      %236 = vset.pattern.permute.xlu0 0
      %237 = vperm.xlu0 %236, %v234
      %v238 = vpop.permute.xlu0 %237
      %v240 = vadd.f32 %v227, %v238
      %v241 = vadd.f32 %v228, %v238
      %v242 = vadd.f32 %v229, %v238
      %v243 = vadd.f32 %v230, %v238
      %v244 = vadd.f32 %v231, %v238
      %v245 = vadd.f32 %v232, %v238
      %v246 = vadd.f32 %v233, %v238
      %v247 = vmax.f32 %v240, 0.0
      %v248 = vmax.f32 %v241, 0.0
      %v249 = vmax.f32 %v242, 0.0
      %v250 = vmax.f32 %v243, 0.0
      %v251 = vmax.f32 %v244, 0.0
      %v252 = vmax.f32 %v245, 0.0
      %v253 = vmax.f32 %v246, 0.0
      %254 = vst [vmem:[%s208] sm:$0xff] %v247
      %255 = vst [vmem:[%s208 + $0x8] sm:$0xff] %v248
      %256 = vst [vmem:[%s208 + $0x10] sm:$0xff] %v249
      %257 = vst [vmem:[%s208 + $0x18] sm:$0xff] %v250
      %258 = vst [vmem:[%s208 + $0x20] sm:$0xff] %v251
      %259 = vst [vmem:[%s208 + $0x28] sm:$0xff] %v252
      %260 = vst [vmem:[%s208 + $0x30] sm:$0xff] %v253
      %s261 = smul.u32 7, %s19
      %p262 = scmp.lt.s32.totalorder %s18, 1
      %s263 = scalar_select %p262, %s18, 1
      %p264 = scmp.lt.s32.totalorder %s261, 6
      %s265 = scalar_select %p264, %s261, 6
      %s266 = smul.addr %s263, 7
      %s267 = sadd.s32 %s265, %s266
      %s268 = smul.addr %s267, 8
      %s269 = scalar_lea.vmem %s3, %s268
      // Predicated region
      $region33: #{cbr_forward.3} parent=31 // pred_check
        %p270 = pneg %p116
      $region34: #{cbr_forward.3} parent=31 // pred_check_branch
        %272 = sbr.rel (%p270) target = $region36
      $region35: #{cbr_forward.3} parent=31 // pred_region
        %s273 = smul.u32 7, %s19
      $region36: #{cbr_forward.3} parent=31 // pred_fallthru
        _
    $region32: #{cbr_forward.3} parent=5 // pred_fallthru
      _
    %p274 = scmp.le.s32.totalorder 2, %s9
    // Predicated region
    $region37: #{cbr_forward.3} parent=5 // pred_check
      %p275 = pneg %p274
    $region38: #{cbr_forward.3} parent=5 // pred_check_branch
      %277 = sbr.rel (%p275) target = $region40
    $region39: #{cbr_forward.3} parent=5 // pred_region
      %s278 = ssub.s32 %s9, 2
      // Predicated region
      $region41: #{cbr_forward.3} parent=39 // pred_check
        %p279 = pneg %p122
      $region42: #{cbr_forward.3} parent=39 // pred_check_branch
        %281 = sbr.rel (%p279) target = $region44
      $region43: #{cbr_forward.3} parent=39 // pred_region
        %s282 = smul.u32 7, %s21
        %p283 = scmp.lt.s32.totalorder %s20, 1
        %s284 = scalar_select %p283, %s20, 1
        %p285 = scmp.lt.s32.totalorder %s282, 6
        %s286 = scalar_select %p285, %s282, 6
        %s287 = smul.addr %s284, 7
        %s288 = sadd.s32 %s286, %s287
        %s289 = smul.addr %s288, 8
        %s290 = scalar_lea.vmem %s3, %s289
      $region44: #{cbr_forward.3} parent=39 // pred_fallthru
        _
    $region40: #{cbr_forward.3} parent=5 // pred_fallthru
      _
  $region6: #{cbr_forward.3} parent=0 // loop_footer
    %s13 = sadd.s32 1, %s9
  $region7: #{cbr_forward.3} parent=0 // loop_footer_branch
    %8 = sbr.rel target = $region3
  $region8: #{cbr_forward.3} parent=0 // loop_exit
    _

// kernel: cbr_forward.2
$region0: #{cbr_forward.2}
  #allocation0 [shape = 'u32[]', space=smem, size = 0x4, offset = 0x4, fixed_abs, tag = 'smem constant byte address 0x4 - core index']
  #allocation1 [shape = 'u32[72,128]{1,0:T(1,128)}', space=vmem, size = 0x9000, scoped, tag = 'internal scratch']
  %s0 = inlined_call_operand.vmem [shape: bf16[2,1,4,1152], index: 0, kind: input, shape index: {}]
  %s1 = inlined_call_operand.vmem [shape: bf16[27,8,4], index: 1, kind: input, shape index: {}]
  %s2 = inlined_call_operand.vmem [shape: f32[1,1,896], index: 2, kind: input, shape index: {}]
  %s3 = inlined_call_operand.vmem [shape: bf16[2,8,896], index: 3, kind: output, shape index: {0}]
  %s4 = inlined_call_operand.vmem [shape: f32[2,1,8,2], index: 4, kind: output, shape index: {1}]
  %5 = xla_tuple %s3, %s4
  %s6 = sld [smem:[#allocation0]]
  $region53: #{cbr_forward.2} parent=0
    _
  %s8 = ssub.s32 1, %s6
  %s9 = scalar_select 0, %s8, %s6
  loop: start=0, step=1, limit=4
  $region2: #{cbr_forward.2} parent=0 // loop_pre_header
    _
  $region3: #{cbr_forward.2} parent=0 // loop_header
    %s11 = sphi 0, %s15
    %p12 = scmp.ge.s32.totalorder %s11, 4
    %s18 = sphi 0, %s30
    %s19 = sphi 0, %s26
    %s20 = sphi 0, %s18
    %s21 = sphi 0, %s19
    %s22 = sphi 0, %s20
    %s23 = sphi 0, %s21
    %s35 = sphi 0, %s37
    %s38 = sphi 0, %s35
    %s39 = sphi 0, %s38
    %s55 = sphi 0, %s39
    %s59 = sphi 0, %s59
    %s61 = sphi 0, %s59
    %s62 = sphi 0, %s61
    %s76 = sphi 0, %s62
    %s82 = sphi 0, %s84
    %s85 = sphi 0, %s82
    %s86 = sphi 0, %s85
    %s102 = sphi 0, %s86
    %s110 = sphi 0, %s112
    %s113 = sphi 0, %s110
    %s114 = sphi 0, %s113
    %s130 = sphi 0, %s114
    %s138 = sphi 0, %s140
    %s141 = sphi 0, %s138
    %s142 = sphi 0, %s141
    %s158 = sphi 0, %s142
  $region4: #{cbr_forward.2} parent=0 // loop_header_branch
    %14 = sbr.rel (%p12) target = $region8
  $region5: #{cbr_forward.2} parent=0 // loop_body
    %s16 = ssub.s32 %s11, 1
    %s17 = ssub.s32 %s11, 2
    %s24 = sadd.s32 1, %s19
    %p25 = scmp.ge.s32.totalorder %s24, 1
    %s26 = scalar_select %p25, 0, %s24
    %s27 = sadd.s32 1, %s18
    %s28 = scalar_select %p25, %s27, %s18
    %p29 = scmp.ge.s32.totalorder %s28, 2
    %s30 = scalar_select %p29, 0, %s28
    %s31 = ssub.s32 %s18, %s30
    %s32 = ssub.s32 %s19, %s26
    %s33 = sor.u32 %s31, %s32
    %p34 = scmp.eq.s32.totalorder %s33, 0
    %s36 = sadd.s32 %s35, 1
    %s37 = scalar_select %p34, %s35, %s36
    %p40 = pneg %p34
    %p41 = scmp.eq.s32.totalorder %s11, 1
    %p42 = por %p40, %p41
    %p43 = scmp.ne.s32.totalorder %s35, %s38
    %p44 = scmp.eq.s32.totalorder %s11, 0
    %p45 = por %p43, %p44
    %p46 = scmp.ne.s32.totalorder %s35, %s38
    %p47 = scmp.eq.s32.totalorder %s16, 1
    %p48 = por %p46, %p47
    %p49 = scmp.ne.s32.totalorder %s38, %s39
    %p50 = scmp.eq.s32.totalorder %s16, 0
    %p51 = por %p49, %p50
    %p52 = scmp.ne.s32.totalorder %s38, %s39
    %p53 = scmp.eq.s32.totalorder %s17, 1
    %p54 = por %p52, %p53
    %p56 = scmp.ne.s32.totalorder %s39, %s55
    %p57 = scmp.eq.s32.totalorder %s17, 0
    %p58 = por %p56, %p57
    %s60 = sadd.s32 %s59, 1
    %p63 = scmp.eq.s32.totalorder %s11, 1
    %p64 = scmp.ne.s32.totalorder %s59, %s61
    %p65 = scmp.eq.s32.totalorder %s11, 0
    %p66 = por %p64, %p65
    %p67 = scmp.ne.s32.totalorder %s59, %s61
    %p68 = scmp.eq.s32.totalorder %s16, 1
    %p69 = por %p67, %p68
    %p70 = scmp.ne.s32.totalorder %s61, %s62
    %p71 = scmp.eq.s32.totalorder %s16, 0
    %p72 = por %p70, %p71
    %p73 = scmp.ne.s32.totalorder %s61, %s62
    %p74 = scmp.eq.s32.totalorder %s17, 1
    %p75 = por %p73, %p74
    %p77 = scmp.ne.s32.totalorder %s62, %s76
    %p78 = scmp.eq.s32.totalorder %s17, 0
    %p79 = por %p77, %p78
    %s80 = ssub.s32 %s19, %s26
    %p81 = scmp.eq.s32.totalorder %s80, 0
    %s83 = sadd.s32 %s82, 1
    %s84 = scalar_select %p81, %s82, %s83
    %p87 = pneg %p81
    %p88 = scmp.eq.s32.totalorder %s11, 1
    %p89 = por %p87, %p88
    %p90 = scmp.ne.s32.totalorder %s82, %s85
    %p91 = scmp.eq.s32.totalorder %s11, 0
    %p92 = por %p90, %p91
    %p93 = scmp.ne.s32.totalorder %s82, %s85
    %p94 = scmp.eq.s32.totalorder %s16, 1
    %p95 = por %p93, %p94
    %p96 = scmp.ne.s32.totalorder %s85, %s86
    %p97 = scmp.eq.s32.totalorder %s16, 0
    %p98 = por %p96, %p97
    %p99 = scmp.ne.s32.totalorder %s85, %s86
    %p100 = scmp.eq.s32.totalorder %s17, 1
    %p101 = por %p99, %p100
    %p103 = scmp.ne.s32.totalorder %s86, %s102
    %p104 = scmp.eq.s32.totalorder %s17, 0
    %p105 = por %p103, %p104
    %s106 = ssub.s32 %s18, %s30
    %s107 = ssub.s32 %s19, %s26
    %s108 = sor.u32 %s106, %s107
    %p109 = scmp.eq.s32.totalorder %s108, 0
    %s111 = sadd.s32 %s110, 1
    %s112 = scalar_select %p109, %s110, %s111
    %p115 = pneg %p109
    %p116 = scmp.eq.s32.totalorder %s11, 1
    %p117 = por %p115, %p116
    %p118 = scmp.ne.s32.totalorder %s110, %s113
    %p119 = scmp.eq.s32.totalorder %s11, 0
    %p120 = por %p118, %p119
    %p121 = scmp.ne.s32.totalorder %s110, %s113
    %p122 = scmp.eq.s32.totalorder %s16, 1
    %p123 = por %p121, %p122
    %p124 = scmp.ne.s32.totalorder %s113, %s114
    %p125 = scmp.eq.s32.totalorder %s16, 0
    %p126 = por %p124, %p125
    %p127 = scmp.ne.s32.totalorder %s113, %s114
    %p128 = scmp.eq.s32.totalorder %s17, 1
    %p129 = por %p127, %p128
    %p131 = scmp.ne.s32.totalorder %s114, %s130
    %p132 = scmp.eq.s32.totalorder %s17, 0
    %p133 = por %p131, %p132
    %s134 = ssub.s32 %s18, %s30
    %s135 = ssub.s32 %s19, %s26
    %s136 = sor.u32 %s134, %s135
    %p137 = scmp.eq.s32.totalorder %s136, 0
    %s139 = sadd.s32 %s138, 1
    %s140 = scalar_select %p137, %s138, %s139
    %p143 = pneg %p137
    %p144 = scmp.eq.s32.totalorder %s11, 1
    %p145 = por %p143, %p144
    %p146 = scmp.ne.s32.totalorder %s138, %s141
    %p147 = scmp.eq.s32.totalorder %s11, 0
    %p148 = por %p146, %p147
    %p149 = scmp.ne.s32.totalorder %s138, %s141
    %p150 = scmp.eq.s32.totalorder %s16, 1
    %p151 = por %p149, %p150
    %p152 = scmp.ne.s32.totalorder %s141, %s142
    %p153 = scmp.eq.s32.totalorder %s16, 0
    %p154 = por %p152, %p153
    %p155 = scmp.ne.s32.totalorder %s141, %s142
    %p156 = scmp.eq.s32.totalorder %s17, 1
    %p157 = por %p155, %p156
    %p159 = scmp.ne.s32.totalorder %s142, %s158
    %p160 = scmp.eq.s32.totalorder %s17, 0
    %p161 = por %p159, %p160
    %p162 = scmp.le.s32.totalorder 1, %s11
    %p163 = scmp.lt.s32.totalorder %s11, 3
    %p164 = pnand %p162, %p163
    %p165 = pneg %p164
    // Predicated region
    $region9: #{cbr_forward.2} parent=5 // pred_check
      _
    $region10: #{cbr_forward.2} parent=5 // pred_check_branch
      %167 = sbr.rel (%p164) target = $region12
    $region11: #{cbr_forward.2} parent=5 // pred_region
      %s168 = ssub.s32 %s11, 1
      // Predicated region
      $region13: #{cbr_forward.2} parent=11 // pred_check
        %p169 = pneg %p72
      $region14: #{cbr_forward.2} parent=11 // pred_check_branch
        %171 = sbr.rel (%p169) target = $region16
      $region15: #{cbr_forward.2} parent=11 // pred_region
        _
      $region16: #{cbr_forward.2} parent=11 // pred_fallthru
        _
      // Predicated region
      $region17: #{cbr_forward.2} parent=11 // pred_check
        %p172 = pneg %p98
      $region18: #{cbr_forward.2} parent=11 // pred_check_branch
        %174 = sbr.rel (%p172) target = $region20
      $region19: #{cbr_forward.2} parent=11 // pred_region
        %p175 = scmp.lt.s32.totalorder %s21, 0
        %s176 = scalar_select %p175, %s21, 0
        %s177 = smul.addr %s176, 7
        %s178 = scalar_lea.vmem %s2, %s177
      $region20: #{cbr_forward.2} parent=11 // pred_fallthru
        _
    $region12: #{cbr_forward.2} parent=5 // pred_fallthru
      _
    %p179 = scmp.lt.s32.totalorder %s11, 2
    // Predicated region
    $region21: #{cbr_forward.2} parent=5 // pred_check
      %p180 = pneg %p179
    $region22: #{cbr_forward.2} parent=5 // pred_check_branch
      %182 = sbr.rel (%p180) target = $region24
    $region23: #{cbr_forward.2} parent=5 // pred_region
      // Predicated region
      $region25: #{cbr_forward.2} parent=23 // pred_check
        %p183 = pneg %p45
      $region26: #{cbr_forward.2} parent=23 // pred_check_branch
        %185 = sbr.rel (%p183) target = $region28
      $region27: #{cbr_forward.2} parent=23 // pred_region
        %p186 = scmp.lt.s32.totalorder %s18, 1
        %s187 = scalar_select %p186, %s18, 1
        %p188 = scmp.lt.s32.totalorder %s19, 0
        %s189 = scalar_select %p188, %s19, 0
        %s190 = smul.addr %s189, 9
        %s191 = smul.addr %s187, 9
        %s192 = sadd.s32 %s190, %s191
        %s193 = smul.addr %s192, 2
        %s194 = scalar_lea.vmem %s0, %s193
      $region28: #{cbr_forward.2} parent=23 // pred_fallthru
        _
    $region24: #{cbr_forward.2} parent=5 // pred_fallthru
      _
    %p195 = scmp.le.s32.totalorder 1, %s11
    %p196 = scmp.lt.s32.totalorder %s11, 3
    %p197 = pnand %p195, %p196
    %p198 = pneg %p197
    // Predicated region
    $region29: #{cbr_forward.2} parent=5 // pred_check
      _
    $region30: #{cbr_forward.2} parent=5 // pred_check_branch
      %200 = sbr.rel (%p197) target = $region32
    $region31: #{cbr_forward.2} parent=5 // pred_region
      %s201 = ssub.s32 %s11, 1
      %p202 = scmp.lt.s32.totalorder %s20, 1
      %s203 = scalar_select %p202, %s20, 1
      %p204 = scmp.lt.s32.totalorder %s21, 0
      %s205 = scalar_select %p204, %s21, 0
      %s206 = smul.addr %s205, 9
      %s207 = smul.addr %s203, 9
      %s208 = sadd.s32 %s206, %s207
      %s209 = smul.addr %s208, 2
      %s210 = scalar_lea.vmem %s0, %s209
      %p211 = pneg %p51
      %p212 = pneg %p48
      %p213 = pneg %p72
      %p214 = pneg %p69
      %p215 = scmp.lt.s32.totalorder %s21, 0
      %s216 = scalar_select %p215, %s21, 0
      %s217 = smul.addr %s216, 7
      %s218 = scalar_lea.vmem %s2, %s217
      %p219 = pneg %p98
      %p220 = pneg %p95
      %p221 = pneg %p126
      %p222 = pneg %p123
      %s223 = smul.u32 7, %s21
      %p224 = scmp.lt.s32.totalorder %s20, 1
      %s225 = scalar_select %p224, %s20, 1
      %p226 = scmp.lt.s32.totalorder %s223, 6
      %s227 = scalar_select %p226, %s223, 6
      %s228 = smul.addr %s225, 7
      %s229 = sadd.s32 %s227, %s228
      %s230 = smul.addr %s229, 4
      %s231 = scalar_lea.vmem %s3, %s230
      %p232 = pneg %p154
      %p233 = pneg %p151
      %p234 = scmp.lt.s32.totalorder %s20, 1
      %s235 = scalar_select %p234, %s20, 1
      %p236 = scmp.lt.s32.totalorder %s21, 0
      %s237 = scalar_select %p236, %s21, 0
      %s238 = sadd.s32 %s237, %s235
      %s239 = smul.addr %s238, 8
      %s240 = scalar_lea.vmem %s4, %s239
      %p241 = scmp.lt.s32.totalorder %s20, 1
      %s242 = scalar_select %p241, %s20, 1
      %p243 = scmp.lt.s32.totalorder %s21, 0
      %s244 = scalar_select %p243, %s21, 0
      %s245 = smul.addr %s244, 9
      %s246 = smul.addr %s242, 9
      %s247 = sadd.s32 %s245, %s246
      %s248 = smul.addr %s247, 2
      %s249 = scalar_lea.vmem %s0, %s248
      %p250 = scmp.lt.s32.totalorder %s21, 0
      %s251 = scalar_select %p250, %s21, 0
      %s252 = smul.addr %s251, 7
      %s253 = scalar_lea.vmem %s2, %s252
      %s254 = smul.u32 7, %s21
      %p255 = scmp.lt.s32.totalorder %s20, 1
      %s256 = scalar_select %p255, %s20, 1
      %p257 = scmp.lt.s32.totalorder %s254, 6
      %s258 = scalar_select %p257, %s254, 6
      %s259 = smul.addr %s256, 7
      %s260 = sadd.s32 %s258, %s259
      %s261 = smul.addr %s260, 4
      %s262 = scalar_lea.vmem %s3, %s261
      %s263 = smul.u32 7, %s21
      %p264 = scmp.lt.s32.totalorder %s20, 1
      %s265 = scalar_select %p264, %s20, 1
      %p266 = scmp.lt.s32.totalorder %s21, 0
      %s267 = scalar_select %p266, %s21, 0
      %s268 = sadd.s32 %s267, %s265
      %s269 = smul.addr %s268, 8
      %s270 = scalar_lea.vmem %s4, %s269
      %v272 = vld [vmem:[%s249] sm:$0xff]
      %v273 = vld [vmem:[%s249 + $0x8] sm:$0xff]
      %v274 = vld [vmem:[%s249 + $0x10] sm:$0x3]
      %v275 = vld [vmem:[%s1] sm:$0xf]
      %s276 = scalar_lea.vmem %s1, 4
      %v277 = vld [vmem:[%s276] sm:$0xf]
      %279 = vst [vmem:[#allocation1] ss:$4 sm:$0xff] %v272
      %s281 = scalar_lea.vmem [#allocation1], 32
      %282 = vst [vmem:[%s281] ss:$4 sm:$0xff] %v273
      %v283 = vld.sshfl [vmem:[#allocation1] sm:$0xff pattern:$0x73625140]
      %v285 = vld.sshfl [vmem:[#allocation1 + $0x8] sm:$0xff pattern:$0x73625140]
      %v287 = vld.sshfl [vmem:[#allocation1 + $0x10] sm:$0xff pattern:$0x73625140]
      %v289 = vld.sshfl [vmem:[#allocation1 + $0x18] sm:$0xff pattern:$0x73625140]
      %v291 = vld.sshfl [vmem:[#allocation1 + $0x20] sm:$0xff pattern:$0x73625140]
      %v293 = vld.sshfl [vmem:[#allocation1 + $0x28] sm:$0xff pattern:$0x73625140]
      %v295 = vld.sshfl [vmem:[#allocation1 + $0x30] sm:$0xff pattern:$0x73625140]
      %v297 = vld.sshfl [vmem:[#allocation1 + $0x38] sm:$0xff pattern:$0x73625140]
      %299 = vrot.lane.b32.xlu0 %v283, 127
      %v300 = vpop.permute.xlu0 %299
      %301 = vrot.lane.b32.xlu0 %v285, 127
      %v302 = vpop.permute.xlu0 %301
      %303 = vrot.lane.b32.xlu0 %v287, 127
      %v304 = vpop.permute.xlu0 %303
      %305 = vrot.lane.b32.xlu0 %v289, 127
      %v306 = vpop.permute.xlu0 %305
      %307 = vrot.lane.b32.xlu0 %v291, 127
      %v308 = vpop.permute.xlu0 %307
      %309 = vrot.lane.b32.xlu0 %v293, 127
      %v310 = vpop.permute.xlu0 %309
      %311 = vrot.lane.b32.xlu0 %v295, 127
      %v312 = vpop.permute.xlu0 %311
      %313 = vrot.lane.b32.xlu0 %v297, 127
      %v314 = vpop.permute.xlu0 %313
      %vm315 = vcmask 1039360
      %v316 = vsel %vm315, %v300, %v302
      %v317 = vsel %vm315, %v302, %v304
      %v318 = vsel %vm315, %v304, %v306
      %v319 = vsel %vm315, %v306, %v308
      %v320 = vsel %vm315, %v308, %v310
      %v321 = vsel %vm315, %v310, %v312
      %v322 = vsel %vm315, %v312, %v314
      %vm323 = vcmask 31744
      %v325 = vsel %vm323, %v277, 0
      %vm327 = vcmask 1041408
      %v329 = vsel %vm327, %v316, 0
      %v332 = vsel %vm327, %v317, 0
      %v335 = vsel %vm327, %v318, 0
      %v338 = vsel %vm327, %v319, 0
      %v341 = vsel %vm327, %v320, 0
      %v344 = vsel %vm327, %v321, 0
      %v347 = vsel %vm327, %v322, 0
      %349 = vmatpush.bf16.msra.mxu0 0
      %350 = vmatpush.bf16.msra.mxu0 0
      %351 = vmatpush.bf16.msra.mxu0 0
      %352 = vmatpush.bf16.msra.mxu0 0
      %353 = vmatpush.bf16.msra.mxu0 0
      %354 = vmatpush.bf16.msra.mxu0 0
      %355 = vmatpush.bf16.msra.mxu0 0
      %356 = vmatpush.bf16.msra.mxu0 %v329
      %357 = vmatmul.bf16.gmra.mxu0 %v325
      %v358 = vpop.f32.mrf.mxu0
      %v359 = vadd.f32 0.0, %v358
      %v360 = vpop.f32.mrf.mxu0
      %361 = vdwg.mxu0
      %362 = vmatpush.bf16.msra.mxu0 0
      %363 = vmatpush.bf16.msra.mxu0 0
      %364 = vmatpush.bf16.msra.mxu0 0
      %365 = vmatpush.bf16.msra.mxu0 0
      %366 = vmatpush.bf16.msra.mxu0 0
      %367 = vmatpush.bf16.msra.mxu0 0
      %368 = vmatpush.bf16.msra.mxu0 0
      %369 = vmatpush.bf16.msra.mxu0 %v332
      %370 = vmatmul.bf16.gmra.mxu0 %v325
      %v371 = vpop.f32.mrf.mxu0
      %v372 = vadd.f32 0.0, %v371
      %v373 = vpop.f32.mrf.mxu0
      %374 = vdwg.mxu0
      %375 = vmatpush.bf16.msra.mxu0 0
      %376 = vmatpush.bf16.msra.mxu0 0
      %377 = vmatpush.bf16.msra.mxu0 0
      %378 = vmatpush.bf16.msra.mxu0 0
      %379 = vmatpush.bf16.msra.mxu0 0
      %380 = vmatpush.bf16.msra.mxu0 0
      %381 = vmatpush.bf16.msra.mxu0 0
      %382 = vmatpush.bf16.msra.mxu0 %v335
      %383 = vmatmul.bf16.gmra.mxu0 %v325
      %v384 = vpop.f32.mrf.mxu0
      %v385 = vadd.f32 0.0, %v384
      %v386 = vpop.f32.mrf.mxu0
      %387 = vdwg.mxu0
      %388 = vmatpush.bf16.msra.mxu0 0
      %389 = vmatpush.bf16.msra.mxu0 0
      %390 = vmatpush.bf16.msra.mxu0 0
      %391 = vmatpush.bf16.msra.mxu0 0
      %392 = vmatpush.bf16.msra.mxu0 0
      %393 = vmatpush.bf16.msra.mxu0 0
      %394 = vmatpush.bf16.msra.mxu0 0
      %395 = vmatpush.bf16.msra.mxu0 %v338
      %396 = vmatmul.bf16.gmra.mxu0 %v325
      %v397 = vpop.f32.mrf.mxu0
      %v398 = vadd.f32 0.0, %v397
      %v399 = vpop.f32.mrf.mxu0
      %400 = vdwg.mxu0
      %401 = vmatpush.bf16.msra.mxu0 0
      %402 = vmatpush.bf16.msra.mxu0 0
      %403 = vmatpush.bf16.msra.mxu0 0
      %404 = vmatpush.bf16.msra.mxu0 0
      %405 = vmatpush.bf16.msra.mxu0 0
      %406 = vmatpush.bf16.msra.mxu0 0
      %407 = vmatpush.bf16.msra.mxu0 0
      %408 = vmatpush.bf16.msra.mxu0 %v341
      %409 = vmatmul.bf16.gmra.mxu0 %v325
      %v410 = vpop.f32.mrf.mxu0
      %v411 = vadd.f32 0.0, %v410
      %v412 = vpop.f32.mrf.mxu0
      %413 = vdwg.mxu0
      %414 = vmatpush.bf16.msra.mxu0 0
      %415 = vmatpush.bf16.msra.mxu0 0
      %416 = vmatpush.bf16.msra.mxu0 0
      %417 = vmatpush.bf16.msra.mxu0 0
      %418 = vmatpush.bf16.msra.mxu0 0
      %419 = vmatpush.bf16.msra.mxu0 0
      %420 = vmatpush.bf16.msra.mxu0 0
      %421 = vmatpush.bf16.msra.mxu0 %v344
      %422 = vmatmul.bf16.gmra.mxu0 %v325
      %v423 = vpop.f32.mrf.mxu0
      %v424 = vadd.f32 0.0, %v423
      %v425 = vpop.f32.mrf.mxu0
      %426 = vdwg.mxu0
      %427 = vmatpush.bf16.msra.mxu0 0
      %428 = vmatpush.bf16.msra.mxu0 0
      %429 = vmatpush.bf16.msra.mxu0 0
      %430 = vmatpush.bf16.msra.mxu0 0
      %431 = vmatpush.bf16.msra.mxu0 0
      %432 = vmatpush.bf16.msra.mxu0 0
      %433 = vmatpush.bf16.msra.mxu0 0
      %434 = vmatpush.bf16.msra.mxu0 %v347
      %435 = vmatmul.bf16.gmra.mxu0 %v325
      %v436 = vpop.f32.mrf.mxu0
      %v437 = vadd.f32 0.0, %v436
      %v438 = vpop.f32.mrf.mxu0
      %439 = vdwg.mxu0
      %440 = vst [vmem:[#allocation1] ss:$4 sm:$0xff] %v272
      %s441 = scalar_lea.vmem [#allocation1], 32
      %442 = vst [vmem:[%s441] ss:$4 sm:$0xff] %v273
      %v443 = vld.sshfl [vmem:[#allocation1] sm:$0xff pattern:$0x73625140]
      %v444 = vld.sshfl [vmem:[#allocation1 + $0x8] sm:$0xff pattern:$0x73625140]
      %v445 = vld.sshfl [vmem:[#allocation1 + $0x10] sm:$0xff pattern:$0x73625140]
      %v446 = vld.sshfl [vmem:[#allocation1 + $0x18] sm:$0xff pattern:$0x73625140]
      %v447 = vld.sshfl [vmem:[#allocation1 + $0x20] sm:$0xff pattern:$0x73625140]
      %v448 = vld.sshfl [vmem:[#allocation1 + $0x28] sm:$0xff pattern:$0x73625140]
      %v449 = vld.sshfl [vmem:[#allocation1 + $0x30] sm:$0xff pattern:$0x73625140]
      %v451 = vsel %vm323, %v275, 0
      %v453 = vsel %vm327, %v443, 0
      %v455 = vsel %vm327, %v444, 0
      %v457 = vsel %vm327, %v445, 0
      %v459 = vsel %vm327, %v446, 0
      %v461 = vsel %vm327, %v447, 0
      %v463 = vsel %vm327, %v448, 0
      %v465 = vsel %vm327, %v449, 0
      %467 = vmatpush.bf16.msra.mxu0 0
      %468 = vmatpush.bf16.msra.mxu0 0
      %469 = vmatpush.bf16.msra.mxu0 0
      %470 = vmatpush.bf16.msra.mxu0 0
      %471 = vmatpush.bf16.msra.mxu0 0
      %472 = vmatpush.bf16.msra.mxu0 0
      %473 = vmatpush.bf16.msra.mxu0 0
      %474 = vmatpush.bf16.msra.mxu0 %v453
      %475 = vmatmul.bf16.gmra.mxu0 %v451
      %v476 = vpop.f32.mrf.mxu0
      %v477 = vadd.f32 %v359, %v476
      %v478 = vpop.f32.mrf.mxu0
      %479 = vdwg.mxu0
      %480 = vmatpush.bf16.msra.mxu0 0
      %481 = vmatpush.bf16.msra.mxu0 0
      %482 = vmatpush.bf16.msra.mxu0 0
      %483 = vmatpush.bf16.msra.mxu0 0
      %484 = vmatpush.bf16.msra.mxu0 0
      %485 = vmatpush.bf16.msra.mxu0 0
      %486 = vmatpush.bf16.msra.mxu0 0
      %487 = vmatpush.bf16.msra.mxu0 %v455
      %488 = vmatmul.bf16.gmra.mxu0 %v451
      %v489 = vpop.f32.mrf.mxu0
      %v490 = vadd.f32 %v372, %v489
      %v491 = vpop.f32.mrf.mxu0
      %492 = vdwg.mxu0
      %493 = vmatpush.bf16.msra.mxu0 0
      %494 = vmatpush.bf16.msra.mxu0 0
      %495 = vmatpush.bf16.msra.mxu0 0
      %496 = vmatpush.bf16.msra.mxu0 0
      %497 = vmatpush.bf16.msra.mxu0 0
      %498 = vmatpush.bf16.msra.mxu0 0
      %499 = vmatpush.bf16.msra.mxu0 0
      %500 = vmatpush.bf16.msra.mxu0 %v457
      %501 = vmatmul.bf16.gmra.mxu0 %v451
      %v502 = vpop.f32.mrf.mxu0
      %v503 = vadd.f32 %v385, %v502
      %v504 = vpop.f32.mrf.mxu0
      %505 = vdwg.mxu0
      %506 = vmatpush.bf16.msra.mxu0 0
      %507 = vmatpush.bf16.msra.mxu0 0
      %508 = vmatpush.bf16.msra.mxu0 0
      %509 = vmatpush.bf16.msra.mxu0 0
      %510 = vmatpush.bf16.msra.mxu0 0
      %511 = vmatpush.bf16.msra.mxu0 0
      %512 = vmatpush.bf16.msra.mxu0 0
      %513 = vmatpush.bf16.msra.mxu0 %v459
      %514 = vmatmul.bf16.gmra.mxu0 %v451
      %v515 = vpop.f32.mrf.mxu0
      %v516 = vadd.f32 %v398, %v515
      %v517 = vpop.f32.mrf.mxu0
      %518 = vdwg.mxu0
      %519 = vmatpush.bf16.msra.mxu0 0
      %520 = vmatpush.bf16.msra.mxu0 0
      %521 = vmatpush.bf16.msra.mxu0 0
      %522 = vmatpush.bf16.msra.mxu0 0
      %523 = vmatpush.bf16.msra.mxu0 0
      %524 = vmatpush.bf16.msra.mxu0 0
      %525 = vmatpush.bf16.msra.mxu0 0
      %526 = vmatpush.bf16.msra.mxu0 %v461
      %527 = vmatmul.bf16.gmra.mxu0 %v451
      %v528 = vpop.f32.mrf.mxu0
      %v529 = vadd.f32 %v411, %v528
      %v530 = vpop.f32.mrf.mxu0
      %531 = vdwg.mxu0
      %532 = vmatpush.bf16.msra.mxu0 0
      %533 = vmatpush.bf16.msra.mxu0 0
      %534 = vmatpush.bf16.msra.mxu0 0
      %535 = vmatpush.bf16.msra.mxu0 0
      %536 = vmatpush.bf16.msra.mxu0 0
      %537 = vmatpush.bf16.msra.mxu0 0
      %538 = vmatpush.bf16.msra.mxu0 0
      %539 = vmatpush.bf16.msra.mxu0 %v463
      %540 = vmatmul.bf16.gmra.mxu0 %v451
      %v541 = vpop.f32.mrf.mxu0
      %v542 = vadd.f32 %v424, %v541
      %v543 = vpop.f32.mrf.mxu0
      %544 = vdwg.mxu0
      %545 = vmatpush.bf16.msra.mxu0 0
      %546 = vmatpush.bf16.msra.mxu0 0
      %547 = vmatpush.bf16.msra.mxu0 0
      %548 = vmatpush.bf16.msra.mxu0 0
      %549 = vmatpush.bf16.msra.mxu0 0
      %550 = vmatpush.bf16.msra.mxu0 0
      %551 = vmatpush.bf16.msra.mxu0 0
      %552 = vmatpush.bf16.msra.mxu0 %v465
      %553 = vmatmul.bf16.gmra.mxu0 %v451
      %v554 = vpop.f32.mrf.mxu0
      %v555 = vadd.f32 %v437, %v554
      %v556 = vpop.f32.mrf.mxu0
      %557 = vdwg.mxu0
      %s558 = scalar_lea.vmem %s1, 8
      %v559 = vld [vmem:[%s558] sm:$0xf]
      %560 = vst [vmem:[#allocation1] ss:$4 sm:$0xff] %v272
      %s561 = scalar_lea.vmem [#allocation1], 32
      %562 = vst [vmem:[%s561] ss:$4 sm:$0xff] %v273
      %v563 = vld.sshfl [vmem:[#allocation1] sm:$0xff pattern:$0x73625140]
      %v565 = vld.sshfl [vmem:[#allocation1 + $0x8] sm:$0xff pattern:$0x73625140]
      %v567 = vld.sshfl [vmem:[#allocation1 + $0x10] sm:$0xff pattern:$0x73625140]
      %v569 = vld.sshfl [vmem:[#allocation1 + $0x18] sm:$0xff pattern:$0x73625140]
      %v571 = vld.sshfl [vmem:[#allocation1 + $0x20] sm:$0xff pattern:$0x73625140]
      %v573 = vld.sshfl [vmem:[#allocation1 + $0x28] sm:$0xff pattern:$0x73625140]
      %v575 = vld.sshfl [vmem:[#allocation1 + $0x30] sm:$0xff pattern:$0x73625140]
      %v577 = vld.sshfl [vmem:[#allocation1 + $0x38] sm:$0xff pattern:$0x73625140]
      %579 = vrot.lane.b32.xlu0 %v563, 126
      %v580 = vpop.permute.xlu0 %579
      %581 = vrot.lane.b32.xlu0 %v565, 126
      %v582 = vpop.permute.xlu0 %581
      %583 = vrot.lane.b32.xlu0 %v567, 126
      %v584 = vpop.permute.xlu0 %583
      %585 = vrot.lane.b32.xlu0 %v569, 126
      %v586 = vpop.permute.xlu0 %585
      %587 = vrot.lane.b32.xlu0 %v571, 126
      %v588 = vpop.permute.xlu0 %587
      %589 = vrot.lane.b32.xlu0 %v573, 126
      %v590 = vpop.permute.xlu0 %589
      %591 = vrot.lane.b32.xlu0 %v575, 126
      %v592 = vpop.permute.xlu0 %591
      %593 = vrot.lane.b32.xlu0 %v577, 126
      %v594 = vpop.permute.xlu0 %593
      %vm595 = vcmask 1031168
      %v596 = vsel %vm595, %v580, %v582
      %v597 = vsel %vm595, %v582, %v584
      %v598 = vsel %vm595, %v584, %v586
      %v599 = vsel %vm595, %v586, %v588
      %v600 = vsel %vm595, %v588, %v590
      %v601 = vsel %vm595, %v590, %v592
      %v602 = vsel %vm595, %v592, %v594
      %v604 = vsel %vm323, %v559, 0
      %v607 = vsel %vm327, %v596, 0
      %v610 = vsel %vm327, %v597, 0
      %v613 = vsel %vm327, %v598, 0
      %v616 = vsel %vm327, %v599, 0
      %v619 = vsel %vm327, %v600, 0
      %v622 = vsel %vm327, %v601, 0
      %v625 = vsel %vm327, %v602, 0
      %627 = vmatpush.bf16.msra.mxu0 0
      %628 = vmatpush.bf16.msra.mxu0 0
      %629 = vmatpush.bf16.msra.mxu0 0
      %630 = vmatpush.bf16.msra.mxu0 0
      %631 = vmatpush.bf16.msra.mxu0 0
      %632 = vmatpush.bf16.msra.mxu0 0
      %633 = vmatpush.bf16.msra.mxu0 0
      %634 = vmatpush.bf16.msra.mxu0 %v607
      %635 = vmatmul.bf16.gmra.mxu0 %v604
      %v636 = vpop.f32.mrf.mxu0
      %v637 = vadd.f32 0.0, %v636
      %v638 = vpop.f32.mrf.mxu0
      %639 = vdwg.mxu0
      %640 = vmatpush.bf16.msra.mxu0 0
      %641 = vmatpush.bf16.msra.mxu0 0
      %642 = vmatpush.bf16.msra.mxu0 0
      %643 = vmatpush.bf16.msra.mxu0 0
      %644 = vmatpush.bf16.msra.mxu0 0
      %645 = vmatpush.bf16.msra.mxu0 0
      %646 = vmatpush.bf16.msra.mxu0 0
      %647 = vmatpush.bf16.msra.mxu0 %v610
      %648 = vmatmul.bf16.gmra.mxu0 %v604
      %v649 = vpop.f32.mrf.mxu0
      %v650 = vadd.f32 0.0, %v649
      %v651 = vpop.f32.mrf.mxu0
      %652 = vdwg.mxu0
      %653 = vmatpush.bf16.msra.mxu0 0
      %654 = vmatpush.bf16.msra.mxu0 0
      %655 = vmatpush.bf16.msra.mxu0 0
      %656 = vmatpush.bf16.msra.mxu0 0
      %657 = vmatpush.bf16.msra.mxu0 0
      %658 = vmatpush.bf16.msra.mxu0 0
      %659 = vmatpush.bf16.msra.mxu0 0
      %660 = vmatpush.bf16.msra.mxu0 %v613
      %661 = vmatmul.bf16.gmra.mxu0 %v604
      %v662 = vpop.f32.mrf.mxu0
      %v663 = vadd.f32 0.0, %v662
      %v664 = vpop.f32.mrf.mxu0
      %665 = vdwg.mxu0
      %666 = vmatpush.bf16.msra.mxu0 0
      %667 = vmatpush.bf16.msra.mxu0 0
      %668 = vmatpush.bf16.msra.mxu0 0
      %669 = vmatpush.bf16.msra.mxu0 0
      %670 = vmatpush.bf16.msra.mxu0 0
      %671 = vmatpush.bf16.msra.mxu0 0
      %672 = vmatpush.bf16.msra.mxu0 0
      %673 = vmatpush.bf16.msra.mxu0 %v616
      %674 = vmatmul.bf16.gmra.mxu0 %v604
      %v675 = vpop.f32.mrf.mxu0
      %v676 = vadd.f32 0.0, %v675
      %v677 = vpop.f32.mrf.mxu0
      %678 = vdwg.mxu0
      %679 = vmatpush.bf16.msra.mxu0 0
      %680 = vmatpush.bf16.msra.mxu0 0
      %681 = vmatpush.bf16.msra.mxu0 0
      %682 = vmatpush.bf16.msra.mxu0 0
      %683 = vmatpush.bf16.msra.mxu0 0
      %684 = vmatpush.bf16.msra.mxu0 0
      %685 = vmatpush.bf16.msra.mxu0 0
      %686 = vmatpush.bf16.msra.mxu0 %v619
      %687 = vmatmul.bf16.gmra.mxu0 %v604
      %v688 = vpop.f32.mrf.mxu0
      %v689 = vadd.f32 0.0, %v688
      %v690 = vpop.f32.mrf.mxu0
      %691 = vdwg.mxu0
      %692 = vmatpush.bf16.msra.mxu0 0
      %693 = vmatpush.bf16.msra.mxu0 0
      %694 = vmatpush.bf16.msra.mxu0 0
      %695 = vmatpush.bf16.msra.mxu0 0
      %696 = vmatpush.bf16.msra.mxu0 0
      %697 = vmatpush.bf16.msra.mxu0 0
      %698 = vmatpush.bf16.msra.mxu0 0
      %699 = vmatpush.bf16.msra.mxu0 %v622
      %700 = vmatmul.bf16.gmra.mxu0 %v604
      %v701 = vpop.f32.mrf.mxu0
      %v702 = vadd.f32 0.0, %v701
      %v703 = vpop.f32.mrf.mxu0
      %704 = vdwg.mxu0
      %705 = vmatpush.bf16.msra.mxu0 0
      %706 = vmatpush.bf16.msra.mxu0 0
      %707 = vmatpush.bf16.msra.mxu0 0
      %708 = vmatpush.bf16.msra.mxu0 0
      %709 = vmatpush.bf16.msra.mxu0 0
      %710 = vmatpush.bf16.msra.mxu0 0
      %711 = vmatpush.bf16.msra.mxu0 0
      %712 = vmatpush.bf16.msra.mxu0 %v625
      %713 = vmatmul.bf16.gmra.mxu0 %v604
      %v714 = vpop.f32.mrf.mxu0
      %v715 = vadd.f32 0.0, %v714
      %v716 = vpop.f32.mrf.mxu0
      %717 = vdwg.mxu0
      %v718 = vadd.f32 %v477, %v637
      %v719 = vadd.f32 %v490, %v650
      %v720 = vadd.f32 %v503, %v663
      %v721 = vadd.f32 %v516, %v676
      %v722 = vadd.f32 %v529, %v689
      %v723 = vadd.f32 %v542, %v702
      %v724 = vadd.f32 %v555, %v715
      %s725 = scalar_lea.vmem %s1, 12
      %v726 = vld [vmem:[%s725] sm:$0xf]
      %727 = vst [vmem:[#allocation1] ss:$4 sm:$0xff] %v272
      %s728 = scalar_lea.vmem [#allocation1], 32
      %729 = vst [vmem:[%s728] ss:$4 sm:$0xff] %v273
      %v730 = vld.sshfl [vmem:[#allocation1] sm:$0xff pattern:$0x73625140]
      %v732 = vld.sshfl [vmem:[#allocation1 + $0x8] sm:$0xff pattern:$0x73625140]
      %v734 = vld.sshfl [vmem:[#allocation1 + $0x10] sm:$0xff pattern:$0x73625140]
      %v736 = vld.sshfl [vmem:[#allocation1 + $0x18] sm:$0xff pattern:$0x73625140]
      %v738 = vld.sshfl [vmem:[#allocation1 + $0x20] sm:$0xff pattern:$0x73625140]
      %v740 = vld.sshfl [vmem:[#allocation1 + $0x28] sm:$0xff pattern:$0x73625140]
      %v742 = vld.sshfl [vmem:[#allocation1 + $0x30] sm:$0xff pattern:$0x73625140]
      %v744 = vld.sshfl [vmem:[#allocation1 + $0x38] sm:$0xff pattern:$0x73625140]
      %746 = vrot.lane.b32.xlu0 %v730, 118
      %v747 = vpop.permute.xlu0 %746
      %748 = vrot.lane.b32.xlu0 %v732, 118
      %v749 = vpop.permute.xlu0 %748
      %750 = vrot.lane.b32.xlu0 %v734, 118
      %v751 = vpop.permute.xlu0 %750
      %752 = vrot.lane.b32.xlu0 %v736, 118
      %v753 = vpop.permute.xlu0 %752
      %754 = vrot.lane.b32.xlu0 %v738, 118
      %v755 = vpop.permute.xlu0 %754
      %756 = vrot.lane.b32.xlu0 %v740, 118
      %v757 = vpop.permute.xlu0 %756
      %758 = vrot.lane.b32.xlu0 %v742, 118
      %v759 = vpop.permute.xlu0 %758
      %760 = vrot.lane.b32.xlu0 %v744, 118
      %v761 = vpop.permute.xlu0 %760
      %vm762 = vcmask 965632
      %v763 = vsel %vm762, %v747, %v749
      %v764 = vsel %vm762, %v749, %v751
      %v765 = vsel %vm762, %v751, %v753
      %v766 = vsel %vm762, %v753, %v755
      %v767 = vsel %vm762, %v755, %v757
      %v768 = vsel %vm762, %v757, %v759
      %v769 = vsel %vm762, %v759, %v761
      %v771 = vsel %vm323, %v726, 0
      %v774 = vsel %vm327, %v763, 0
      %v777 = vsel %vm327, %v764, 0
      %v780 = vsel %vm327, %v765, 0
      %v783 = vsel %vm327, %v766, 0
      %v786 = vsel %vm327, %v767, 0
      %v789 = vsel %vm327, %v768, 0
      %v792 = vsel %vm327, %v769, 0
      %794 = vmatpush.bf16.msra.mxu0 0
      %795 = vmatpush.bf16.msra.mxu0 0
      %796 = vmatpush.bf16.msra.mxu0 0
      %797 = vmatpush.bf16.msra.mxu0 0
      %798 = vmatpush.bf16.msra.mxu0 0
      %799 = vmatpush.bf16.msra.mxu0 0
      %800 = vmatpush.bf16.msra.mxu0 0
      %801 = vmatpush.bf16.msra.mxu0 %v774
      %802 = vmatmul.bf16.gmra.mxu0 %v771
      %v803 = vpop.f32.mrf.mxu0
      %v804 = vadd.f32 0.0, %v803
      %v805 = vpop.f32.mrf.mxu0
      %806 = vdwg.mxu0
      %807 = vmatpush.bf16.msra.mxu0 0
      %808 = vmatpush.bf16.msra.mxu0 0
      %809 = vmatpush.bf16.msra.mxu0 0
      %810 = vmatpush.bf16.msra.mxu0 0
      %811 = vmatpush.bf16.msra.mxu0 0
      %812 = vmatpush.bf16.msra.mxu0 0
      %813 = vmatpush.bf16.msra.mxu0 0
      %814 = vmatpush.bf16.msra.mxu0 %v777
      %815 = vmatmul.bf16.gmra.mxu0 %v771
      %v816 = vpop.f32.mrf.mxu0
      %v817 = vadd.f32 0.0, %v816
      %v818 = vpop.f32.mrf.mxu0
      %819 = vdwg.mxu0
      %820 = vmatpush.bf16.msra.mxu0 0
      %821 = vmatpush.bf16.msra.mxu0 0
      %822 = vmatpush.bf16.msra.mxu0 0
      %823 = vmatpush.bf16.msra.mxu0 0
      %824 = vmatpush.bf16.msra.mxu0 0
      %825 = vmatpush.bf16.msra.mxu0 0
      %826 = vmatpush.bf16.msra.mxu0 0
      %827 = vmatpush.bf16.msra.mxu0 %v780
      %828 = vmatmul.bf16.gmra.mxu0 %v771
      %v829 = vpop.f32.mrf.mxu0
      %v830 = vadd.f32 0.0, %v829
      %v831 = vpop.f32.mrf.mxu0
      %832 = vdwg.mxu0
      %833 = vmatpush.bf16.msra.mxu0 0
      %834 = vmatpush.bf16.msra.mxu0 0
      %835 = vmatpush.bf16.msra.mxu0 0
      %836 = vmatpush.bf16.msra.mxu0 0
      %837 = vmatpush.bf16.msra.mxu0 0
      %838 = vmatpush.bf16.msra.mxu0 0
      %839 = vmatpush.bf16.msra.mxu0 0
      %840 = vmatpush.bf16.msra.mxu0 %v783
      %841 = vmatmul.bf16.gmra.mxu0 %v771
      %v842 = vpop.f32.mrf.mxu0
      %v843 = vadd.f32 0.0, %v842
      %v844 = vpop.f32.mrf.mxu0
      %845 = vdwg.mxu0
      %846 = vmatpush.bf16.msra.mxu0 0
      %847 = vmatpush.bf16.msra.mxu0 0
      %848 = vmatpush.bf16.msra.mxu0 0
      %849 = vmatpush.bf16.msra.mxu0 0
      %850 = vmatpush.bf16.msra.mxu0 0
      %851 = vmatpush.bf16.msra.mxu0 0
      %852 = vmatpush.bf16.msra.mxu0 0
      %853 = vmatpush.bf16.msra.mxu0 %v786
      %854 = vmatmul.bf16.gmra.mxu0 %v771
      %v855 = vpop.f32.mrf.mxu0
      %v856 = vadd.f32 0.0, %v855
      %v857 = vpop.f32.mrf.mxu0
      %858 = vdwg.mxu0
      %859 = vmatpush.bf16.msra.mxu0 0
      %860 = vmatpush.bf16.msra.mxu0 0
      %861 = vmatpush.bf16.msra.mxu0 0
      %862 = vmatpush.bf16.msra.mxu0 0
      %863 = vmatpush.bf16.msra.mxu0 0
      %864 = vmatpush.bf16.msra.mxu0 0
      %865 = vmatpush.bf16.msra.mxu0 0
      %866 = vmatpush.bf16.msra.mxu0 %v789
      %867 = vmatmul.bf16.gmra.mxu0 %v771
      %v868 = vpop.f32.mrf.mxu0
      %v869 = vadd.f32 0.0, %v868
      %v870 = vpop.f32.mrf.mxu0
      %871 = vdwg.mxu0
      %872 = vmatpush.bf16.msra.mxu0 0
      %873 = vmatpush.bf16.msra.mxu0 0
      %874 = vmatpush.bf16.msra.mxu0 0
      %875 = vmatpush.bf16.msra.mxu0 0
      %876 = vmatpush.bf16.msra.mxu0 0
      %877 = vmatpush.bf16.msra.mxu0 0
      %878 = vmatpush.bf16.msra.mxu0 0
      %879 = vmatpush.bf16.msra.mxu0 %v792
      %880 = vmatmul.bf16.gmra.mxu0 %v771
      %v881 = vpop.f32.mrf.mxu0
      %v882 = vadd.f32 0.0, %v881
      %v883 = vpop.f32.mrf.mxu0
      %884 = vdwg.mxu0
      %v885 = vadd.f32 %v718, %v804
      %v886 = vadd.f32 %v719, %v817
      %v887 = vadd.f32 %v720, %v830
      %v888 = vadd.f32 %v721, %v843
      %v889 = vadd.f32 %v722, %v856
      %v890 = vadd.f32 %v723, %v869
      %v891 = vadd.f32 %v724, %v882
      %s892 = scalar_lea.vmem %s1, 16
      %v893 = vld [vmem:[%s892] sm:$0xf]
      %894 = vst [vmem:[#allocation1] ss:$4 sm:$0xff] %v272
      %s895 = scalar_lea.vmem [#allocation1], 32
      %896 = vst [vmem:[%s895] ss:$4 sm:$0xff] %v273
      %v897 = vld.sshfl [vmem:[#allocation1] sm:$0xff pattern:$0x73625140]
      %v899 = vld.sshfl [vmem:[#allocation1 + $0x8] sm:$0xff pattern:$0x73625140]
      %v901 = vld.sshfl [vmem:[#allocation1 + $0x10] sm:$0xff pattern:$0x73625140]
      %v903 = vld.sshfl [vmem:[#allocation1 + $0x18] sm:$0xff pattern:$0x73625140]
      %v905 = vld.sshfl [vmem:[#allocation1 + $0x20] sm:$0xff pattern:$0x73625140]
      %v907 = vld.sshfl [vmem:[#allocation1 + $0x28] sm:$0xff pattern:$0x73625140]
      %v909 = vld.sshfl [vmem:[#allocation1 + $0x30] sm:$0xff pattern:$0x73625140]
      %v911 = vld.sshfl [vmem:[#allocation1 + $0x38] sm:$0xff pattern:$0x73625140]
      %913 = vrot.lane.b32.xlu0 %v897, 117
      %v914 = vpop.permute.xlu0 %913
      %915 = vrot.lane.b32.xlu0 %v899, 117
      %v916 = vpop.permute.xlu0 %915
      %917 = vrot.lane.b32.xlu0 %v901, 117
      %v918 = vpop.permute.xlu0 %917
      %919 = vrot.lane.b32.xlu0 %v903, 117
      %v920 = vpop.permute.xlu0 %919
      %921 = vrot.lane.b32.xlu0 %v905, 117
      %v922 = vpop.permute.xlu0 %921
      %923 = vrot.lane.b32.xlu0 %v907, 117
      %v924 = vpop.permute.xlu0 %923
      %925 = vrot.lane.b32.xlu0 %v909, 117
      %v926 = vpop.permute.xlu0 %925
      %927 = vrot.lane.b32.xlu0 %v911, 117
      %v928 = vpop.permute.xlu0 %927
      %vm929 = vcmask 957440
      %v930 = vsel %vm929, %v914, %v916
      %v931 = vsel %vm929, %v916, %v918
      %v932 = vsel %vm929, %v918, %v920
      %v933 = vsel %vm929, %v920, %v922
      %v934 = vsel %vm929, %v922, %v924
      %v935 = vsel %vm929, %v924, %v926
      %v936 = vsel %vm929, %v926, %v928
      %v938 = vsel %vm323, %v893, 0
      %v941 = vsel %vm327, %v930, 0
      %v944 = vsel %vm327, %v931, 0
      %v947 = vsel %vm327, %v932, 0
      %v950 = vsel %vm327, %v933, 0
      %v953 = vsel %vm327, %v934, 0
      %v956 = vsel %vm327, %v935, 0
      %v959 = vsel %vm327, %v936, 0
      %961 = vmatpush.bf16.msra.mxu0 0
      %962 = vmatpush.bf16.msra.mxu0 0
      %963 = vmatpush.bf16.msra.mxu0 0
      %964 = vmatpush.bf16.msra.mxu0 0
      %965 = vmatpush.bf16.msra.mxu0 0
      %966 = vmatpush.bf16.msra.mxu0 0
      %967 = vmatpush.bf16.msra.mxu0 0
      %968 = vmatpush.bf16.msra.mxu0 %v941
      %969 = vmatmul.bf16.gmra.mxu0 %v938
      %v970 = vpop.f32.mrf.mxu0
      %v971 = vadd.f32 0.0, %v970
      %v972 = vpop.f32.mrf.mxu0
      %973 = vdwg.mxu0
      %974 = vmatpush.bf16.msra.mxu0 0
      %975 = vmatpush.bf16.msra.mxu0 0
      %976 = vmatpush.bf16.msra.mxu0 0
      %977 = vmatpush.bf16.msra.mxu0 0
      %978 = vmatpush.bf16.msra.mxu0 0
      %979 = vmatpush.bf16.msra.mxu0 0
      %980 = vmatpush.bf16.msra.mxu0 0
      %981 = vmatpush.bf16.msra.mxu0 %v944
      %982 = vmatmul.bf16.gmra.mxu0 %v938
      %v983 = vpop.f32.mrf.mxu0
      %v984 = vadd.f32 0.0, %v983
      %v985 = vpop.f32.mrf.mxu0
      %986 = vdwg.mxu0
      %987 = vmatpush.bf16.msra.mxu0 0
      %988 = vmatpush.bf16.msra.mxu0 0
      %989 = vmatpush.bf16.msra.mxu0 0
      %990 = vmatpush.bf16.msra.mxu0 0
      %991 = vmatpush.bf16.msra.mxu0 0
      %992 = vmatpush.bf16.msra.mxu0 0
      %993 = vmatpush.bf16.msra.mxu0 0
      %994 = vmatpush.bf16.msra.mxu0 %v947
      %995 = vmatmul.bf16.gmra.mxu0 %v938
      %v996 = vpop.f32.mrf.mxu0
      %v997 = vadd.f32 0.0, %v996
      %v998 = vpop.f32.mrf.mxu0
      %999 = vdwg.mxu0
      %1000 = vmatpush.bf16.msra.mxu0 0
      %1001 = vmatpush.bf16.msra.mxu0 0
      %1002 = vmatpush.bf16.msra.mxu0 0
      %1003 = vmatpush.bf16.msra.mxu0 0
      %1004 = vmatpush.bf16.msra.mxu0 0
      %1005 = vmatpush.bf16.msra.mxu0 0
      %1006 = vmatpush.bf16.msra.mxu0 0
      %1007 = vmatpush.bf16.msra.mxu0 %v950
      %1008 = vmatmul.bf16.gmra.mxu0 %v938
      %v1009 = vpop.f32.mrf.mxu0
      %v1010 = vadd.f32 0.0, %v1009
      %v1011 = vpop.f32.mrf.mxu0
      %1012 = vdwg.mxu0
      %1013 = vmatpush.bf16.msra.mxu0 0
      %1014 = vmatpush.bf16.msra.mxu0 0
      %1015 = vmatpush.bf16.msra.mxu0 0
      %1016 = vmatpush.bf16.msra.mxu0 0
      %1017 = vmatpush.bf16.msra.mxu0 0
      %1018 = vmatpush.bf16.msra.mxu0 0
      %1019 = vmatpush.bf16.msra.mxu0 0
      %1020 = vmatpush.bf16.msra.mxu0 %v953
      %1021 = vmatmul.bf16.gmra.mxu0 %v938
      %v1022 = vpop.f32.mrf.mxu0
      %v1023 = vadd.f32 0.0, %v1022
      %v1024 = vpop.f32.mrf.mxu0
      %1025 = vdwg.mxu0
      %1026 = vmatpush.bf16.msra.mxu0 0
      %1027 = vmatpush.bf16.msra.mxu0 0
      %1028 = vmatpush.bf16.msra.mxu0 0
      %1029 = vmatpush.bf16.msra.mxu0 0
      %1030 = vmatpush.bf16.msra.mxu0 0
      %1031 = vmatpush.bf16.msra.mxu0 0
      %1032 = vmatpush.bf16.msra.mxu0 0
      %1033 = vmatpush.bf16.msra.mxu0 %v956
      %1034 = vmatmul.bf16.gmra.mxu0 %v938
      %v1035 = vpop.f32.mrf.mxu0
      %v1036 = vadd.f32 0.0, %v1035
      %v1037 = vpop.f32.mrf.mxu0
      %1038 = vdwg.mxu0
      %1039 = vmatpush.bf16.msra.mxu0 0
      %1040 = vmatpush.bf16.msra.mxu0 0
      %1041 = vmatpush.bf16.msra.mxu0 0
      %1042 = vmatpush.bf16.msra.mxu0 0
      %1043 = vmatpush.bf16.msra.mxu0 0
      %1044 = vmatpush.bf16.msra.mxu0 0
      %1045 = vmatpush.bf16.msra.mxu0 0
      %1046 = vmatpush.bf16.msra.mxu0 %v959
      %1047 = vmatmul.bf16.gmra.mxu0 %v938
      %v1048 = vpop.f32.mrf.mxu0
      %v1049 = vadd.f32 0.0, %v1048
      %v1050 = vpop.f32.mrf.mxu0
      %1051 = vdwg.mxu0
      %v1052 = vadd.f32 %v885, %v971
      %v1053 = vadd.f32 %v886, %v984
      %v1054 = vadd.f32 %v887, %v997
      %v1055 = vadd.f32 %v888, %v1010
      %v1056 = vadd.f32 %v889, %v1023
      %v1057 = vadd.f32 %v890, %v1036
      %v1058 = vadd.f32 %v891, %v1049
      %s1059 = scalar_lea.vmem %s1, 20
      %v1060 = vld [vmem:[%s1059] sm:$0xf]
      %1061 = vst [vmem:[#allocation1] ss:$4 sm:$0xff] %v272
      %s1062 = scalar_lea.vmem [#allocation1], 32
      %1063 = vst [vmem:[%s1062] ss:$4 sm:$0xff] %v273
      %v1064 = vld.sshfl [vmem:[#allocation1] sm:$0xff pattern:$0x73625140]
      %v1066 = vld.sshfl [vmem:[#allocation1 + $0x8] sm:$0xff pattern:$0x73625140]
      %v1068 = vld.sshfl [vmem:[#allocation1 + $0x10] sm:$0xff pattern:$0x73625140]
      %v1070 = vld.sshfl [vmem:[#allocation1 + $0x18] sm:$0xff pattern:$0x73625140]
      %v1072 = vld.sshfl [vmem:[#allocation1 + $0x20] sm:$0xff pattern:$0x73625140]
      %v1074 = vld.sshfl [vmem:[#allocation1 + $0x28] sm:$0xff pattern:$0x73625140]
      %v1076 = vld.sshfl [vmem:[#allocation1 + $0x30] sm:$0xff pattern:$0x73625140]
      %v1078 = vld.sshfl [vmem:[#allocation1 + $0x38] sm:$0xff pattern:$0x73625140]
      %1080 = vrot.lane.b32.xlu0 %v1064, 116
      %v1081 = vpop.permute.xlu0 %1080
      %1082 = vrot.lane.b32.xlu0 %v1066, 116
      %v1083 = vpop.permute.xlu0 %1082
      %1084 = vrot.lane.b32.xlu0 %v1068, 116
      %v1085 = vpop.permute.xlu0 %1084
      %1086 = vrot.lane.b32.xlu0 %v1070, 116
      %v1087 = vpop.permute.xlu0 %1086
      %1088 = vrot.lane.b32.xlu0 %v1072, 116
      %v1089 = vpop.permute.xlu0 %1088
      %1090 = vrot.lane.b32.xlu0 %v1074, 116
      %v1091 = vpop.permute.xlu0 %1090
      %1092 = vrot.lane.b32.xlu0 %v1076, 116
      %v1093 = vpop.permute.xlu0 %1092
      %1094 = vrot.lane.b32.xlu0 %v1078, 116
      %v1095 = vpop.permute.xlu0 %1094
      %vm1096 = vcmask 949248
      %v1097 = vsel %vm1096, %v1081, %v1083
      %v1098 = vsel %vm1096, %v1083, %v1085
      %v1099 = vsel %vm1096, %v1085, %v1087
      %v1100 = vsel %vm1096, %v1087, %v1089
      %v1101 = vsel %vm1096, %v1089, %v1091
      %v1102 = vsel %vm1096, %v1091, %v1093
      %v1103 = vsel %vm1096, %v1093, %v1095
      %v1105 = vsel %vm323, %v1060, 0
      %v1108 = vsel %vm327, %v1097, 0
      %v1111 = vsel %vm327, %v1098, 0
      %v1114 = vsel %vm327, %v1099, 0
      %v1117 = vsel %vm327, %v1100, 0
      %v1120 = vsel %vm327, %v1101, 0
      %v1123 = vsel %vm327, %v1102, 0
      %v1126 = vsel %vm327, %v1103, 0
      %1128 = vmatpush.bf16.msra.mxu0 0
      %1129 = vmatpush.bf16.msra.mxu0 0
      %1130 = vmatpush.bf16.msra.mxu0 0
      %1131 = vmatpush.bf16.msra.mxu0 0
      %1132 = vmatpush.bf16.msra.mxu0 0
      %1133 = vmatpush.bf16.msra.mxu0 0
      %1134 = vmatpush.bf16.msra.mxu0 0
      %1135 = vmatpush.bf16.msra.mxu0 %v1108
      %1136 = vmatmul.bf16.gmra.mxu0 %v1105
      %v1137 = vpop.f32.mrf.mxu0
      %v1138 = vadd.f32 0.0, %v1137
      %v1139 = vpop.f32.mrf.mxu0
      %1140 = vdwg.mxu0
      %1141 = vmatpush.bf16.msra.mxu0 0
      %1142 = vmatpush.bf16.msra.mxu0 0
      %1143 = vmatpush.bf16.msra.mxu0 0
      %1144 = vmatpush.bf16.msra.mxu0 0
      %1145 = vmatpush.bf16.msra.mxu0 0
      %1146 = vmatpush.bf16.msra.mxu0 0
      %1147 = vmatpush.bf16.msra.mxu0 0
      %1148 = vmatpush.bf16.msra.mxu0 %v1111
      %1149 = vmatmul.bf16.gmra.mxu0 %v1105
      %v1150 = vpop.f32.mrf.mxu0
      %v1151 = vadd.f32 0.0, %v1150
      %v1152 = vpop.f32.mrf.mxu0
      %1153 = vdwg.mxu0
      %1154 = vmatpush.bf16.msra.mxu0 0
      %1155 = vmatpush.bf16.msra.mxu0 0
      %1156 = vmatpush.bf16.msra.mxu0 0
      %1157 = vmatpush.bf16.msra.mxu0 0
      %1158 = vmatpush.bf16.msra.mxu0 0
      %1159 = vmatpush.bf16.msra.mxu0 0
      %1160 = vmatpush.bf16.msra.mxu0 0
      %1161 = vmatpush.bf16.msra.mxu0 %v1114
      %1162 = vmatmul.bf16.gmra.mxu0 %v1105
      %v1163 = vpop.f32.mrf.mxu0
      %v1164 = vadd.f32 0.0, %v1163
      %v1165 = vpop.f32.mrf.mxu0
      %1166 = vdwg.mxu0
      %1167 = vmatpush.bf16.msra.mxu0 0
      %1168 = vmatpush.bf16.msra.mxu0 0
      %1169 = vmatpush.bf16.msra.mxu0 0
      %1170 = vmatpush.bf16.msra.mxu0 0
      %1171 = vmatpush.bf16.msra.mxu0 0
      %1172 = vmatpush.bf16.msra.mxu0 0
      %1173 = vmatpush.bf16.msra.mxu0 0
      %1174 = vmatpush.bf16.msra.mxu0 %v1117
      %1175 = vmatmul.bf16.gmra.mxu0 %v1105
      %v1176 = vpop.f32.mrf.mxu0
      %v1177 = vadd.f32 0.0, %v1176
      %v1178 = vpop.f32.mrf.mxu0
      %1179 = vdwg.mxu0
      %1180 = vmatpush.bf16.msra.mxu0 0
      %1181 = vmatpush.bf16.msra.mxu0 0
      %1182 = vmatpush.bf16.msra.mxu0 0
      %1183 = vmatpush.bf16.msra.mxu0 0
      %1184 = vmatpush.bf16.msra.mxu0 0
      %1185 = vmatpush.bf16.msra.mxu0 0
      %1186 = vmatpush.bf16.msra.mxu0 0
      %1187 = vmatpush.bf16.msra.mxu0 %v1120
      %1188 = vmatmul.bf16.gmra.mxu0 %v1105
      %v1189 = vpop.f32.mrf.mxu0
      %v1190 = vadd.f32 0.0, %v1189
      %v1191 = vpop.f32.mrf.mxu0
      %1192 = vdwg.mxu0
      %1193 = vmatpush.bf16.msra.mxu0 0
      %1194 = vmatpush.bf16.msra.mxu0 0
      %1195 = vmatpush.bf16.msra.mxu0 0
      %1196 = vmatpush.bf16.msra.mxu0 0
      %1197 = vmatpush.bf16.msra.mxu0 0
      %1198 = vmatpush.bf16.msra.mxu0 0
      %1199 = vmatpush.bf16.msra.mxu0 0
      %1200 = vmatpush.bf16.msra.mxu0 %v1123
      %1201 = vmatmul.bf16.gmra.mxu0 %v1105
      %v1202 = vpop.f32.mrf.mxu0
      %v1203 = vadd.f32 0.0, %v1202
      %v1204 = vpop.f32.mrf.mxu0
      %1205 = vdwg.mxu0
      %1206 = vmatpush.bf16.msra.mxu0 0
      %1207 = vmatpush.bf16.msra.mxu0 0
      %1208 = vmatpush.bf16.msra.mxu0 0
      %1209 = vmatpush.bf16.msra.mxu0 0
      %1210 = vmatpush.bf16.msra.mxu0 0
      %1211 = vmatpush.bf16.msra.mxu0 0
      %1212 = vmatpush.bf16.msra.mxu0 0
      %1213 = vmatpush.bf16.msra.mxu0 %v1126
      %1214 = vmatmul.bf16.gmra.mxu0 %v1105
      %v1215 = vpop.f32.mrf.mxu0
      %v1216 = vadd.f32 0.0, %v1215
      %v1217 = vpop.f32.mrf.mxu0
      %1218 = vdwg.mxu0
      %v1219 = vadd.f32 %v1052, %v1138
      %v1220 = vadd.f32 %v1053, %v1151
      %v1221 = vadd.f32 %v1054, %v1164
      %v1222 = vadd.f32 %v1055, %v1177
      %v1223 = vadd.f32 %v1056, %v1190
      %v1224 = vadd.f32 %v1057, %v1203
      %v1225 = vadd.f32 %v1058, %v1216
      %s1226 = scalar_lea.vmem %s1, 24
      %v1227 = vld [vmem:[%s1226] sm:$0xf]
      %1228 = vst [vmem:[#allocation1] ss:$4 sm:$0xff] %v272
      %s1229 = scalar_lea.vmem [#allocation1], 32
      %1230 = vst [vmem:[%s1229] ss:$4 sm:$0xff] %v273
      %v1231 = vld.sshfl [vmem:[#allocation1] sm:$0xff pattern:$0x73625140]
      %v1233 = vld.sshfl [vmem:[#allocation1 + $0x8] sm:$0xff pattern:$0x73625140]
      %v1235 = vld.sshfl [vmem:[#allocation1 + $0x10] sm:$0xff pattern:$0x73625140]
      %v1237 = vld.sshfl [vmem:[#allocation1 + $0x18] sm:$0xff pattern:$0x73625140]
      %v1239 = vld.sshfl [vmem:[#allocation1 + $0x20] sm:$0xff pattern:$0x73625140]
      %v1241 = vld.sshfl [vmem:[#allocation1 + $0x28] sm:$0xff pattern:$0x73625140]
      %v1243 = vld.sshfl [vmem:[#allocation1 + $0x30] sm:$0xff pattern:$0x73625140]
      %v1245 = vld.sshfl [vmem:[#allocation1 + $0x38] sm:$0xff pattern:$0x73625140]
      %1247 = vrot.lane.b32.xlu0 %v1231, 108
      %v1248 = vpop.permute.xlu0 %1247
      %1249 = vrot.lane.b32.xlu0 %v1233, 108
      %v1250 = vpop.permute.xlu0 %1249
      %1251 = vrot.lane.b32.xlu0 %v1235, 108
      %v1252 = vpop.permute.xlu0 %1251
      %1253 = vrot.lane.b32.xlu0 %v1237, 108
      %v1254 = vpop.permute.xlu0 %1253
      %1255 = vrot.lane.b32.xlu0 %v1239, 108
      %v1256 = vpop.permute.xlu0 %1255
      %1257 = vrot.lane.b32.xlu0 %v1241, 108
      %v1258 = vpop.permute.xlu0 %1257
      %1259 = vrot.lane.b32.xlu0 %v1243, 108
      %v1260 = vpop.permute.xlu0 %1259
      %1261 = vrot.lane.b32.xlu0 %v1245, 108
      %v1262 = vpop.permute.xlu0 %1261
      %vm1263 = vcmask 883712
      %v1264 = vsel %vm1263, %v1248, %v1250
      %v1265 = vsel %vm1263, %v1250, %v1252
      %v1266 = vsel %vm1263, %v1252, %v1254
      %v1267 = vsel %vm1263, %v1254, %v1256
      %v1268 = vsel %vm1263, %v1256, %v1258
      %v1269 = vsel %vm1263, %v1258, %v1260
      %v1270 = vsel %vm1263, %v1260, %v1262
      %v1272 = vsel %vm323, %v1227, 0
      %v1275 = vsel %vm327, %v1264, 0
      %v1278 = vsel %vm327, %v1265, 0
      %v1281 = vsel %vm327, %v1266, 0
      %v1284 = vsel %vm327, %v1267, 0
      %v1287 = vsel %vm327, %v1268, 0
      %v1290 = vsel %vm327, %v1269, 0
      %v1293 = vsel %vm327, %v1270, 0
      %1295 = vmatpush.bf16.msra.mxu0 0
      %1296 = vmatpush.bf16.msra.mxu0 0
      %1297 = vmatpush.bf16.msra.mxu0 0
      %1298 = vmatpush.bf16.msra.mxu0 0
      %1299 = vmatpush.bf16.msra.mxu0 0
      %1300 = vmatpush.bf16.msra.mxu0 0
      %1301 = vmatpush.bf16.msra.mxu0 0
      %1302 = vmatpush.bf16.msra.mxu0 %v1275
      %1303 = vmatmul.bf16.gmra.mxu0 %v1272
      %v1304 = vpop.f32.mrf.mxu0
      %v1305 = vadd.f32 0.0, %v1304
      %v1306 = vpop.f32.mrf.mxu0
      %1307 = vdwg.mxu0
      %1308 = vmatpush.bf16.msra.mxu0 0
      %1309 = vmatpush.bf16.msra.mxu0 0
      %1310 = vmatpush.bf16.msra.mxu0 0
      %1311 = vmatpush.bf16.msra.mxu0 0
      %1312 = vmatpush.bf16.msra.mxu0 0
      %1313 = vmatpush.bf16.msra.mxu0 0
      %1314 = vmatpush.bf16.msra.mxu0 0
      %1315 = vmatpush.bf16.msra.mxu0 %v1278
      %1316 = vmatmul.bf16.gmra.mxu0 %v1272
      %v1317 = vpop.f32.mrf.mxu0
      %v1318 = vadd.f32 0.0, %v1317
      %v1319 = vpop.f32.mrf.mxu0
      %1320 = vdwg.mxu0
      %1321 = vmatpush.bf16.msra.mxu0 0
      %1322 = vmatpush.bf16.msra.mxu0 0
      %1323 = vmatpush.bf16.msra.mxu0 0
      %1324 = vmatpush.bf16.msra.mxu0 0
      %1325 = vmatpush.bf16.msra.mxu0 0
      %1326 = vmatpush.bf16.msra.mxu0 0
      %1327 = vmatpush.bf16.msra.mxu0 0
      %1328 = vmatpush.bf16.msra.mxu0 %v1281
      %1329 = vmatmul.bf16.gmra.mxu0 %v1272
      %v1330 = vpop.f32.mrf.mxu0
      %v1331 = vadd.f32 0.0, %v1330
      %v1332 = vpop.f32.mrf.mxu0
      %1333 = vdwg.mxu0
      %1334 = vmatpush.bf16.msra.mxu0 0
      %1335 = vmatpush.bf16.msra.mxu0 0
      %1336 = vmatpush.bf16.msra.mxu0 0
      %1337 = vmatpush.bf16.msra.mxu0 0
      %1338 = vmatpush.bf16.msra.mxu0 0
      %1339 = vmatpush.bf16.msra.mxu0 0
      %1340 = vmatpush.bf16.msra.mxu0 0
      %1341 = vmatpush.bf16.msra.mxu0 %v1284
      %1342 = vmatmul.bf16.gmra.mxu0 %v1272
      %v1343 = vpop.f32.mrf.mxu0
      %v1344 = vadd.f32 0.0, %v1343
      %v1345 = vpop.f32.mrf.mxu0
      %1346 = vdwg.mxu0
      %1347 = vmatpush.bf16.msra.mxu0 0
      %1348 = vmatpush.bf16.msra.mxu0 0
      %1349 = vmatpush.bf16.msra.mxu0 0
      %1350 = vmatpush.bf16.msra.mxu0 0
      %1351 = vmatpush.bf16.msra.mxu0 0
      %1352 = vmatpush.bf16.msra.mxu0 0
      %1353 = vmatpush.bf16.msra.mxu0 0
      %1354 = vmatpush.bf16.msra.mxu0 %v1287
      %1355 = vmatmul.bf16.gmra.mxu0 %v1272
      %v1356 = vpop.f32.mrf.mxu0
      %v1357 = vadd.f32 0.0, %v1356
      %v1358 = vpop.f32.mrf.mxu0
      %1359 = vdwg.mxu0
      %1360 = vmatpush.bf16.msra.mxu0 0
      %1361 = vmatpush.bf16.msra.mxu0 0
      %1362 = vmatpush.bf16.msra.mxu0 0
      %1363 = vmatpush.bf16.msra.mxu0 0
      %1364 = vmatpush.bf16.msra.mxu0 0
      %1365 = vmatpush.bf16.msra.mxu0 0
      %1366 = vmatpush.bf16.msra.mxu0 0
      %1367 = vmatpush.bf16.msra.mxu0 %v1290
      %1368 = vmatmul.bf16.gmra.mxu0 %v1272
      %v1369 = vpop.f32.mrf.mxu0
      %v1370 = vadd.f32 0.0, %v1369
      %v1371 = vpop.f32.mrf.mxu0
      %1372 = vdwg.mxu0
      %1373 = vmatpush.bf16.msra.mxu0 0
      %1374 = vmatpush.bf16.msra.mxu0 0
      %1375 = vmatpush.bf16.msra.mxu0 0
      %1376 = vmatpush.bf16.msra.mxu0 0
      %1377 = vmatpush.bf16.msra.mxu0 0
      %1378 = vmatpush.bf16.msra.mxu0 0
      %1379 = vmatpush.bf16.msra.mxu0 0
      %1380 = vmatpush.bf16.msra.mxu0 %v1293
      %1381 = vmatmul.bf16.gmra.mxu0 %v1272
      %v1382 = vpop.f32.mrf.mxu0
      %v1383 = vadd.f32 0.0, %v1382
      %v1384 = vpop.f32.mrf.mxu0
      %1385 = vdwg.mxu0
      %v1386 = vadd.f32 %v1219, %v1305
      %v1387 = vadd.f32 %v1220, %v1318
      %v1388 = vadd.f32 %v1221, %v1331
      %v1389 = vadd.f32 %v1222, %v1344
      %v1390 = vadd.f32 %v1223, %v1357
      %v1391 = vadd.f32 %v1224, %v1370
      %v1392 = vadd.f32 %v1225, %v1383
      %s1393 = scalar_lea.vmem %s1, 28
      %v1394 = vld [vmem:[%s1393] sm:$0xf]
      %1395 = vst [vmem:[#allocation1] ss:$4 sm:$0xff] %v272
      %s1396 = scalar_lea.vmem [#allocation1], 32
      %1397 = vst [vmem:[%s1396] ss:$4 sm:$0xff] %v273
      %v1398 = vld.sshfl [vmem:[#allocation1] sm:$0xff pattern:$0x73625140]
      %v1400 = vld.sshfl [vmem:[#allocation1 + $0x8] sm:$0xff pattern:$0x73625140]
      %v1402 = vld.sshfl [vmem:[#allocation1 + $0x10] sm:$0xff pattern:$0x73625140]
      %v1404 = vld.sshfl [vmem:[#allocation1 + $0x18] sm:$0xff pattern:$0x73625140]
      %v1406 = vld.sshfl [vmem:[#allocation1 + $0x20] sm:$0xff pattern:$0x73625140]
      %v1408 = vld.sshfl [vmem:[#allocation1 + $0x28] sm:$0xff pattern:$0x73625140]
      %v1410 = vld.sshfl [vmem:[#allocation1 + $0x30] sm:$0xff pattern:$0x73625140]
      %v1412 = vld.sshfl [vmem:[#allocation1 + $0x38] sm:$0xff pattern:$0x73625140]
      %1414 = vrot.lane.b32.xlu0 %v1398, 107
      %v1415 = vpop.permute.xlu0 %1414
      %1416 = vrot.lane.b32.xlu0 %v1400, 107
      %v1417 = vpop.permute.xlu0 %1416
      %1418 = vrot.lane.b32.xlu0 %v1402, 107
      %v1419 = vpop.permute.xlu0 %1418
      %1420 = vrot.lane.b32.xlu0 %v1404, 107
      %v1421 = vpop.permute.xlu0 %1420
      %1422 = vrot.lane.b32.xlu0 %v1406, 107
      %v1423 = vpop.permute.xlu0 %1422
      %1424 = vrot.lane.b32.xlu0 %v1408, 107
      %v1425 = vpop.permute.xlu0 %1424
      %1426 = vrot.lane.b32.xlu0 %v1410, 107
      %v1427 = vpop.permute.xlu0 %1426
      %1428 = vrot.lane.b32.xlu0 %v1412, 107
      %v1429 = vpop.permute.xlu0 %1428
      %vm1430 = vcmask 875520
      %v1431 = vsel %vm1430, %v1415, %v1417
      %v1432 = vsel %vm1430, %v1417, %v1419
      %v1433 = vsel %vm1430, %v1419, %v1421
      %v1434 = vsel %vm1430, %v1421, %v1423
      %v1435 = vsel %vm1430, %v1423, %v1425
      %v1436 = vsel %vm1430, %v1425, %v1427
      %v1437 = vsel %vm1430, %v1427, %v1429
      %v1439 = vsel %vm323, %v1394, 0
      %v1442 = vsel %vm327, %v1431, 0
      %v1445 = vsel %vm327, %v1432, 0
      %v1448 = vsel %vm327, %v1433, 0
      %v1451 = vsel %vm327, %v1434, 0
      %v1454 = vsel %vm327, %v1435, 0
      %v1457 = vsel %vm327, %v1436, 0
      %v1460 = vsel %vm327, %v1437, 0
      %1462 = vmatpush.bf16.msra.mxu0 0
      %1463 = vmatpush.bf16.msra.mxu0 0
      %1464 = vmatpush.bf16.msra.mxu0 0
      %1465 = vmatpush.bf16.msra.mxu0 0
      %1466 = vmatpush.bf16.msra.mxu0 0
      %1467 = vmatpush.bf16.msra.mxu0 0
      %1468 = vmatpush.bf16.msra.mxu0 0
      %1469 = vmatpush.bf16.msra.mxu0 %v1442
      %1470 = vmatmul.bf16.gmra.mxu0 %v1439
      %v1471 = vpop.f32.mrf.mxu0
      %v1472 = vadd.f32 0.0, %v1471
      %v1473 = vpop.f32.mrf.mxu0
      %1474 = vdwg.mxu0
      %1475 = vmatpush.bf16.msra.mxu0 0
      %1476 = vmatpush.bf16.msra.mxu0 0
      %1477 = vmatpush.bf16.msra.mxu0 0
      %1478 = vmatpush.bf16.msra.mxu0 0
      %1479 = vmatpush.bf16.msra.mxu0 0
      %1480 = vmatpush.bf16.msra.mxu0 0
      %1481 = vmatpush.bf16.msra.mxu0 0
      %1482 = vmatpush.bf16.msra.mxu0 %v1445
      %1483 = vmatmul.bf16.gmra.mxu0 %v1439
      %v1484 = vpop.f32.mrf.mxu0
      %v1485 = vadd.f32 0.0, %v1484
      %v1486 = vpop.f32.mrf.mxu0
      %1487 = vdwg.mxu0
      %1488 = vmatpush.bf16.msra.mxu0 0
      %1489 = vmatpush.bf16.msra.mxu0 0
      %1490 = vmatpush.bf16.msra.mxu0 0
      %1491 = vmatpush.bf16.msra.mxu0 0
      %1492 = vmatpush.bf16.msra.mxu0 0
      %1493 = vmatpush.bf16.msra.mxu0 0
      %1494 = vmatpush.bf16.msra.mxu0 0
      %1495 = vmatpush.bf16.msra.mxu0 %v1448
      %1496 = vmatmul.bf16.gmra.mxu0 %v1439
      %v1497 = vpop.f32.mrf.mxu0
      %v1498 = vadd.f32 0.0, %v1497
      %v1499 = vpop.f32.mrf.mxu0
      %1500 = vdwg.mxu0
      %1501 = vmatpush.bf16.msra.mxu0 0
      %1502 = vmatpush.bf16.msra.mxu0 0
      %1503 = vmatpush.bf16.msra.mxu0 0
      %1504 = vmatpush.bf16.msra.mxu0 0
      %1505 = vmatpush.bf16.msra.mxu0 0
      %1506 = vmatpush.bf16.msra.mxu0 0
      %1507 = vmatpush.bf16.msra.mxu0 0
      %1508 = vmatpush.bf16.msra.mxu0 %v1451
      %1509 = vmatmul.bf16.gmra.mxu0 %v1439
      %v1510 = vpop.f32.mrf.mxu0
      %v1511 = vadd.f32 0.0, %v1510
      %v1512 = vpop.f32.mrf.mxu0
      %1513 = vdwg.mxu0
      %1514 = vmatpush.bf16.msra.mxu0 0
      %1515 = vmatpush.bf16.msra.mxu0 0
      %1516 = vmatpush.bf16.msra.mxu0 0
      %1517 = vmatpush.bf16.msra.mxu0 0
      %1518 = vmatpush.bf16.msra.mxu0 0
      %1519 = vmatpush.bf16.msra.mxu0 0
      %1520 = vmatpush.bf16.msra.mxu0 0
      %1521 = vmatpush.bf16.msra.mxu0 %v1454
      %1522 = vmatmul.bf16.gmra.mxu0 %v1439
      %v1523 = vpop.f32.mrf.mxu0
      %v1524 = vadd.f32 0.0, %v1523
      %v1525 = vpop.f32.mrf.mxu0
      %1526 = vdwg.mxu0
      %1527 = vmatpush.bf16.msra.mxu0 0
      %1528 = vmatpush.bf16.msra.mxu0 0
      %1529 = vmatpush.bf16.msra.mxu0 0
      %1530 = vmatpush.bf16.msra.mxu0 0
      %1531 = vmatpush.bf16.msra.mxu0 0
      %1532 = vmatpush.bf16.msra.mxu0 0
      %1533 = vmatpush.bf16.msra.mxu0 0
      %1534 = vmatpush.bf16.msra.mxu0 %v1457
      %1535 = vmatmul.bf16.gmra.mxu0 %v1439
      %v1536 = vpop.f32.mrf.mxu0
      %v1537 = vadd.f32 0.0, %v1536
      %v1538 = vpop.f32.mrf.mxu0
      %1539 = vdwg.mxu0
      %1540 = vmatpush.bf16.msra.mxu0 0
      %1541 = vmatpush.bf16.msra.mxu0 0
      %1542 = vmatpush.bf16.msra.mxu0 0
      %1543 = vmatpush.bf16.msra.mxu0 0
      %1544 = vmatpush.bf16.msra.mxu0 0
      %1545 = vmatpush.bf16.msra.mxu0 0
      %1546 = vmatpush.bf16.msra.mxu0 0
      %1547 = vmatpush.bf16.msra.mxu0 %v1460
      %1548 = vmatmul.bf16.gmra.mxu0 %v1439
      %v1549 = vpop.f32.mrf.mxu0
      %v1550 = vadd.f32 0.0, %v1549
      %v1551 = vpop.f32.mrf.mxu0
      %1552 = vdwg.mxu0
      %v1553 = vadd.f32 %v1386, %v1472
      %v1554 = vadd.f32 %v1387, %v1485
      %v1555 = vadd.f32 %v1388, %v1498
      %v1556 = vadd.f32 %v1389, %v1511
      %v1557 = vadd.f32 %v1390, %v1524
      %v1558 = vadd.f32 %v1391, %v1537
      %v1559 = vadd.f32 %v1392, %v1550
      %s1560 = scalar_lea.vmem %s1, 32
      %v1561 = vld [vmem:[%s1560] sm:$0xf]
      %1562 = vst [vmem:[#allocation1] ss:$4 sm:$0xff] %v272
      %s1563 = scalar_lea.vmem [#allocation1], 32
      %1564 = vst [vmem:[%s1563] ss:$4 sm:$0xff] %v273
      %v1565 = vld.sshfl [vmem:[#allocation1] sm:$0xff pattern:$0x73625140]
      %v1567 = vld.sshfl [vmem:[#allocation1 + $0x8] sm:$0xff pattern:$0x73625140]
      %v1569 = vld.sshfl [vmem:[#allocation1 + $0x10] sm:$0xff pattern:$0x73625140]
      %v1571 = vld.sshfl [vmem:[#allocation1 + $0x18] sm:$0xff pattern:$0x73625140]
      %v1573 = vld.sshfl [vmem:[#allocation1 + $0x20] sm:$0xff pattern:$0x73625140]
      %v1575 = vld.sshfl [vmem:[#allocation1 + $0x28] sm:$0xff pattern:$0x73625140]
      %v1577 = vld.sshfl [vmem:[#allocation1 + $0x30] sm:$0xff pattern:$0x73625140]
      %v1579 = vld.sshfl [vmem:[#allocation1 + $0x38] sm:$0xff pattern:$0x73625140]
      %1581 = vrot.lane.b32.xlu0 %v1565, 106
      %v1582 = vpop.permute.xlu0 %1581
      %1583 = vrot.lane.b32.xlu0 %v1567, 106
      %v1584 = vpop.permute.xlu0 %1583
      %1585 = vrot.lane.b32.xlu0 %v1569, 106
      %v1586 = vpop.permute.xlu0 %1585
      %1587 = vrot.lane.b32.xlu0 %v1571, 106
      %v1588 = vpop.permute.xlu0 %1587
      %1589 = vrot.lane.b32.xlu0 %v1573, 106
      %v1590 = vpop.permute.xlu0 %1589
      %1591 = vrot.lane.b32.xlu0 %v1575, 106
      %v1592 = vpop.permute.xlu0 %1591
      %1593 = vrot.lane.b32.xlu0 %v1577, 106
      %v1594 = vpop.permute.xlu0 %1593
      %1595 = vrot.lane.b32.xlu0 %v1579, 106
      %v1596 = vpop.permute.xlu0 %1595
      %vm1597 = vcmask 867328
      %v1598 = vsel %vm1597, %v1582, %v1584
      %v1599 = vsel %vm1597, %v1584, %v1586
      %v1600 = vsel %vm1597, %v1586, %v1588
      %v1601 = vsel %vm1597, %v1588, %v1590
      %v1602 = vsel %vm1597, %v1590, %v1592
      %v1603 = vsel %vm1597, %v1592, %v1594
      %v1604 = vsel %vm1597, %v1594, %v1596
      %v1606 = vsel %vm323, %v1561, 0
      %v1609 = vsel %vm327, %v1598, 0
      %v1612 = vsel %vm327, %v1599, 0
      %v1615 = vsel %vm327, %v1600, 0
      %v1618 = vsel %vm327, %v1601, 0
      %v1621 = vsel %vm327, %v1602, 0
      %v1624 = vsel %vm327, %v1603, 0
      %v1627 = vsel %vm327, %v1604, 0
      %1629 = vmatpush.bf16.msra.mxu0 0
      %1630 = vmatpush.bf16.msra.mxu0 0
      %1631 = vmatpush.bf16.msra.mxu0 0
      %1632 = vmatpush.bf16.msra.mxu0 0
      %1633 = vmatpush.bf16.msra.mxu0 0
      %1634 = vmatpush.bf16.msra.mxu0 0
      %1635 = vmatpush.bf16.msra.mxu0 0
      %1636 = vmatpush.bf16.msra.mxu0 %v1609
      %1637 = vmatmul.bf16.gmra.mxu0 %v1606
      %v1638 = vpop.f32.mrf.mxu0
      %v1639 = vadd.f32 0.0, %v1638
      %v1640 = vpop.f32.mrf.mxu0
      %1641 = vdwg.mxu0
      %1642 = vmatpush.bf16.msra.mxu0 0
      %1643 = vmatpush.bf16.msra.mxu0 0
      %1644 = vmatpush.bf16.msra.mxu0 0
      %1645 = vmatpush.bf16.msra.mxu0 0
      %1646 = vmatpush.bf16.msra.mxu0 0
      %1647 = vmatpush.bf16.msra.mxu0 0
      %1648 = vmatpush.bf16.msra.mxu0 0
      %1649 = vmatpush.bf16.msra.mxu0 %v1612
      %1650 = vmatmul.bf16.gmra.mxu0 %v1606
      %v1651 = vpop.f32.mrf.mxu0
      %v1652 = vadd.f32 0.0, %v1651
      %v1653 = vpop.f32.mrf.mxu0
      %1654 = vdwg.mxu0
      %1655 = vmatpush.bf16.msra.mxu0 0
      %1656 = vmatpush.bf16.msra.mxu0 0
      %1657 = vmatpush.bf16.msra.mxu0 0
      %1658 = vmatpush.bf16.msra.mxu0 0
      %1659 = vmatpush.bf16.msra.mxu0 0
      %1660 = vmatpush.bf16.msra.mxu0 0
      %1661 = vmatpush.bf16.msra.mxu0 0
      %1662 = vmatpush.bf16.msra.mxu0 %v1615
      %1663 = vmatmul.bf16.gmra.mxu0 %v1606
      %v1664 = vpop.f32.mrf.mxu0
      %v1665 = vadd.f32 0.0, %v1664
      %v1666 = vpop.f32.mrf.mxu0
      %1667 = vdwg.mxu0
      %1668 = vmatpush.bf16.msra.mxu0 0
      %1669 = vmatpush.bf16.msra.mxu0 0
      %1670 = vmatpush.bf16.msra.mxu0 0
      %1671 = vmatpush.bf16.msra.mxu0 0
      %1672 = vmatpush.bf16.msra.mxu0 0
      %1673 = vmatpush.bf16.msra.mxu0 0
      %1674 = vmatpush.bf16.msra.mxu0 0
      %1675 = vmatpush.bf16.msra.mxu0 %v1618
      %1676 = vmatmul.bf16.gmra.mxu0 %v1606
      %v1677 = vpop.f32.mrf.mxu0
      %v1678 = vadd.f32 0.0, %v1677
      %v1679 = vpop.f32.mrf.mxu0
      %1680 = vdwg.mxu0
      %1681 = vmatpush.bf16.msra.mxu0 0
      %1682 = vmatpush.bf16.msra.mxu0 0
      %1683 = vmatpush.bf16.msra.mxu0 0
      %1684 = vmatpush.bf16.msra.mxu0 0
      %1685 = vmatpush.bf16.msra.mxu0 0
      %1686 = vmatpush.bf16.msra.mxu0 0
      %1687 = vmatpush.bf16.msra.mxu0 0
      %1688 = vmatpush.bf16.msra.mxu0 %v1621
      %1689 = vmatmul.bf16.gmra.mxu0 %v1606
      %v1690 = vpop.f32.mrf.mxu0
      %v1691 = vadd.f32 0.0, %v1690
      %v1692 = vpop.f32.mrf.mxu0
      %1693 = vdwg.mxu0
      %1694 = vmatpush.bf16.msra.mxu0 0
      %1695 = vmatpush.bf16.msra.mxu0 0
      %1696 = vmatpush.bf16.msra.mxu0 0
      %1697 = vmatpush.bf16.msra.mxu0 0
      %1698 = vmatpush.bf16.msra.mxu0 0
      %1699 = vmatpush.bf16.msra.mxu0 0
      %1700 = vmatpush.bf16.msra.mxu0 0
      %1701 = vmatpush.bf16.msra.mxu0 %v1624
      %1702 = vmatmul.bf16.gmra.mxu0 %v1606
      %v1703 = vpop.f32.mrf.mxu0
      %v1704 = vadd.f32 0.0, %v1703
      %v1705 = vpop.f32.mrf.mxu0
      %1706 = vdwg.mxu0
      %1707 = vmatpush.bf16.msra.mxu0 0
      %1708 = vmatpush.bf16.msra.mxu0 0
      %1709 = vmatpush.bf16.msra.mxu0 0
      %1710 = vmatpush.bf16.msra.mxu0 0
      %1711 = vmatpush.bf16.msra.mxu0 0
      %1712 = vmatpush.bf16.msra.mxu0 0
      %1713 = vmatpush.bf16.msra.mxu0 0
      %1714 = vmatpush.bf16.msra.mxu0 %v1627
      %1715 = vmatmul.bf16.gmra.mxu0 %v1606
      %v1716 = vpop.f32.mrf.mxu0
      %v1717 = vadd.f32 0.0, %v1716
      %v1718 = vpop.f32.mrf.mxu0
      %1719 = vdwg.mxu0
      %v1720 = vadd.f32 %v1553, %v1639
      %v1721 = vadd.f32 %v1554, %v1652
      %v1722 = vadd.f32 %v1555, %v1665
      %v1723 = vadd.f32 %v1556, %v1678
      %v1724 = vadd.f32 %v1557, %v1691
      %v1725 = vadd.f32 %v1558, %v1704
      %v1726 = vadd.f32 %v1559, %v1717
      %s1727 = scalar_lea.vmem %s1, 36
      %v1728 = vld [vmem:[%s1727] sm:$0xf]
      %1729 = vst [vmem:[#allocation1] ss:$4 sm:$0xff] %v272
      %s1730 = scalar_lea.vmem [#allocation1], 32
      %1731 = vst [vmem:[%s1730] ss:$4 sm:$0xff] %v273
      %v1732 = vld.sshfl [vmem:[#allocation1] sm:$0xff pattern:$0x73625140]
      %v1734 = vld.sshfl [vmem:[#allocation1 + $0x8] sm:$0xff pattern:$0x73625140]
      %v1736 = vld.sshfl [vmem:[#allocation1 + $0x10] sm:$0xff pattern:$0x73625140]
      %v1738 = vld.sshfl [vmem:[#allocation1 + $0x18] sm:$0xff pattern:$0x73625140]
      %v1740 = vld.sshfl [vmem:[#allocation1 + $0x20] sm:$0xff pattern:$0x73625140]
      %v1742 = vld.sshfl [vmem:[#allocation1 + $0x28] sm:$0xff pattern:$0x73625140]
      %v1744 = vld.sshfl [vmem:[#allocation1 + $0x30] sm:$0xff pattern:$0x73625140]
      %v1746 = vld.sshfl [vmem:[#allocation1 + $0x38] sm:$0xff pattern:$0x73625140]
      %1748 = vrot.lane.b32.xlu0 %v1732, 28
      %v1749 = vpop.permute.xlu0 %1748
      %1750 = vrot.lane.b32.xlu0 %v1734, 28
      %v1751 = vpop.permute.xlu0 %1750
      %1752 = vrot.lane.b32.xlu0 %v1736, 28
      %v1753 = vpop.permute.xlu0 %1752
      %1754 = vrot.lane.b32.xlu0 %v1738, 28
      %v1755 = vpop.permute.xlu0 %1754
      %1756 = vrot.lane.b32.xlu0 %v1740, 28
      %v1757 = vpop.permute.xlu0 %1756
      %1758 = vrot.lane.b32.xlu0 %v1742, 28
      %v1759 = vpop.permute.xlu0 %1758
      %1760 = vrot.lane.b32.xlu0 %v1744, 28
      %v1761 = vpop.permute.xlu0 %1760
      %1762 = vrot.lane.b32.xlu0 %v1746, 28
      %v1763 = vpop.permute.xlu0 %1762
      %vm1764 = vcmask 228352
      %v1765 = vsel %vm1764, %v1749, %v1751
      %v1766 = vsel %vm1764, %v1751, %v1753
      %v1767 = vsel %vm1764, %v1753, %v1755
      %v1768 = vsel %vm1764, %v1755, %v1757
      %v1769 = vsel %vm1764, %v1757, %v1759
      %v1770 = vsel %vm1764, %v1759, %v1761
      %v1771 = vsel %vm1764, %v1761, %v1763
      %v1773 = vsel %vm323, %v1728, 0
      %v1776 = vsel %vm327, %v1765, 0
      %v1779 = vsel %vm327, %v1766, 0
      %v1782 = vsel %vm327, %v1767, 0
      %v1785 = vsel %vm327, %v1768, 0
      %v1788 = vsel %vm327, %v1769, 0
      %v1791 = vsel %vm327, %v1770, 0
      %v1794 = vsel %vm327, %v1771, 0
      %1796 = vmatpush.bf16.msra.mxu0 0
      %1797 = vmatpush.bf16.msra.mxu0 0
      %1798 = vmatpush.bf16.msra.mxu0 0
      %1799 = vmatpush.bf16.msra.mxu0 0
      %1800 = vmatpush.bf16.msra.mxu0 0
      %1801 = vmatpush.bf16.msra.mxu0 0
      %1802 = vmatpush.bf16.msra.mxu0 0
      %1803 = vmatpush.bf16.msra.mxu0 %v1776
      %1804 = vmatmul.bf16.gmra.mxu0 %v1773
      %v1805 = vpop.f32.mrf.mxu0
      %v1806 = vadd.f32 0.0, %v1805
      %v1807 = vpop.f32.mrf.mxu0
      %1808 = vdwg.mxu0
      %1809 = vmatpush.bf16.msra.mxu0 0
      %1810 = vmatpush.bf16.msra.mxu0 0
      %1811 = vmatpush.bf16.msra.mxu0 0
      %1812 = vmatpush.bf16.msra.mxu0 0
      %1813 = vmatpush.bf16.msra.mxu0 0
      %1814 = vmatpush.bf16.msra.mxu0 0
      %1815 = vmatpush.bf16.msra.mxu0 0
      %1816 = vmatpush.bf16.msra.mxu0 %v1779
      %1817 = vmatmul.bf16.gmra.mxu0 %v1773
      %v1818 = vpop.f32.mrf.mxu0
      %v1819 = vadd.f32 0.0, %v1818
      %v1820 = vpop.f32.mrf.mxu0
      %1821 = vdwg.mxu0
      %1822 = vmatpush.bf16.msra.mxu0 0
      %1823 = vmatpush.bf16.msra.mxu0 0
      %1824 = vmatpush.bf16.msra.mxu0 0
      %1825 = vmatpush.bf16.msra.mxu0 0
      %1826 = vmatpush.bf16.msra.mxu0 0
      %1827 = vmatpush.bf16.msra.mxu0 0
      %1828 = vmatpush.bf16.msra.mxu0 0
      %1829 = vmatpush.bf16.msra.mxu0 %v1782
      %1830 = vmatmul.bf16.gmra.mxu0 %v1773
      %v1831 = vpop.f32.mrf.mxu0
      %v1832 = vadd.f32 0.0, %v1831
      %v1833 = vpop.f32.mrf.mxu0
      %1834 = vdwg.mxu0
      %1835 = vmatpush.bf16.msra.mxu0 0
      %1836 = vmatpush.bf16.msra.mxu0 0
      %1837 = vmatpush.bf16.msra.mxu0 0
      %1838 = vmatpush.bf16.msra.mxu0 0
      %1839 = vmatpush.bf16.msra.mxu0 0
      %1840 = vmatpush.bf16.msra.mxu0 0
      %1841 = vmatpush.bf16.msra.mxu0 0
      %1842 = vmatpush.bf16.msra.mxu0 %v1785
      %1843 = vmatmul.bf16.gmra.mxu0 %v1773
      %v1844 = vpop.f32.mrf.mxu0
      %v1845 = vadd.f32 0.0, %v1844
      %v1846 = vpop.f32.mrf.mxu0
      %1847 = vdwg.mxu0
      %1848 = vmatpush.bf16.msra.mxu0 0
      %1849 = vmatpush.bf16.msra.mxu0 0
      %1850 = vmatpush.bf16.msra.mxu0 0
      %1851 = vmatpush.bf16.msra.mxu0 0
      %1852 = vmatpush.bf16.msra.mxu0 0
      %1853 = vmatpush.bf16.msra.mxu0 0
      %1854 = vmatpush.bf16.msra.mxu0 0
      %1855 = vmatpush.bf16.msra.mxu0 %v1788
      %1856 = vmatmul.bf16.gmra.mxu0 %v1773
      %v1857 = vpop.f32.mrf.mxu0
      %v1858 = vadd.f32 0.0, %v1857
      %v1859 = vpop.f32.mrf.mxu0
      %1860 = vdwg.mxu0
      %1861 = vmatpush.bf16.msra.mxu0 0
      %1862 = vmatpush.bf16.msra.mxu0 0
      %1863 = vmatpush.bf16.msra.mxu0 0
      %1864 = vmatpush.bf16.msra.mxu0 0
      %1865 = vmatpush.bf16.msra.mxu0 0
      %1866 = vmatpush.bf16.msra.mxu0 0
      %1867 = vmatpush.bf16.msra.mxu0 0
      %1868 = vmatpush.bf16.msra.mxu0 %v1791
      %1869 = vmatmul.bf16.gmra.mxu0 %v1773
      %v1870 = vpop.f32.mrf.mxu0
      %v1871 = vadd.f32 0.0, %v1870
      %v1872 = vpop.f32.mrf.mxu0
      %1873 = vdwg.mxu0
      %1874 = vmatpush.bf16.msra.mxu0 0
      %1875 = vmatpush.bf16.msra.mxu0 0
      %1876 = vmatpush.bf16.msra.mxu0 0
      %1877 = vmatpush.bf16.msra.mxu0 0
      %1878 = vmatpush.bf16.msra.mxu0 0
      %1879 = vmatpush.bf16.msra.mxu0 0
      %1880 = vmatpush.bf16.msra.mxu0 0
      %1881 = vmatpush.bf16.msra.mxu0 %v1794
      %1882 = vmatmul.bf16.gmra.mxu0 %v1773
      %v1883 = vpop.f32.mrf.mxu0
      %v1884 = vadd.f32 0.0, %v1883
      %v1885 = vpop.f32.mrf.mxu0
      %1886 = vdwg.mxu0
      %v1887 = vadd.f32 %v1720, %v1806
      %v1888 = vadd.f32 %v1721, %v1819
      %v1889 = vadd.f32 %v1722, %v1832
      %v1890 = vadd.f32 %v1723, %v1845
      %v1891 = vadd.f32 %v1724, %v1858
      %v1892 = vadd.f32 %v1725, %v1871
      %v1893 = vadd.f32 %v1726, %v1884
      %s1894 = scalar_lea.vmem %s1, 40
      %v1895 = vld [vmem:[%s1894] sm:$0xf]
      %1896 = vst [vmem:[#allocation1] ss:$4 sm:$0xff] %v272
      %s1897 = scalar_lea.vmem [#allocation1], 32
      %1898 = vst [vmem:[%s1897] ss:$4 sm:$0xff] %v273
      %v1899 = vld.sshfl [vmem:[#allocation1] sm:$0xff pattern:$0x73625140]
      %v1901 = vld.sshfl [vmem:[#allocation1 + $0x8] sm:$0xff pattern:$0x73625140]
      %v1903 = vld.sshfl [vmem:[#allocation1 + $0x10] sm:$0xff pattern:$0x73625140]
      %v1905 = vld.sshfl [vmem:[#allocation1 + $0x18] sm:$0xff pattern:$0x73625140]
      %v1907 = vld.sshfl [vmem:[#allocation1 + $0x20] sm:$0xff pattern:$0x73625140]
      %v1909 = vld.sshfl [vmem:[#allocation1 + $0x28] sm:$0xff pattern:$0x73625140]
      %v1911 = vld.sshfl [vmem:[#allocation1 + $0x30] sm:$0xff pattern:$0x73625140]
      %v1913 = vld.sshfl [vmem:[#allocation1 + $0x38] sm:$0xff pattern:$0x73625140]
      %1915 = vrot.lane.b32.xlu0 %v1899, 27
      %v1916 = vpop.permute.xlu0 %1915
      %1917 = vrot.lane.b32.xlu0 %v1901, 27
      %v1918 = vpop.permute.xlu0 %1917
      %1919 = vrot.lane.b32.xlu0 %v1903, 27
      %v1920 = vpop.permute.xlu0 %1919
      %1921 = vrot.lane.b32.xlu0 %v1905, 27
      %v1922 = vpop.permute.xlu0 %1921
      %1923 = vrot.lane.b32.xlu0 %v1907, 27
      %v1924 = vpop.permute.xlu0 %1923
      %1925 = vrot.lane.b32.xlu0 %v1909, 27
      %v1926 = vpop.permute.xlu0 %1925
      %1927 = vrot.lane.b32.xlu0 %v1911, 27
      %v1928 = vpop.permute.xlu0 %1927
      %1929 = vrot.lane.b32.xlu0 %v1913, 27
      %v1930 = vpop.permute.xlu0 %1929
      %vm1931 = vcmask 220160
      %v1932 = vsel %vm1931, %v1916, %v1918
      %v1933 = vsel %vm1931, %v1918, %v1920
      %v1934 = vsel %vm1931, %v1920, %v1922
      %v1935 = vsel %vm1931, %v1922, %v1924
      %v1936 = vsel %vm1931, %v1924, %v1926
      %v1937 = vsel %vm1931, %v1926, %v1928
      %v1938 = vsel %vm1931, %v1928, %v1930
      %v1940 = vsel %vm323, %v1895, 0
      %v1943 = vsel %vm327, %v1932, 0
      %v1946 = vsel %vm327, %v1933, 0
      %v1949 = vsel %vm327, %v1934, 0
      %v1952 = vsel %vm327, %v1935, 0
      %v1955 = vsel %vm327, %v1936, 0
      %v1958 = vsel %vm327, %v1937, 0
      %v1961 = vsel %vm327, %v1938, 0
      %1963 = vmatpush.bf16.msra.mxu0 0
      %1964 = vmatpush.bf16.msra.mxu0 0
      %1965 = vmatpush.bf16.msra.mxu0 0
      %1966 = vmatpush.bf16.msra.mxu0 0
      %1967 = vmatpush.bf16.msra.mxu0 0
      %1968 = vmatpush.bf16.msra.mxu0 0
      %1969 = vmatpush.bf16.msra.mxu0 0
      %1970 = vmatpush.bf16.msra.mxu0 %v1943
      %1971 = vmatmul.bf16.gmra.mxu0 %v1940
      %v1972 = vpop.f32.mrf.mxu0
      %v1973 = vadd.f32 0.0, %v1972
      %v1974 = vpop.f32.mrf.mxu0
      %1975 = vdwg.mxu0
      %1976 = vmatpush.bf16.msra.mxu0 0
      %1977 = vmatpush.bf16.msra.mxu0 0
      %1978 = vmatpush.bf16.msra.mxu0 0
      %1979 = vmatpush.bf16.msra.mxu0 0
      %1980 = vmatpush.bf16.msra.mxu0 0
      %1981 = vmatpush.bf16.msra.mxu0 0
      %1982 = vmatpush.bf16.msra.mxu0 0
      %1983 = vmatpush.bf16.msra.mxu0 %v1946
      %1984 = vmatmul.bf16.gmra.mxu0 %v1940
      %v1985 = vpop.f32.mrf.mxu0
      %v1986 = vadd.f32 0.0, %v1985
      %v1987 = vpop.f32.mrf.mxu0
      %1988 = vdwg.mxu0
      %1989 = vmatpush.bf16.msra.mxu0 0
      %1990 = vmatpush.bf16.msra.mxu0 0
      %1991 = vmatpush.bf16.msra.mxu0 0
      %1992 = vmatpush.bf16.msra.mxu0 0
      %1993 = vmatpush.bf16.msra.mxu0 0
      %1994 = vmatpush.bf16.msra.mxu0 0
      %1995 = vmatpush.bf16.msra.mxu0 0
      %1996 = vmatpush.bf16.msra.mxu0 %v1949
      %1997 = vmatmul.bf16.gmra.mxu0 %v1940
      %v1998 = vpop.f32.mrf.mxu0
      %v1999 = vadd.f32 0.0, %v1998
      %v2000 = vpop.f32.mrf.mxu0
      %2001 = vdwg.mxu0
      %2002 = vmatpush.bf16.msra.mxu0 0
      %2003 = vmatpush.bf16.msra.mxu0 0
      %2004 = vmatpush.bf16.msra.mxu0 0
      %2005 = vmatpush.bf16.msra.mxu0 0
      %2006 = vmatpush.bf16.msra.mxu0 0
      %2007 = vmatpush.bf16.msra.mxu0 0
      %2008 = vmatpush.bf16.msra.mxu0 0
      %2009 = vmatpush.bf16.msra.mxu0 %v1952
      %2010 = vmatmul.bf16.gmra.mxu0 %v1940
      %v2011 = vpop.f32.mrf.mxu0
      %v2012 = vadd.f32 0.0, %v2011
      %v2013 = vpop.f32.mrf.mxu0
      %2014 = vdwg.mxu0
      %2015 = vmatpush.bf16.msra.mxu0 0
      %2016 = vmatpush.bf16.msra.mxu0 0
      %2017 = vmatpush.bf16.msra.mxu0 0
      %2018 = vmatpush.bf16.msra.mxu0 0
      %2019 = vmatpush.bf16.msra.mxu0 0
      %2020 = vmatpush.bf16.msra.mxu0 0
      %2021 = vmatpush.bf16.msra.mxu0 0
      %2022 = vmatpush.bf16.msra.mxu0 %v1955
      %2023 = vmatmul.bf16.gmra.mxu0 %v1940
      %v2024 = vpop.f32.mrf.mxu0
      %v2025 = vadd.f32 0.0, %v2024
      %v2026 = vpop.f32.mrf.mxu0
      %2027 = vdwg.mxu0
      %2028 = vmatpush.bf16.msra.mxu0 0
      %2029 = vmatpush.bf16.msra.mxu0 0
      %2030 = vmatpush.bf16.msra.mxu0 0
      %2031 = vmatpush.bf16.msra.mxu0 0
      %2032 = vmatpush.bf16.msra.mxu0 0
      %2033 = vmatpush.bf16.msra.mxu0 0
      %2034 = vmatpush.bf16.msra.mxu0 0
      %2035 = vmatpush.bf16.msra.mxu0 %v1958
      %2036 = vmatmul.bf16.gmra.mxu0 %v1940
      %v2037 = vpop.f32.mrf.mxu0
      %v2038 = vadd.f32 0.0, %v2037
      %v2039 = vpop.f32.mrf.mxu0
      %2040 = vdwg.mxu0
      %2041 = vmatpush.bf16.msra.mxu0 0
      %2042 = vmatpush.bf16.msra.mxu0 0
      %2043 = vmatpush.bf16.msra.mxu0 0
      %2044 = vmatpush.bf16.msra.mxu0 0
      %2045 = vmatpush.bf16.msra.mxu0 0
      %2046 = vmatpush.bf16.msra.mxu0 0
      %2047 = vmatpush.bf16.msra.mxu0 0
      %2048 = vmatpush.bf16.msra.mxu0 %v1961
      %2049 = vmatmul.bf16.gmra.mxu0 %v1940
      %v2050 = vpop.f32.mrf.mxu0
      %v2051 = vadd.f32 0.0, %v2050
      %v2052 = vpop.f32.mrf.mxu0
      %2053 = vdwg.mxu0
      %v2054 = vadd.f32 %v1887, %v1973
      %v2055 = vadd.f32 %v1888, %v1986
      %v2056 = vadd.f32 %v1889, %v1999
      %v2057 = vadd.f32 %v1890, %v2012
      %v2058 = vadd.f32 %v1891, %v2025
      %v2059 = vadd.f32 %v1892, %v2038
      %v2060 = vadd.f32 %v1893, %v2051
      %s2061 = scalar_lea.vmem %s1, 44
      %v2062 = vld [vmem:[%s2061] sm:$0xf]
      %2063 = vst [vmem:[#allocation1] ss:$4 sm:$0xff] %v272
      %s2064 = scalar_lea.vmem [#allocation1], 32
      %2065 = vst [vmem:[%s2064] ss:$4 sm:$0xff] %v273
      %v2066 = vld.sshfl [vmem:[#allocation1] sm:$0xff pattern:$0x73625140]
      %v2068 = vld.sshfl [vmem:[#allocation1 + $0x8] sm:$0xff pattern:$0x73625140]
      %v2070 = vld.sshfl [vmem:[#allocation1 + $0x10] sm:$0xff pattern:$0x73625140]
      %v2072 = vld.sshfl [vmem:[#allocation1 + $0x18] sm:$0xff pattern:$0x73625140]
      %v2074 = vld.sshfl [vmem:[#allocation1 + $0x20] sm:$0xff pattern:$0x73625140]
      %v2076 = vld.sshfl [vmem:[#allocation1 + $0x28] sm:$0xff pattern:$0x73625140]
      %v2078 = vld.sshfl [vmem:[#allocation1 + $0x30] sm:$0xff pattern:$0x73625140]
      %v2080 = vld.sshfl [vmem:[#allocation1 + $0x38] sm:$0xff pattern:$0x73625140]
      %2082 = vrot.lane.b32.xlu0 %v2066, 26
      %v2083 = vpop.permute.xlu0 %2082
      %2084 = vrot.lane.b32.xlu0 %v2068, 26
      %v2085 = vpop.permute.xlu0 %2084
      %2086 = vrot.lane.b32.xlu0 %v2070, 26
      %v2087 = vpop.permute.xlu0 %2086
      %2088 = vrot.lane.b32.xlu0 %v2072, 26
      %v2089 = vpop.permute.xlu0 %2088
      %2090 = vrot.lane.b32.xlu0 %v2074, 26
      %v2091 = vpop.permute.xlu0 %2090
      %2092 = vrot.lane.b32.xlu0 %v2076, 26
      %v2093 = vpop.permute.xlu0 %2092
      %2094 = vrot.lane.b32.xlu0 %v2078, 26
      %v2095 = vpop.permute.xlu0 %2094
      %2096 = vrot.lane.b32.xlu0 %v2080, 26
      %v2097 = vpop.permute.xlu0 %2096
      %vm2098 = vcmask 211968
      %v2099 = vsel %vm2098, %v2083, %v2085
      %v2100 = vsel %vm2098, %v2085, %v2087
      %v2101 = vsel %vm2098, %v2087, %v2089
      %v2102 = vsel %vm2098, %v2089, %v2091
      %v2103 = vsel %vm2098, %v2091, %v2093
      %v2104 = vsel %vm2098, %v2093, %v2095
      %v2105 = vsel %vm2098, %v2095, %v2097
      %v2107 = vsel %vm323, %v2062, 0
      %v2110 = vsel %vm327, %v2099, 0
      %v2113 = vsel %vm327, %v2100, 0
      %v2116 = vsel %vm327, %v2101, 0
      %v2119 = vsel %vm327, %v2102, 0
      %v2122 = vsel %vm327, %v2103, 0
      %v2125 = vsel %vm327, %v2104, 0
      %v2128 = vsel %vm327, %v2105, 0
      %2130 = vmatpush.bf16.msra.mxu0 0
      %2131 = vmatpush.bf16.msra.mxu0 0
      %2132 = vmatpush.bf16.msra.mxu0 0
      %2133 = vmatpush.bf16.msra.mxu0 0
      %2134 = vmatpush.bf16.msra.mxu0 0
      %2135 = vmatpush.bf16.msra.mxu0 0
      %2136 = vmatpush.bf16.msra.mxu0 0
      %2137 = vmatpush.bf16.msra.mxu0 %v2110
      %2138 = vmatmul.bf16.gmra.mxu0 %v2107
      %v2139 = vpop.f32.mrf.mxu0
      %v2140 = vadd.f32 0.0, %v2139
      %v2141 = vpop.f32.mrf.mxu0
      %2142 = vdwg.mxu0
      %2143 = vmatpush.bf16.msra.mxu0 0
      %2144 = vmatpush.bf16.msra.mxu0 0
      %2145 = vmatpush.bf16.msra.mxu0 0
      %2146 = vmatpush.bf16.msra.mxu0 0
      %2147 = vmatpush.bf16.msra.mxu0 0
      %2148 = vmatpush.bf16.msra.mxu0 0
      %2149 = vmatpush.bf16.msra.mxu0 0
      %2150 = vmatpush.bf16.msra.mxu0 %v2113
      %2151 = vmatmul.bf16.gmra.mxu0 %v2107
      %v2152 = vpop.f32.mrf.mxu0
      %v2153 = vadd.f32 0.0, %v2152
      %v2154 = vpop.f32.mrf.mxu0
      %2155 = vdwg.mxu0
      %2156 = vmatpush.bf16.msra.mxu0 0
      %2157 = vmatpush.bf16.msra.mxu0 0
      %2158 = vmatpush.bf16.msra.mxu0 0
      %2159 = vmatpush.bf16.msra.mxu0 0
      %2160 = vmatpush.bf16.msra.mxu0 0
      %2161 = vmatpush.bf16.msra.mxu0 0
      %2162 = vmatpush.bf16.msra.mxu0 0
      %2163 = vmatpush.bf16.msra.mxu0 %v2116
      %2164 = vmatmul.bf16.gmra.mxu0 %v2107
      %v2165 = vpop.f32.mrf.mxu0
      %v2166 = vadd.f32 0.0, %v2165
      %v2167 = vpop.f32.mrf.mxu0
      %2168 = vdwg.mxu0
      %2169 = vmatpush.bf16.msra.mxu0 0
      %2170 = vmatpush.bf16.msra.mxu0 0
      %2171 = vmatpush.bf16.msra.mxu0 0
      %2172 = vmatpush.bf16.msra.mxu0 0
      %2173 = vmatpush.bf16.msra.mxu0 0
      %2174 = vmatpush.bf16.msra.mxu0 0
      %2175 = vmatpush.bf16.msra.mxu0 0
      %2176 = vmatpush.bf16.msra.mxu0 %v2119
      %2177 = vmatmul.bf16.gmra.mxu0 %v2107
      %v2178 = vpop.f32.mrf.mxu0
      %v2179 = vadd.f32 0.0, %v2178
      %v2180 = vpop.f32.mrf.mxu0
      %2181 = vdwg.mxu0
      %2182 = vmatpush.bf16.msra.mxu0 0
      %2183 = vmatpush.bf16.msra.mxu0 0
      %2184 = vmatpush.bf16.msra.mxu0 0
      %2185 = vmatpush.bf16.msra.mxu0 0
      %2186 = vmatpush.bf16.msra.mxu0 0
      %2187 = vmatpush.bf16.msra.mxu0 0
      %2188 = vmatpush.bf16.msra.mxu0 0
      %2189 = vmatpush.bf16.msra.mxu0 %v2122
      %2190 = vmatmul.bf16.gmra.mxu0 %v2107
      %v2191 = vpop.f32.mrf.mxu0
      %v2192 = vadd.f32 0.0, %v2191
      %v2193 = vpop.f32.mrf.mxu0
      %2194 = vdwg.mxu0
      %2195 = vmatpush.bf16.msra.mxu0 0
      %2196 = vmatpush.bf16.msra.mxu0 0
      %2197 = vmatpush.bf16.msra.mxu0 0
      %2198 = vmatpush.bf16.msra.mxu0 0
      %2199 = vmatpush.bf16.msra.mxu0 0
      %2200 = vmatpush.bf16.msra.mxu0 0
      %2201 = vmatpush.bf16.msra.mxu0 0
      %2202 = vmatpush.bf16.msra.mxu0 %v2125
      %2203 = vmatmul.bf16.gmra.mxu0 %v2107
      %v2204 = vpop.f32.mrf.mxu0
      %v2205 = vadd.f32 0.0, %v2204
      %v2206 = vpop.f32.mrf.mxu0
      %2207 = vdwg.mxu0
      %2208 = vmatpush.bf16.msra.mxu0 0
      %2209 = vmatpush.bf16.msra.mxu0 0
      %2210 = vmatpush.bf16.msra.mxu0 0
      %2211 = vmatpush.bf16.msra.mxu0 0
      %2212 = vmatpush.bf16.msra.mxu0 0
      %2213 = vmatpush.bf16.msra.mxu0 0
      %2214 = vmatpush.bf16.msra.mxu0 0
      %2215 = vmatpush.bf16.msra.mxu0 %v2128
      %2216 = vmatmul.bf16.gmra.mxu0 %v2107
      %v2217 = vpop.f32.mrf.mxu0
      %v2218 = vadd.f32 0.0, %v2217
      %v2219 = vpop.f32.mrf.mxu0
      %2220 = vdwg.mxu0
      %v2221 = vadd.f32 %v2054, %v2140
      %v2222 = vadd.f32 %v2055, %v2153
      %v2223 = vadd.f32 %v2056, %v2166
      %v2224 = vadd.f32 %v2057, %v2179
      %v2225 = vadd.f32 %v2058, %v2192
      %v2226 = vadd.f32 %v2059, %v2205
      %v2227 = vadd.f32 %v2060, %v2218
      %s2228 = scalar_lea.vmem %s1, 48
      %v2229 = vld [vmem:[%s2228] sm:$0xf]
      %2230 = vst [vmem:[#allocation1] ss:$4 sm:$0xff] %v272
      %s2231 = scalar_lea.vmem [#allocation1], 32
      %2232 = vst [vmem:[%s2231] ss:$4 sm:$0xff] %v273
      %v2233 = vld.sshfl [vmem:[#allocation1] sm:$0xff pattern:$0x73625140]
      %v2235 = vld.sshfl [vmem:[#allocation1 + $0x8] sm:$0xff pattern:$0x73625140]
      %v2237 = vld.sshfl [vmem:[#allocation1 + $0x10] sm:$0xff pattern:$0x73625140]
      %v2239 = vld.sshfl [vmem:[#allocation1 + $0x18] sm:$0xff pattern:$0x73625140]
      %v2241 = vld.sshfl [vmem:[#allocation1 + $0x20] sm:$0xff pattern:$0x73625140]
      %v2243 = vld.sshfl [vmem:[#allocation1 + $0x28] sm:$0xff pattern:$0x73625140]
      %v2245 = vld.sshfl [vmem:[#allocation1 + $0x30] sm:$0xff pattern:$0x73625140]
      %v2247 = vld.sshfl [vmem:[#allocation1 + $0x38] sm:$0xff pattern:$0x73625140]
      %2249 = vrot.lane.b32.xlu0 %v2233, 18
      %v2250 = vpop.permute.xlu0 %2249
      %2251 = vrot.lane.b32.xlu0 %v2235, 18
      %v2252 = vpop.permute.xlu0 %2251
      %2253 = vrot.lane.b32.xlu0 %v2237, 18
      %v2254 = vpop.permute.xlu0 %2253
      %2255 = vrot.lane.b32.xlu0 %v2239, 18
      %v2256 = vpop.permute.xlu0 %2255
      %2257 = vrot.lane.b32.xlu0 %v2241, 18
      %v2258 = vpop.permute.xlu0 %2257
      %2259 = vrot.lane.b32.xlu0 %v2243, 18
      %v2260 = vpop.permute.xlu0 %2259
      %2261 = vrot.lane.b32.xlu0 %v2245, 18
      %v2262 = vpop.permute.xlu0 %2261
      %2263 = vrot.lane.b32.xlu0 %v2247, 18
      %v2264 = vpop.permute.xlu0 %2263
      %vm2265 = vcmask 146432
      %v2266 = vsel %vm2265, %v2250, %v2252
      %v2267 = vsel %vm2265, %v2252, %v2254
      %v2268 = vsel %vm2265, %v2254, %v2256
      %v2269 = vsel %vm2265, %v2256, %v2258
      %v2270 = vsel %vm2265, %v2258, %v2260
      %v2271 = vsel %vm2265, %v2260, %v2262
      %v2272 = vsel %vm2265, %v2262, %v2264
      %v2274 = vsel %vm323, %v2229, 0
      %v2277 = vsel %vm327, %v2266, 0
      %v2280 = vsel %vm327, %v2267, 0
      %v2283 = vsel %vm327, %v2268, 0
      %v2286 = vsel %vm327, %v2269, 0
      %v2289 = vsel %vm327, %v2270, 0
      %v2292 = vsel %vm327, %v2271, 0
      %v2295 = vsel %vm327, %v2272, 0
      %2297 = vmatpush.bf16.msra.mxu0 0
      %2298 = vmatpush.bf16.msra.mxu0 0
      %2299 = vmatpush.bf16.msra.mxu0 0
      %2300 = vmatpush.bf16.msra.mxu0 0
      %2301 = vmatpush.bf16.msra.mxu0 0
      %2302 = vmatpush.bf16.msra.mxu0 0
      %2303 = vmatpush.bf16.msra.mxu0 0
      %2304 = vmatpush.bf16.msra.mxu0 %v2277
      %2305 = vmatmul.bf16.gmra.mxu0 %v2274
      %v2306 = vpop.f32.mrf.mxu0
      %v2307 = vadd.f32 0.0, %v2306
      %v2308 = vpop.f32.mrf.mxu0
      %2309 = vdwg.mxu0
      %2310 = vmatpush.bf16.msra.mxu0 0
      %2311 = vmatpush.bf16.msra.mxu0 0
      %2312 = vmatpush.bf16.msra.mxu0 0
      %2313 = vmatpush.bf16.msra.mxu0 0
      %2314 = vmatpush.bf16.msra.mxu0 0
      %2315 = vmatpush.bf16.msra.mxu0 0
      %2316 = vmatpush.bf16.msra.mxu0 0
      %2317 = vmatpush.bf16.msra.mxu0 %v2280
      %2318 = vmatmul.bf16.gmra.mxu0 %v2274
      %v2319 = vpop.f32.mrf.mxu0
      %v2320 = vadd.f32 0.0, %v2319
      %v2321 = vpop.f32.mrf.mxu0
      %2322 = vdwg.mxu0
      %2323 = vmatpush.bf16.msra.mxu0 0
      %2324 = vmatpush.bf16.msra.mxu0 0
      %2325 = vmatpush.bf16.msra.mxu0 0
      %2326 = vmatpush.bf16.msra.mxu0 0
      %2327 = vmatpush.bf16.msra.mxu0 0
      %2328 = vmatpush.bf16.msra.mxu0 0
      %2329 = vmatpush.bf16.msra.mxu0 0
      %2330 = vmatpush.bf16.msra.mxu0 %v2283
      %2331 = vmatmul.bf16.gmra.mxu0 %v2274
      %v2332 = vpop.f32.mrf.mxu0
      %v2333 = vadd.f32 0.0, %v2332
      %v2334 = vpop.f32.mrf.mxu0
      %2335 = vdwg.mxu0
      %2336 = vmatpush.bf16.msra.mxu0 0
      %2337 = vmatpush.bf16.msra.mxu0 0
      %2338 = vmatpush.bf16.msra.mxu0 0
      %2339 = vmatpush.bf16.msra.mxu0 0
      %2340 = vmatpush.bf16.msra.mxu0 0
      %2341 = vmatpush.bf16.msra.mxu0 0
      %2342 = vmatpush.bf16.msra.mxu0 0
      %2343 = vmatpush.bf16.msra.mxu0 %v2286
      %2344 = vmatmul.bf16.gmra.mxu0 %v2274
      %v2345 = vpop.f32.mrf.mxu0
      %v2346 = vadd.f32 0.0, %v2345
      %v2347 = vpop.f32.mrf.mxu0
      %2348 = vdwg.mxu0
      %2349 = vmatpush.bf16.msra.mxu0 0
      %2350 = vmatpush.bf16.msra.mxu0 0
      %2351 = vmatpush.bf16.msra.mxu0 0
      %2352 = vmatpush.bf16.msra.mxu0 0
      %2353 = vmatpush.bf16.msra.mxu0 0
      %2354 = vmatpush.bf16.msra.mxu0 0
      %2355 = vmatpush.bf16.msra.mxu0 0
      %2356 = vmatpush.bf16.msra.mxu0 %v2289
      %2357 = vmatmul.bf16.gmra.mxu0 %v2274
      %v2358 = vpop.f32.mrf.mxu0
      %v2359 = vadd.f32 0.0, %v2358
      %v2360 = vpop.f32.mrf.mxu0
      %2361 = vdwg.mxu0
      %2362 = vmatpush.bf16.msra.mxu0 0
      %2363 = vmatpush.bf16.msra.mxu0 0
      %2364 = vmatpush.bf16.msra.mxu0 0
      %2365 = vmatpush.bf16.msra.mxu0 0
      %2366 = vmatpush.bf16.msra.mxu0 0
      %2367 = vmatpush.bf16.msra.mxu0 0
      %2368 = vmatpush.bf16.msra.mxu0 0
      %2369 = vmatpush.bf16.msra.mxu0 %v2292
      %2370 = vmatmul.bf16.gmra.mxu0 %v2274
      %v2371 = vpop.f32.mrf.mxu0
      %v2372 = vadd.f32 0.0, %v2371
      %v2373 = vpop.f32.mrf.mxu0
      %2374 = vdwg.mxu0
      %2375 = vmatpush.bf16.msra.mxu0 0
      %2376 = vmatpush.bf16.msra.mxu0 0
      %2377 = vmatpush.bf16.msra.mxu0 0
      %2378 = vmatpush.bf16.msra.mxu0 0
      %2379 = vmatpush.bf16.msra.mxu0 0
      %2380 = vmatpush.bf16.msra.mxu0 0
      %2381 = vmatpush.bf16.msra.mxu0 0
      %2382 = vmatpush.bf16.msra.mxu0 %v2295
      %2383 = vmatmul.bf16.gmra.mxu0 %v2274
      %v2384 = vpop.f32.mrf.mxu0
      %v2385 = vadd.f32 0.0, %v2384
      %v2386 = vpop.f32.mrf.mxu0
      %2387 = vdwg.mxu0
      %v2388 = vadd.f32 %v2221, %v2307
      %v2389 = vadd.f32 %v2222, %v2320
      %v2390 = vadd.f32 %v2223, %v2333
      %v2391 = vadd.f32 %v2224, %v2346
      %v2392 = vadd.f32 %v2225, %v2359
      %v2393 = vadd.f32 %v2226, %v2372
      %v2394 = vadd.f32 %v2227, %v2385
      %s2395 = scalar_lea.vmem %s1, 52
      %v2396 = vld [vmem:[%s2395] sm:$0xf]
      %2397 = vst [vmem:[#allocation1] ss:$4 sm:$0xff] %v272
      %s2398 = scalar_lea.vmem [#allocation1], 32
      %2399 = vst [vmem:[%s2398] ss:$4 sm:$0xff] %v273
      %v2400 = vld.sshfl [vmem:[#allocation1] sm:$0xff pattern:$0x73625140]
      %v2402 = vld.sshfl [vmem:[#allocation1 + $0x8] sm:$0xff pattern:$0x73625140]
      %v2404 = vld.sshfl [vmem:[#allocation1 + $0x10] sm:$0xff pattern:$0x73625140]
      %v2406 = vld.sshfl [vmem:[#allocation1 + $0x18] sm:$0xff pattern:$0x73625140]
      %v2408 = vld.sshfl [vmem:[#allocation1 + $0x20] sm:$0xff pattern:$0x73625140]
      %v2410 = vld.sshfl [vmem:[#allocation1 + $0x28] sm:$0xff pattern:$0x73625140]
      %v2412 = vld.sshfl [vmem:[#allocation1 + $0x30] sm:$0xff pattern:$0x73625140]
      %v2414 = vld.sshfl [vmem:[#allocation1 + $0x38] sm:$0xff pattern:$0x73625140]
      %2416 = vrot.lane.b32.xlu0 %v2400, 17
      %v2417 = vpop.permute.xlu0 %2416
      %2418 = vrot.lane.b32.xlu0 %v2402, 17
      %v2419 = vpop.permute.xlu0 %2418
      %2420 = vrot.lane.b32.xlu0 %v2404, 17
      %v2421 = vpop.permute.xlu0 %2420
      %2422 = vrot.lane.b32.xlu0 %v2406, 17
      %v2423 = vpop.permute.xlu0 %2422
      %2424 = vrot.lane.b32.xlu0 %v2408, 17
      %v2425 = vpop.permute.xlu0 %2424
      %2426 = vrot.lane.b32.xlu0 %v2410, 17
      %v2427 = vpop.permute.xlu0 %2426
      %2428 = vrot.lane.b32.xlu0 %v2412, 17
      %v2429 = vpop.permute.xlu0 %2428
      %2430 = vrot.lane.b32.xlu0 %v2414, 17
      %v2431 = vpop.permute.xlu0 %2430
      %vm2432 = vcmask 138240
      %v2433 = vsel %vm2432, %v2417, %v2419
      %v2434 = vsel %vm2432, %v2419, %v2421
      %v2435 = vsel %vm2432, %v2421, %v2423
      %v2436 = vsel %vm2432, %v2423, %v2425
      %v2437 = vsel %vm2432, %v2425, %v2427
      %v2438 = vsel %vm2432, %v2427, %v2429
      %v2439 = vsel %vm2432, %v2429, %v2431
      %v2441 = vsel %vm323, %v2396, 0
      %v2444 = vsel %vm327, %v2433, 0
      %v2447 = vsel %vm327, %v2434, 0
      %v2450 = vsel %vm327, %v2435, 0
      %v2453 = vsel %vm327, %v2436, 0
      %v2456 = vsel %vm327, %v2437, 0
      %v2459 = vsel %vm327, %v2438, 0
      %v2462 = vsel %vm327, %v2439, 0
      %2464 = vmatpush.bf16.msra.mxu0 0
      %2465 = vmatpush.bf16.msra.mxu0 0
      %2466 = vmatpush.bf16.msra.mxu0 0
      %2467 = vmatpush.bf16.msra.mxu0 0
      %2468 = vmatpush.bf16.msra.mxu0 0
      %2469 = vmatpush.bf16.msra.mxu0 0
      %2470 = vmatpush.bf16.msra.mxu0 0
      %2471 = vmatpush.bf16.msra.mxu0 %v2444
      %2472 = vmatmul.bf16.gmra.mxu0 %v2441
      %v2473 = vpop.f32.mrf.mxu0
      %v2474 = vadd.f32 0.0, %v2473
      %v2475 = vpop.f32.mrf.mxu0
      %2476 = vdwg.mxu0
      %2477 = vmatpush.bf16.msra.mxu0 0
      %2478 = vmatpush.bf16.msra.mxu0 0
      %2479 = vmatpush.bf16.msra.mxu0 0
      %2480 = vmatpush.bf16.msra.mxu0 0
      %2481 = vmatpush.bf16.msra.mxu0 0
      %2482 = vmatpush.bf16.msra.mxu0 0
      %2483 = vmatpush.bf16.msra.mxu0 0
      %2484 = vmatpush.bf16.msra.mxu0 %v2447
      %2485 = vmatmul.bf16.gmra.mxu0 %v2441
      %v2486 = vpop.f32.mrf.mxu0
      %v2487 = vadd.f32 0.0, %v2486
      %v2488 = vpop.f32.mrf.mxu0
      %2489 = vdwg.mxu0
      %2490 = vmatpush.bf16.msra.mxu0 0
      %2491 = vmatpush.bf16.msra.mxu0 0
      %2492 = vmatpush.bf16.msra.mxu0 0
      %2493 = vmatpush.bf16.msra.mxu0 0
      %2494 = vmatpush.bf16.msra.mxu0 0
      %2495 = vmatpush.bf16.msra.mxu0 0
      %2496 = vmatpush.bf16.msra.mxu0 0
      %2497 = vmatpush.bf16.msra.mxu0 %v2450
      %2498 = vmatmul.bf16.gmra.mxu0 %v2441
      %v2499 = vpop.f32.mrf.mxu0
      %v2500 = vadd.f32 0.0, %v2499
      %v2501 = vpop.f32.mrf.mxu0
      %2502 = vdwg.mxu0
      %2503 = vmatpush.bf16.msra.mxu0 0
      %2504 = vmatpush.bf16.msra.mxu0 0
      %2505 = vmatpush.bf16.msra.mxu0 0
      %2506 = vmatpush.bf16.msra.mxu0 0
      %2507 = vmatpush.bf16.msra.mxu0 0
      %2508 = vmatpush.bf16.msra.mxu0 0
      %2509 = vmatpush.bf16.msra.mxu0 0
      %2510 = vmatpush.bf16.msra.mxu0 %v2453
      %2511 = vmatmul.bf16.gmra.mxu0 %v2441
      %v2512 = vpop.f32.mrf.mxu0
      %v2513 = vadd.f32 0.0, %v2512
      %v2514 = vpop.f32.mrf.mxu0
      %2515 = vdwg.mxu0
      %2516 = vmatpush.bf16.msra.mxu0 0
      %2517 = vmatpush.bf16.msra.mxu0 0
      %2518 = vmatpush.bf16.msra.mxu0 0
      %2519 = vmatpush.bf16.msra.mxu0 0
      %2520 = vmatpush.bf16.msra.mxu0 0
      %2521 = vmatpush.bf16.msra.mxu0 0
      %2522 = vmatpush.bf16.msra.mxu0 0
      %2523 = vmatpush.bf16.msra.mxu0 %v2456
      %2524 = vmatmul.bf16.gmra.mxu0 %v2441
      %v2525 = vpop.f32.mrf.mxu0
      %v2526 = vadd.f32 0.0, %v2525
      %v2527 = vpop.f32.mrf.mxu0
      %2528 = vdwg.mxu0
      %2529 = vmatpush.bf16.msra.mxu0 0
      %2530 = vmatpush.bf16.msra.mxu0 0
      %2531 = vmatpush.bf16.msra.mxu0 0
      %2532 = vmatpush.bf16.msra.mxu0 0
      %2533 = vmatpush.bf16.msra.mxu0 0
      %2534 = vmatpush.bf16.msra.mxu0 0
      %2535 = vmatpush.bf16.msra.mxu0 0
      %2536 = vmatpush.bf16.msra.mxu0 %v2459
      %2537 = vmatmul.bf16.gmra.mxu0 %v2441
      %v2538 = vpop.f32.mrf.mxu0
      %v2539 = vadd.f32 0.0, %v2538
      %v2540 = vpop.f32.mrf.mxu0
      %2541 = vdwg.mxu0
      %2542 = vmatpush.bf16.msra.mxu0 0
      %2543 = vmatpush.bf16.msra.mxu0 0
      %2544 = vmatpush.bf16.msra.mxu0 0
      %2545 = vmatpush.bf16.msra.mxu0 0
      %2546 = vmatpush.bf16.msra.mxu0 0
      %2547 = vmatpush.bf16.msra.mxu0 0
      %2548 = vmatpush.bf16.msra.mxu0 0
      %2549 = vmatpush.bf16.msra.mxu0 %v2462
      %2550 = vmatmul.bf16.gmra.mxu0 %v2441
      %v2551 = vpop.f32.mrf.mxu0
      %v2552 = vadd.f32 0.0, %v2551
      %v2553 = vpop.f32.mrf.mxu0
      %2554 = vdwg.mxu0
      %v2555 = vadd.f32 %v2388, %v2474
      %v2556 = vadd.f32 %v2389, %v2487
      %v2557 = vadd.f32 %v2390, %v2500
      %v2558 = vadd.f32 %v2391, %v2513
      %v2559 = vadd.f32 %v2392, %v2526
      %v2560 = vadd.f32 %v2393, %v2539
      %v2561 = vadd.f32 %v2394, %v2552
      %s2562 = scalar_lea.vmem %s1, 56
      %v2563 = vld [vmem:[%s2562] sm:$0xf]
      %2564 = vst [vmem:[#allocation1] ss:$4 sm:$0xff] %v272
      %s2565 = scalar_lea.vmem [#allocation1], 32
      %2566 = vst [vmem:[%s2565] ss:$4 sm:$0xff] %v273
      %v2567 = vld.sshfl [vmem:[#allocation1] sm:$0xff pattern:$0x73625140]
      %v2569 = vld.sshfl [vmem:[#allocation1 + $0x8] sm:$0xff pattern:$0x73625140]
      %v2571 = vld.sshfl [vmem:[#allocation1 + $0x10] sm:$0xff pattern:$0x73625140]
      %v2573 = vld.sshfl [vmem:[#allocation1 + $0x18] sm:$0xff pattern:$0x73625140]
      %v2575 = vld.sshfl [vmem:[#allocation1 + $0x20] sm:$0xff pattern:$0x73625140]
      %v2577 = vld.sshfl [vmem:[#allocation1 + $0x28] sm:$0xff pattern:$0x73625140]
      %v2579 = vld.sshfl [vmem:[#allocation1 + $0x30] sm:$0xff pattern:$0x73625140]
      %v2581 = vld.sshfl [vmem:[#allocation1 + $0x38] sm:$0xff pattern:$0x73625140]
      %2583 = vrot.lane.b32.xlu0 %v2567, 16
      %v2584 = vpop.permute.xlu0 %2583
      %2585 = vrot.lane.b32.xlu0 %v2569, 16
      %v2586 = vpop.permute.xlu0 %2585
      %2587 = vrot.lane.b32.xlu0 %v2571, 16
      %v2588 = vpop.permute.xlu0 %2587
      %2589 = vrot.lane.b32.xlu0 %v2573, 16
      %v2590 = vpop.permute.xlu0 %2589
      %2591 = vrot.lane.b32.xlu0 %v2575, 16
      %v2592 = vpop.permute.xlu0 %2591
      %2593 = vrot.lane.b32.xlu0 %v2577, 16
      %v2594 = vpop.permute.xlu0 %2593
      %2595 = vrot.lane.b32.xlu0 %v2579, 16
      %v2596 = vpop.permute.xlu0 %2595
      %2597 = vrot.lane.b32.xlu0 %v2581, 16
      %v2598 = vpop.permute.xlu0 %2597
      %vm2599 = vcmask 130048
      %v2600 = vsel %vm2599, %v2584, %v2586
      %v2601 = vsel %vm2599, %v2586, %v2588
      %v2602 = vsel %vm2599, %v2588, %v2590
      %v2603 = vsel %vm2599, %v2590, %v2592
      %v2604 = vsel %vm2599, %v2592, %v2594
      %v2605 = vsel %vm2599, %v2594, %v2596
      %v2606 = vsel %vm2599, %v2596, %v2598
      %v2608 = vsel %vm323, %v2563, 0
      %v2611 = vsel %vm327, %v2600, 0
      %v2614 = vsel %vm327, %v2601, 0
      %v2617 = vsel %vm327, %v2602, 0
      %v2620 = vsel %vm327, %v2603, 0
      %v2623 = vsel %vm327, %v2604, 0
      %v2626 = vsel %vm327, %v2605, 0
      %v2629 = vsel %vm327, %v2606, 0
      %2631 = vmatpush.bf16.msra.mxu0 0
      %2632 = vmatpush.bf16.msra.mxu0 0
      %2633 = vmatpush.bf16.msra.mxu0 0
      %2634 = vmatpush.bf16.msra.mxu0 0
      %2635 = vmatpush.bf16.msra.mxu0 0
      %2636 = vmatpush.bf16.msra.mxu0 0
      %2637 = vmatpush.bf16.msra.mxu0 0
      %2638 = vmatpush.bf16.msra.mxu0 %v2611
      %2639 = vmatmul.bf16.gmra.mxu0 %v2608
      %v2640 = vpop.f32.mrf.mxu0
      %v2641 = vadd.f32 0.0, %v2640
      %v2642 = vpop.f32.mrf.mxu0
      %2643 = vdwg.mxu0
      %2644 = vmatpush.bf16.msra.mxu0 0
      %2645 = vmatpush.bf16.msra.mxu0 0
      %2646 = vmatpush.bf16.msra.mxu0 0
      %2647 = vmatpush.bf16.msra.mxu0 0
      %2648 = vmatpush.bf16.msra.mxu0 0
      %2649 = vmatpush.bf16.msra.mxu0 0
      %2650 = vmatpush.bf16.msra.mxu0 0
      %2651 = vmatpush.bf16.msra.mxu0 %v2614
      %2652 = vmatmul.bf16.gmra.mxu0 %v2608
      %v2653 = vpop.f32.mrf.mxu0
      %v2654 = vadd.f32 0.0, %v2653
      %v2655 = vpop.f32.mrf.mxu0
      %2656 = vdwg.mxu0
      %2657 = vmatpush.bf16.msra.mxu0 0
      %2658 = vmatpush.bf16.msra.mxu0 0
      %2659 = vmatpush.bf16.msra.mxu0 0
      %2660 = vmatpush.bf16.msra.mxu0 0
      %2661 = vmatpush.bf16.msra.mxu0 0
      %2662 = vmatpush.bf16.msra.mxu0 0
      %2663 = vmatpush.bf16.msra.mxu0 0
      %2664 = vmatpush.bf16.msra.mxu0 %v2617
      %2665 = vmatmul.bf16.gmra.mxu0 %v2608
      %v2666 = vpop.f32.mrf.mxu0
      %v2667 = vadd.f32 0.0, %v2666
      %v2668 = vpop.f32.mrf.mxu0
      %2669 = vdwg.mxu0
      %2670 = vmatpush.bf16.msra.mxu0 0
      %2671 = vmatpush.bf16.msra.mxu0 0
      %2672 = vmatpush.bf16.msra.mxu0 0
      %2673 = vmatpush.bf16.msra.mxu0 0
      %2674 = vmatpush.bf16.msra.mxu0 0
      %2675 = vmatpush.bf16.msra.mxu0 0
      %2676 = vmatpush.bf16.msra.mxu0 0
      %2677 = vmatpush.bf16.msra.mxu0 %v2620
      %2678 = vmatmul.bf16.gmra.mxu0 %v2608
      %v2679 = vpop.f32.mrf.mxu0
      %v2680 = vadd.f32 0.0, %v2679
      %v2681 = vpop.f32.mrf.mxu0
      %2682 = vdwg.mxu0
      %2683 = vmatpush.bf16.msra.mxu0 0
      %2684 = vmatpush.bf16.msra.mxu0 0
      %2685 = vmatpush.bf16.msra.mxu0 0
      %2686 = vmatpush.bf16.msra.mxu0 0
      %2687 = vmatpush.bf16.msra.mxu0 0
      %2688 = vmatpush.bf16.msra.mxu0 0
      %2689 = vmatpush.bf16.msra.mxu0 0
      %2690 = vmatpush.bf16.msra.mxu0 %v2623
      %2691 = vmatmul.bf16.gmra.mxu0 %v2608
      %v2692 = vpop.f32.mrf.mxu0
      %v2693 = vadd.f32 0.0, %v2692
      %v2694 = vpop.f32.mrf.mxu0
      %2695 = vdwg.mxu0
      %2696 = vmatpush.bf16.msra.mxu0 0
      %2697 = vmatpush.bf16.msra.mxu0 0
      %2698 = vmatpush.bf16.msra.mxu0 0
      %2699 = vmatpush.bf16.msra.mxu0 0
      %2700 = vmatpush.bf16.msra.mxu0 0
      %2701 = vmatpush.bf16.msra.mxu0 0
      %2702 = vmatpush.bf16.msra.mxu0 0
      %2703 = vmatpush.bf16.msra.mxu0 %v2626
      %2704 = vmatmul.bf16.gmra.mxu0 %v2608
      %v2705 = vpop.f32.mrf.mxu0
      %v2706 = vadd.f32 0.0, %v2705
      %v2707 = vpop.f32.mrf.mxu0
      %2708 = vdwg.mxu0
      %2709 = vmatpush.bf16.msra.mxu0 0
      %2710 = vmatpush.bf16.msra.mxu0 0
      %2711 = vmatpush.bf16.msra.mxu0 0
      %2712 = vmatpush.bf16.msra.mxu0 0
      %2713 = vmatpush.bf16.msra.mxu0 0
      %2714 = vmatpush.bf16.msra.mxu0 0
      %2715 = vmatpush.bf16.msra.mxu0 0
      %2716 = vmatpush.bf16.msra.mxu0 %v2629
      %2717 = vmatmul.bf16.gmra.mxu0 %v2608
      %v2718 = vpop.f32.mrf.mxu0
      %v2719 = vadd.f32 0.0, %v2718
      %v2720 = vpop.f32.mrf.mxu0
      %2721 = vdwg.mxu0
      %v2722 = vadd.f32 %v2555, %v2641
      %v2723 = vadd.f32 %v2556, %v2654
      %v2724 = vadd.f32 %v2557, %v2667
      %v2725 = vadd.f32 %v2558, %v2680
      %v2726 = vadd.f32 %v2559, %v2693
      %v2727 = vadd.f32 %v2560, %v2706
      %v2728 = vadd.f32 %v2561, %v2719
      %s2729 = scalar_lea.vmem %s1, 60
      %v2730 = vld [vmem:[%s2729] sm:$0xf]
      %2731 = vst [vmem:[#allocation1] ss:$4 sm:$0xff] %v272
      %s2732 = scalar_lea.vmem [#allocation1], 32
      %2733 = vst [vmem:[%s2732] ss:$4 sm:$0xff] %v273
      %v2734 = vld.sshfl [vmem:[#allocation1] sm:$0xff pattern:$0x73625140]
      %v2736 = vld.sshfl [vmem:[#allocation1 + $0x8] sm:$0xff pattern:$0x73625140]
      %v2738 = vld.sshfl [vmem:[#allocation1 + $0x10] sm:$0xff pattern:$0x73625140]
      %v2740 = vld.sshfl [vmem:[#allocation1 + $0x18] sm:$0xff pattern:$0x73625140]
      %v2742 = vld.sshfl [vmem:[#allocation1 + $0x20] sm:$0xff pattern:$0x73625140]
      %v2744 = vld.sshfl [vmem:[#allocation1 + $0x28] sm:$0xff pattern:$0x73625140]
      %v2746 = vld.sshfl [vmem:[#allocation1 + $0x30] sm:$0xff pattern:$0x73625140]
      %v2748 = vld.sshfl [vmem:[#allocation1 + $0x38] sm:$0xff pattern:$0x73625140]
      %2750 = vrot.lane.b32.xlu0 %v2734, 8
      %v2751 = vpop.permute.xlu0 %2750
      %2752 = vrot.lane.b32.xlu0 %v2736, 8
      %v2753 = vpop.permute.xlu0 %2752
      %2754 = vrot.lane.b32.xlu0 %v2738, 8
      %v2755 = vpop.permute.xlu0 %2754
      %2756 = vrot.lane.b32.xlu0 %v2740, 8
      %v2757 = vpop.permute.xlu0 %2756
      %2758 = vrot.lane.b32.xlu0 %v2742, 8
      %v2759 = vpop.permute.xlu0 %2758
      %2760 = vrot.lane.b32.xlu0 %v2744, 8
      %v2761 = vpop.permute.xlu0 %2760
      %2762 = vrot.lane.b32.xlu0 %v2746, 8
      %v2763 = vpop.permute.xlu0 %2762
      %2764 = vrot.lane.b32.xlu0 %v2748, 8
      %v2765 = vpop.permute.xlu0 %2764
      %vm2766 = vcmask 64512
      %v2767 = vsel %vm2766, %v2751, %v2753
      %v2768 = vsel %vm2766, %v2753, %v2755
      %v2769 = vsel %vm2766, %v2755, %v2757
      %v2770 = vsel %vm2766, %v2757, %v2759
      %v2771 = vsel %vm2766, %v2759, %v2761
      %v2772 = vsel %vm2766, %v2761, %v2763
      %v2773 = vsel %vm2766, %v2763, %v2765
      %v2775 = vsel %vm323, %v2730, 0
      %v2778 = vsel %vm327, %v2767, 0
      %v2781 = vsel %vm327, %v2768, 0
      %v2784 = vsel %vm327, %v2769, 0
      %v2787 = vsel %vm327, %v2770, 0
      %v2790 = vsel %vm327, %v2771, 0
      %v2793 = vsel %vm327, %v2772, 0
      %v2796 = vsel %vm327, %v2773, 0
      %2798 = vmatpush.bf16.msra.mxu0 0
      %2799 = vmatpush.bf16.msra.mxu0 0
      %2800 = vmatpush.bf16.msra.mxu0 0
      %2801 = vmatpush.bf16.msra.mxu0 0
      %2802 = vmatpush.bf16.msra.mxu0 0
      %2803 = vmatpush.bf16.msra.mxu0 0
      %2804 = vmatpush.bf16.msra.mxu0 0
      %2805 = vmatpush.bf16.msra.mxu0 %v2778
      %2806 = vmatmul.bf16.gmra.mxu0 %v2775
      %v2807 = vpop.f32.mrf.mxu0
      %v2808 = vadd.f32 0.0, %v2807
      %v2809 = vpop.f32.mrf.mxu0
      %2810 = vdwg.mxu0
      %2811 = vmatpush.bf16.msra.mxu0 0
      %2812 = vmatpush.bf16.msra.mxu0 0
      %2813 = vmatpush.bf16.msra.mxu0 0
      %2814 = vmatpush.bf16.msra.mxu0 0
      %2815 = vmatpush.bf16.msra.mxu0 0
      %2816 = vmatpush.bf16.msra.mxu0 0
      %2817 = vmatpush.bf16.msra.mxu0 0
      %2818 = vmatpush.bf16.msra.mxu0 %v2781
      %2819 = vmatmul.bf16.gmra.mxu0 %v2775
      %v2820 = vpop.f32.mrf.mxu0
      %v2821 = vadd.f32 0.0, %v2820
      %v2822 = vpop.f32.mrf.mxu0
      %2823 = vdwg.mxu0
      %2824 = vmatpush.bf16.msra.mxu0 0
      %2825 = vmatpush.bf16.msra.mxu0 0
      %2826 = vmatpush.bf16.msra.mxu0 0
      %2827 = vmatpush.bf16.msra.mxu0 0
      %2828 = vmatpush.bf16.msra.mxu0 0
      %2829 = vmatpush.bf16.msra.mxu0 0
      %2830 = vmatpush.bf16.msra.mxu0 0
      %2831 = vmatpush.bf16.msra.mxu0 %v2784
      %2832 = vmatmul.bf16.gmra.mxu0 %v2775
      %v2833 = vpop.f32.mrf.mxu0
      %v2834 = vadd.f32 0.0, %v2833
      %v2835 = vpop.f32.mrf.mxu0
      %2836 = vdwg.mxu0
      %2837 = vmatpush.bf16.msra.mxu0 0
      %2838 = vmatpush.bf16.msra.mxu0 0
      %2839 = vmatpush.bf16.msra.mxu0 0
      %2840 = vmatpush.bf16.msra.mxu0 0
      %2841 = vmatpush.bf16.msra.mxu0 0
      %2842 = vmatpush.bf16.msra.mxu0 0
      %2843 = vmatpush.bf16.msra.mxu0 0
      %2844 = vmatpush.bf16.msra.mxu0 %v2787
      %2845 = vmatmul.bf16.gmra.mxu0 %v2775
      %v2846 = vpop.f32.mrf.mxu0
      %v2847 = vadd.f32 0.0, %v2846
      %v2848 = vpop.f32.mrf.mxu0
      %2849 = vdwg.mxu0
      %2850 = vmatpush.bf16.msra.mxu0 0
      %2851 = vmatpush.bf16.msra.mxu0 0
      %2852 = vmatpush.bf16.msra.mxu0 0
      %2853 = vmatpush.bf16.msra.mxu0 0
      %2854 = vmatpush.bf16.msra.mxu0 0
      %2855 = vmatpush.bf16.msra.mxu0 0
      %2856 = vmatpush.bf16.msra.mxu0 0
      %2857 = vmatpush.bf16.msra.mxu0 %v2790
      %2858 = vmatmul.bf16.gmra.mxu0 %v2775
      %v2859 = vpop.f32.mrf.mxu0
      %v2860 = vadd.f32 0.0, %v2859
      %v2861 = vpop.f32.mrf.mxu0
      %2862 = vdwg.mxu0
      %2863 = vmatpush.bf16.msra.mxu0 0
      %2864 = vmatpush.bf16.msra.mxu0 0
      %2865 = vmatpush.bf16.msra.mxu0 0
      %2866 = vmatpush.bf16.msra.mxu0 0
      %2867 = vmatpush.bf16.msra.mxu0 0
      %2868 = vmatpush.bf16.msra.mxu0 0
      %2869 = vmatpush.bf16.msra.mxu0 0
      %2870 = vmatpush.bf16.msra.mxu0 %v2793
      %2871 = vmatmul.bf16.gmra.mxu0 %v2775
      %v2872 = vpop.f32.mrf.mxu0
      %v2873 = vadd.f32 0.0, %v2872
      %v2874 = vpop.f32.mrf.mxu0
      %2875 = vdwg.mxu0
      %2876 = vmatpush.bf16.msra.mxu0 0
      %2877 = vmatpush.bf16.msra.mxu0 0
      %2878 = vmatpush.bf16.msra.mxu0 0
      %2879 = vmatpush.bf16.msra.mxu0 0
      %2880 = vmatpush.bf16.msra.mxu0 0
      %2881 = vmatpush.bf16.msra.mxu0 0
      %2882 = vmatpush.bf16.msra.mxu0 0
      %2883 = vmatpush.bf16.msra.mxu0 %v2796
      %2884 = vmatmul.bf16.gmra.mxu0 %v2775
      %v2885 = vpop.f32.mrf.mxu0
      %v2886 = vadd.f32 0.0, %v2885
      %v2887 = vpop.f32.mrf.mxu0
      %2888 = vdwg.mxu0
      %v2889 = vadd.f32 %v2722, %v2808
      %v2890 = vadd.f32 %v2723, %v2821
      %v2891 = vadd.f32 %v2724, %v2834
      %v2892 = vadd.f32 %v2725, %v2847
      %v2893 = vadd.f32 %v2726, %v2860
      %v2894 = vadd.f32 %v2727, %v2873
      %v2895 = vadd.f32 %v2728, %v2886
      %s2896 = scalar_lea.vmem %s1, 64
      %v2897 = vld [vmem:[%s2896] sm:$0xf]
      %2898 = vst [vmem:[#allocation1] ss:$4 sm:$0xff] %v272
      %s2899 = scalar_lea.vmem [#allocation1], 32
      %2900 = vst [vmem:[%s2899] ss:$4 sm:$0xff] %v273
      %v2901 = vld.sshfl [vmem:[#allocation1] sm:$0xff pattern:$0x73625140]
      %v2903 = vld.sshfl [vmem:[#allocation1 + $0x8] sm:$0xff pattern:$0x73625140]
      %v2905 = vld.sshfl [vmem:[#allocation1 + $0x10] sm:$0xff pattern:$0x73625140]
      %v2907 = vld.sshfl [vmem:[#allocation1 + $0x18] sm:$0xff pattern:$0x73625140]
      %v2909 = vld.sshfl [vmem:[#allocation1 + $0x20] sm:$0xff pattern:$0x73625140]
      %v2911 = vld.sshfl [vmem:[#allocation1 + $0x28] sm:$0xff pattern:$0x73625140]
      %v2913 = vld.sshfl [vmem:[#allocation1 + $0x30] sm:$0xff pattern:$0x73625140]
      %v2915 = vld.sshfl [vmem:[#allocation1 + $0x38] sm:$0xff pattern:$0x73625140]
      %2917 = vrot.lane.b32.xlu0 %v2901, 7
      %v2918 = vpop.permute.xlu0 %2917
      %2919 = vrot.lane.b32.xlu0 %v2903, 7
      %v2920 = vpop.permute.xlu0 %2919
      %2921 = vrot.lane.b32.xlu0 %v2905, 7
      %v2922 = vpop.permute.xlu0 %2921
      %2923 = vrot.lane.b32.xlu0 %v2907, 7
      %v2924 = vpop.permute.xlu0 %2923
      %2925 = vrot.lane.b32.xlu0 %v2909, 7
      %v2926 = vpop.permute.xlu0 %2925
      %2927 = vrot.lane.b32.xlu0 %v2911, 7
      %v2928 = vpop.permute.xlu0 %2927
      %2929 = vrot.lane.b32.xlu0 %v2913, 7
      %v2930 = vpop.permute.xlu0 %2929
      %2931 = vrot.lane.b32.xlu0 %v2915, 7
      %v2932 = vpop.permute.xlu0 %2931
      %vm2933 = vcmask 56320
      %v2934 = vsel %vm2933, %v2918, %v2920
      %v2935 = vsel %vm2933, %v2920, %v2922
      %v2936 = vsel %vm2933, %v2922, %v2924
      %v2937 = vsel %vm2933, %v2924, %v2926
      %v2938 = vsel %vm2933, %v2926, %v2928
      %v2939 = vsel %vm2933, %v2928, %v2930
      %v2940 = vsel %vm2933, %v2930, %v2932
      %v2942 = vsel %vm323, %v2897, 0
      %v2945 = vsel %vm327, %v2934, 0
      %v2948 = vsel %vm327, %v2935, 0
      %v2951 = vsel %vm327, %v2936, 0
      %v2954 = vsel %vm327, %v2937, 0
      %v2957 = vsel %vm327, %v2938, 0
      %v2960 = vsel %vm327, %v2939, 0
      %v2963 = vsel %vm327, %v2940, 0
      %2965 = vmatpush.bf16.msra.mxu0 0
      %2966 = vmatpush.bf16.msra.mxu0 0
      %2967 = vmatpush.bf16.msra.mxu0 0
      %2968 = vmatpush.bf16.msra.mxu0 0
      %2969 = vmatpush.bf16.msra.mxu0 0
      %2970 = vmatpush.bf16.msra.mxu0 0
      %2971 = vmatpush.bf16.msra.mxu0 0
      %2972 = vmatpush.bf16.msra.mxu0 %v2945
      %2973 = vmatmul.bf16.gmra.mxu0 %v2942
      %v2974 = vpop.f32.mrf.mxu0
      %v2975 = vadd.f32 0.0, %v2974
      %v2976 = vpop.f32.mrf.mxu0
      %2977 = vdwg.mxu0
      %2978 = vmatpush.bf16.msra.mxu0 0
      %2979 = vmatpush.bf16.msra.mxu0 0
      %2980 = vmatpush.bf16.msra.mxu0 0
      %2981 = vmatpush.bf16.msra.mxu0 0
      %2982 = vmatpush.bf16.msra.mxu0 0
      %2983 = vmatpush.bf16.msra.mxu0 0
      %2984 = vmatpush.bf16.msra.mxu0 0
      %2985 = vmatpush.bf16.msra.mxu0 %v2948
      %2986 = vmatmul.bf16.gmra.mxu0 %v2942
      %v2987 = vpop.f32.mrf.mxu0
      %v2988 = vadd.f32 0.0, %v2987
      %v2989 = vpop.f32.mrf.mxu0
      %2990 = vdwg.mxu0
      %2991 = vmatpush.bf16.msra.mxu0 0
      %2992 = vmatpush.bf16.msra.mxu0 0
      %2993 = vmatpush.bf16.msra.mxu0 0
      %2994 = vmatpush.bf16.msra.mxu0 0
      %2995 = vmatpush.bf16.msra.mxu0 0
      %2996 = vmatpush.bf16.msra.mxu0 0
      %2997 = vmatpush.bf16.msra.mxu0 0
      %2998 = vmatpush.bf16.msra.mxu0 %v2951
      %2999 = vmatmul.bf16.gmra.mxu0 %v2942
      %v3000 = vpop.f32.mrf.mxu0
      %v3001 = vadd.f32 0.0, %v3000
      %v3002 = vpop.f32.mrf.mxu0
      %3003 = vdwg.mxu0
      %3004 = vmatpush.bf16.msra.mxu0 0
      %3005 = vmatpush.bf16.msra.mxu0 0
      %3006 = vmatpush.bf16.msra.mxu0 0
      %3007 = vmatpush.bf16.msra.mxu0 0
      %3008 = vmatpush.bf16.msra.mxu0 0
      %3009 = vmatpush.bf16.msra.mxu0 0
      %3010 = vmatpush.bf16.msra.mxu0 0
      %3011 = vmatpush.bf16.msra.mxu0 %v2954
      %3012 = vmatmul.bf16.gmra.mxu0 %v2942
      %v3013 = vpop.f32.mrf.mxu0
      %v3014 = vadd.f32 0.0, %v3013
      %v3015 = vpop.f32.mrf.mxu0
      %3016 = vdwg.mxu0
      %3017 = vmatpush.bf16.msra.mxu0 0
      %3018 = vmatpush.bf16.msra.mxu0 0
      %3019 = vmatpush.bf16.msra.mxu0 0
      %3020 = vmatpush.bf16.msra.mxu0 0
      %3021 = vmatpush.bf16.msra.mxu0 0
      %3022 = vmatpush.bf16.msra.mxu0 0
      %3023 = vmatpush.bf16.msra.mxu0 0
      %3024 = vmatpush.bf16.msra.mxu0 %v2957
      %3025 = vmatmul.bf16.gmra.mxu0 %v2942
      %v3026 = vpop.f32.mrf.mxu0
      %v3027 = vadd.f32 0.0, %v3026
      %v3028 = vpop.f32.mrf.mxu0
      %3029 = vdwg.mxu0
      %3030 = vmatpush.bf16.msra.mxu0 0
      %3031 = vmatpush.bf16.msra.mxu0 0
      %3032 = vmatpush.bf16.msra.mxu0 0
      %3033 = vmatpush.bf16.msra.mxu0 0
      %3034 = vmatpush.bf16.msra.mxu0 0
      %3035 = vmatpush.bf16.msra.mxu0 0
      %3036 = vmatpush.bf16.msra.mxu0 0
      %3037 = vmatpush.bf16.msra.mxu0 %v2960
      %3038 = vmatmul.bf16.gmra.mxu0 %v2942
      %v3039 = vpop.f32.mrf.mxu0
      %v3040 = vadd.f32 0.0, %v3039
      %v3041 = vpop.f32.mrf.mxu0
      %3042 = vdwg.mxu0
      %3043 = vmatpush.bf16.msra.mxu0 0
      %3044 = vmatpush.bf16.msra.mxu0 0
      %3045 = vmatpush.bf16.msra.mxu0 0
      %3046 = vmatpush.bf16.msra.mxu0 0
      %3047 = vmatpush.bf16.msra.mxu0 0
      %3048 = vmatpush.bf16.msra.mxu0 0
      %3049 = vmatpush.bf16.msra.mxu0 0
      %3050 = vmatpush.bf16.msra.mxu0 %v2963
      %3051 = vmatmul.bf16.gmra.mxu0 %v2942
      %v3052 = vpop.f32.mrf.mxu0
      %v3053 = vadd.f32 0.0, %v3052
      %v3054 = vpop.f32.mrf.mxu0
      %3055 = vdwg.mxu0
      %v3056 = vadd.f32 %v2889, %v2975
      %v3057 = vadd.f32 %v2890, %v2988
      %v3058 = vadd.f32 %v2891, %v3001
      %v3059 = vadd.f32 %v2892, %v3014
      %v3060 = vadd.f32 %v2893, %v3027
      %v3061 = vadd.f32 %v2894, %v3040
      %v3062 = vadd.f32 %v2895, %v3053
      %s3063 = scalar_lea.vmem %s1, 68
      %v3064 = vld [vmem:[%s3063] sm:$0xf]
      %3065 = vst [vmem:[#allocation1] ss:$4 sm:$0xff] %v272
      %s3066 = scalar_lea.vmem [#allocation1], 32
      %3067 = vst [vmem:[%s3066] ss:$4 sm:$0xff] %v273
      %v3068 = vld.sshfl [vmem:[#allocation1] sm:$0xff pattern:$0x73625140]
      %v3070 = vld.sshfl [vmem:[#allocation1 + $0x8] sm:$0xff pattern:$0x73625140]
      %v3072 = vld.sshfl [vmem:[#allocation1 + $0x10] sm:$0xff pattern:$0x73625140]
      %v3074 = vld.sshfl [vmem:[#allocation1 + $0x18] sm:$0xff pattern:$0x73625140]
      %v3076 = vld.sshfl [vmem:[#allocation1 + $0x20] sm:$0xff pattern:$0x73625140]
      %v3078 = vld.sshfl [vmem:[#allocation1 + $0x28] sm:$0xff pattern:$0x73625140]
      %v3080 = vld.sshfl [vmem:[#allocation1 + $0x30] sm:$0xff pattern:$0x73625140]
      %v3082 = vld.sshfl [vmem:[#allocation1 + $0x38] sm:$0xff pattern:$0x73625140]
      %3084 = vrot.lane.b32.xlu0 %v3068, 6
      %v3085 = vpop.permute.xlu0 %3084
      %3086 = vrot.lane.b32.xlu0 %v3070, 6
      %v3087 = vpop.permute.xlu0 %3086
      %3088 = vrot.lane.b32.xlu0 %v3072, 6
      %v3089 = vpop.permute.xlu0 %3088
      %3090 = vrot.lane.b32.xlu0 %v3074, 6
      %v3091 = vpop.permute.xlu0 %3090
      %3092 = vrot.lane.b32.xlu0 %v3076, 6
      %v3093 = vpop.permute.xlu0 %3092
      %3094 = vrot.lane.b32.xlu0 %v3078, 6
      %v3095 = vpop.permute.xlu0 %3094
      %3096 = vrot.lane.b32.xlu0 %v3080, 6
      %v3097 = vpop.permute.xlu0 %3096
      %3098 = vrot.lane.b32.xlu0 %v3082, 6
      %v3099 = vpop.permute.xlu0 %3098
      %vm3100 = vcmask 48128
      %v3101 = vsel %vm3100, %v3085, %v3087
      %v3102 = vsel %vm3100, %v3087, %v3089
      %v3103 = vsel %vm3100, %v3089, %v3091
      %v3104 = vsel %vm3100, %v3091, %v3093
      %v3105 = vsel %vm3100, %v3093, %v3095
      %v3106 = vsel %vm3100, %v3095, %v3097
      %v3107 = vsel %vm3100, %v3097, %v3099
      %v3109 = vsel %vm323, %v3064, 0
      %v3112 = vsel %vm327, %v3101, 0
      %v3115 = vsel %vm327, %v3102, 0
      %v3118 = vsel %vm327, %v3103, 0
      %v3121 = vsel %vm327, %v3104, 0
      %v3124 = vsel %vm327, %v3105, 0
      %v3127 = vsel %vm327, %v3106, 0
      %v3130 = vsel %vm327, %v3107, 0
      %3132 = vmatpush.bf16.msra.mxu0 0
      %3133 = vmatpush.bf16.msra.mxu0 0
      %3134 = vmatpush.bf16.msra.mxu0 0
      %3135 = vmatpush.bf16.msra.mxu0 0
      %3136 = vmatpush.bf16.msra.mxu0 0
      %3137 = vmatpush.bf16.msra.mxu0 0
      %3138 = vmatpush.bf16.msra.mxu0 0
      %3139 = vmatpush.bf16.msra.mxu0 %v3112
      %3140 = vmatmul.bf16.gmra.mxu0 %v3109
      %v3141 = vpop.f32.mrf.mxu0
      %v3142 = vadd.f32 0.0, %v3141
      %v3143 = vpop.f32.mrf.mxu0
      %3144 = vdwg.mxu0
      %3145 = vmatpush.bf16.msra.mxu0 0
      %3146 = vmatpush.bf16.msra.mxu0 0
      %3147 = vmatpush.bf16.msra.mxu0 0
      %3148 = vmatpush.bf16.msra.mxu0 0
      %3149 = vmatpush.bf16.msra.mxu0 0
      %3150 = vmatpush.bf16.msra.mxu0 0
      %3151 = vmatpush.bf16.msra.mxu0 0
      %3152 = vmatpush.bf16.msra.mxu0 %v3115
      %3153 = vmatmul.bf16.gmra.mxu0 %v3109
      %v3154 = vpop.f32.mrf.mxu0
      %v3155 = vadd.f32 0.0, %v3154
      %v3156 = vpop.f32.mrf.mxu0
      %3157 = vdwg.mxu0
      %3158 = vmatpush.bf16.msra.mxu0 0
      %3159 = vmatpush.bf16.msra.mxu0 0
      %3160 = vmatpush.bf16.msra.mxu0 0
      %3161 = vmatpush.bf16.msra.mxu0 0
      %3162 = vmatpush.bf16.msra.mxu0 0
      %3163 = vmatpush.bf16.msra.mxu0 0
      %3164 = vmatpush.bf16.msra.mxu0 0
      %3165 = vmatpush.bf16.msra.mxu0 %v3118
      %3166 = vmatmul.bf16.gmra.mxu0 %v3109
      %v3167 = vpop.f32.mrf.mxu0
      %v3168 = vadd.f32 0.0, %v3167
      %v3169 = vpop.f32.mrf.mxu0
      %3170 = vdwg.mxu0
      %3171 = vmatpush.bf16.msra.mxu0 0
      %3172 = vmatpush.bf16.msra.mxu0 0
      %3173 = vmatpush.bf16.msra.mxu0 0
      %3174 = vmatpush.bf16.msra.mxu0 0
      %3175 = vmatpush.bf16.msra.mxu0 0
      %3176 = vmatpush.bf16.msra.mxu0 0
      %3177 = vmatpush.bf16.msra.mxu0 0
      %3178 = vmatpush.bf16.msra.mxu0 %v3121
      %3179 = vmatmul.bf16.gmra.mxu0 %v3109
      %v3180 = vpop.f32.mrf.mxu0
      %v3181 = vadd.f32 0.0, %v3180
      %v3182 = vpop.f32.mrf.mxu0
      %3183 = vdwg.mxu0
      %3184 = vmatpush.bf16.msra.mxu0 0
      %3185 = vmatpush.bf16.msra.mxu0 0
      %3186 = vmatpush.bf16.msra.mxu0 0
      %3187 = vmatpush.bf16.msra.mxu0 0
      %3188 = vmatpush.bf16.msra.mxu0 0
      %3189 = vmatpush.bf16.msra.mxu0 0
      %3190 = vmatpush.bf16.msra.mxu0 0
      %3191 = vmatpush.bf16.msra.mxu0 %v3124
      %3192 = vmatmul.bf16.gmra.mxu0 %v3109
      %v3193 = vpop.f32.mrf.mxu0
      %v3194 = vadd.f32 0.0, %v3193
      %v3195 = vpop.f32.mrf.mxu0
      %3196 = vdwg.mxu0
      %3197 = vmatpush.bf16.msra.mxu0 0
      %3198 = vmatpush.bf16.msra.mxu0 0
      %3199 = vmatpush.bf16.msra.mxu0 0
      %3200 = vmatpush.bf16.msra.mxu0 0
      %3201 = vmatpush.bf16.msra.mxu0 0
      %3202 = vmatpush.bf16.msra.mxu0 0
      %3203 = vmatpush.bf16.msra.mxu0 0
      %3204 = vmatpush.bf16.msra.mxu0 %v3127
      %3205 = vmatmul.bf16.gmra.mxu0 %v3109
      %v3206 = vpop.f32.mrf.mxu0
      %v3207 = vadd.f32 0.0, %v3206
      %v3208 = vpop.f32.mrf.mxu0
      %3209 = vdwg.mxu0
      %3210 = vmatpush.bf16.msra.mxu0 0
      %3211 = vmatpush.bf16.msra.mxu0 0
      %3212 = vmatpush.bf16.msra.mxu0 0
      %3213 = vmatpush.bf16.msra.mxu0 0
      %3214 = vmatpush.bf16.msra.mxu0 0
      %3215 = vmatpush.bf16.msra.mxu0 0
      %3216 = vmatpush.bf16.msra.mxu0 0
      %3217 = vmatpush.bf16.msra.mxu0 %v3130
      %3218 = vmatmul.bf16.gmra.mxu0 %v3109
      %v3219 = vpop.f32.mrf.mxu0
      %v3220 = vadd.f32 0.0, %v3219
      %v3221 = vpop.f32.mrf.mxu0
      %3222 = vdwg.mxu0
      %v3223 = vadd.f32 %v3056, %v3142
      %v3224 = vadd.f32 %v3057, %v3155
      %v3225 = vadd.f32 %v3058, %v3168
      %v3226 = vadd.f32 %v3059, %v3181
      %v3227 = vadd.f32 %v3060, %v3194
      %v3228 = vadd.f32 %v3061, %v3207
      %v3229 = vadd.f32 %v3062, %v3220
      %s3230 = scalar_lea.vmem %s1, 72
      %v3231 = vld [vmem:[%s3230] sm:$0xf]
      %3232 = vst [vmem:[#allocation1] ss:$4 sm:$0xff] %v272
      %s3233 = scalar_lea.vmem [#allocation1], 32
      %3234 = vst [vmem:[%s3233] ss:$4 sm:$0xff] %v273
      %v3235 = vld.sshfl [vmem:[#allocation1 + $0x8] sm:$0xff pattern:$0x73625140]
      %v3237 = vld.sshfl [vmem:[#allocation1 + $0x10] sm:$0xff pattern:$0x73625140]
      %v3239 = vld.sshfl [vmem:[#allocation1 + $0x18] sm:$0xff pattern:$0x73625140]
      %v3241 = vld.sshfl [vmem:[#allocation1 + $0x20] sm:$0xff pattern:$0x73625140]
      %v3243 = vld.sshfl [vmem:[#allocation1 + $0x28] sm:$0xff pattern:$0x73625140]
      %v3245 = vld.sshfl [vmem:[#allocation1 + $0x30] sm:$0xff pattern:$0x73625140]
      %v3247 = vld.sshfl [vmem:[#allocation1 + $0x38] sm:$0xff pattern:$0x73625140]
      %3250 = vst [vmem:[#allocation1] ss:$4 sm:$0xff] %v274
      %v3251 = vld.sshfl [vmem:[#allocation1] sm:$0xff pattern:$0x73625140]
      %3253 = vrot.lane.b32.xlu0 %v3235, 56
      %v3254 = vpop.permute.xlu0 %3253
      %3255 = vrot.lane.b32.xlu0 %v3237, 56
      %v3256 = vpop.permute.xlu0 %3255
      %3257 = vrot.lane.b32.xlu0 %v3239, 56
      %v3258 = vpop.permute.xlu0 %3257
      %3259 = vrot.lane.b32.xlu0 %v3241, 56
      %v3260 = vpop.permute.xlu0 %3259
      %3261 = vrot.lane.b32.xlu0 %v3243, 56
      %v3262 = vpop.permute.xlu0 %3261
      %3263 = vrot.lane.b32.xlu0 %v3245, 56
      %v3264 = vpop.permute.xlu0 %3263
      %3265 = vrot.lane.b32.xlu0 %v3247, 56
      %v3266 = vpop.permute.xlu0 %3265
      %3267 = vrot.lane.b32.xlu0 %v3251, 56
      %v3268 = vpop.permute.xlu0 %3267
      %vm3269 = vcmask 457728
      %v3270 = vsel %vm3269, %v3254, %v3256
      %v3271 = vsel %vm3269, %v3256, %v3258
      %v3272 = vsel %vm3269, %v3258, %v3260
      %v3273 = vsel %vm3269, %v3260, %v3262
      %v3274 = vsel %vm3269, %v3262, %v3264
      %v3275 = vsel %vm3269, %v3264, %v3266
      %v3276 = vsel %vm3269, %v3266, %v3268
      %v3278 = vsel %vm323, %v3231, 0
      %v3281 = vsel %vm327, %v3270, 0
      %v3284 = vsel %vm327, %v3271, 0
      %v3287 = vsel %vm327, %v3272, 0
      %v3290 = vsel %vm327, %v3273, 0
      %v3293 = vsel %vm327, %v3274, 0
      %v3296 = vsel %vm327, %v3275, 0
      %v3299 = vsel %vm327, %v3276, 0
      %3301 = vmatpush.bf16.msra.mxu0 0
      %3302 = vmatpush.bf16.msra.mxu0 0
      %3303 = vmatpush.bf16.msra.mxu0 0
      %3304 = vmatpush.bf16.msra.mxu0 0
      %3305 = vmatpush.bf16.msra.mxu0 0
      %3306 = vmatpush.bf16.msra.mxu0 0
      %3307 = vmatpush.bf16.msra.mxu0 0
      %3308 = vmatpush.bf16.msra.mxu0 %v3281
      %3309 = vmatmul.bf16.gmra.mxu0 %v3278
      %v3310 = vpop.f32.mrf.mxu0
      %v3311 = vadd.f32 0.0, %v3310
      %v3312 = vpop.f32.mrf.mxu0
      %3313 = vdwg.mxu0
      %3314 = vmatpush.bf16.msra.mxu0 0
      %3315 = vmatpush.bf16.msra.mxu0 0
      %3316 = vmatpush.bf16.msra.mxu0 0
      %3317 = vmatpush.bf16.msra.mxu0 0
      %3318 = vmatpush.bf16.msra.mxu0 0
      %3319 = vmatpush.bf16.msra.mxu0 0
      %3320 = vmatpush.bf16.msra.mxu0 0
      %3321 = vmatpush.bf16.msra.mxu0 %v3284
      %3322 = vmatmul.bf16.gmra.mxu0 %v3278
      %v3323 = vpop.f32.mrf.mxu0
      %v3324 = vadd.f32 0.0, %v3323
      %v3325 = vpop.f32.mrf.mxu0
      %3326 = vdwg.mxu0
      %3327 = vmatpush.bf16.msra.mxu0 0
      %3328 = vmatpush.bf16.msra.mxu0 0
      %3329 = vmatpush.bf16.msra.mxu0 0
      %3330 = vmatpush.bf16.msra.mxu0 0
      %3331 = vmatpush.bf16.msra.mxu0 0
      %3332 = vmatpush.bf16.msra.mxu0 0
      %3333 = vmatpush.bf16.msra.mxu0 0
      %3334 = vmatpush.bf16.msra.mxu0 %v3287
      %3335 = vmatmul.bf16.gmra.mxu0 %v3278
      %v3336 = vpop.f32.mrf.mxu0
      %v3337 = vadd.f32 0.0, %v3336
      %v3338 = vpop.f32.mrf.mxu0
      %3339 = vdwg.mxu0
      %3340 = vmatpush.bf16.msra.mxu0 0
      %3341 = vmatpush.bf16.msra.mxu0 0
      %3342 = vmatpush.bf16.msra.mxu0 0
      %3343 = vmatpush.bf16.msra.mxu0 0
      %3344 = vmatpush.bf16.msra.mxu0 0
      %3345 = vmatpush.bf16.msra.mxu0 0
      %3346 = vmatpush.bf16.msra.mxu0 0
      %3347 = vmatpush.bf16.msra.mxu0 %v3290
      %3348 = vmatmul.bf16.gmra.mxu0 %v3278
      %v3349 = vpop.f32.mrf.mxu0
      %v3350 = vadd.f32 0.0, %v3349
      %v3351 = vpop.f32.mrf.mxu0
      %3352 = vdwg.mxu0
      %3353 = vmatpush.bf16.msra.mxu0 0
      %3354 = vmatpush.bf16.msra.mxu0 0
      %3355 = vmatpush.bf16.msra.mxu0 0
      %3356 = vmatpush.bf16.msra.mxu0 0
      %3357 = vmatpush.bf16.msra.mxu0 0
      %3358 = vmatpush.bf16.msra.mxu0 0
      %3359 = vmatpush.bf16.msra.mxu0 0
      %3360 = vmatpush.bf16.msra.mxu0 %v3293
      %3361 = vmatmul.bf16.gmra.mxu0 %v3278
      %v3362 = vpop.f32.mrf.mxu0
      %v3363 = vadd.f32 0.0, %v3362
      %v3364 = vpop.f32.mrf.mxu0
      %3365 = vdwg.mxu0
      %3366 = vmatpush.bf16.msra.mxu0 0
      %3367 = vmatpush.bf16.msra.mxu0 0
      %3368 = vmatpush.bf16.msra.mxu0 0
      %3369 = vmatpush.bf16.msra.mxu0 0
      %3370 = vmatpush.bf16.msra.mxu0 0
      %3371 = vmatpush.bf16.msra.mxu0 0
      %3372 = vmatpush.bf16.msra.mxu0 0
      %3373 = vmatpush.bf16.msra.mxu0 %v3296
      %3374 = vmatmul.bf16.gmra.mxu0 %v3278
      %v3375 = vpop.f32.mrf.mxu0
      %v3376 = vadd.f32 0.0, %v3375
      %v3377 = vpop.f32.mrf.mxu0
      %3378 = vdwg.mxu0
      %3379 = vmatpush.bf16.msra.mxu0 0
      %3380 = vmatpush.bf16.msra.mxu0 0
      %3381 = vmatpush.bf16.msra.mxu0 0
      %3382 = vmatpush.bf16.msra.mxu0 0
      %3383 = vmatpush.bf16.msra.mxu0 0
      %3384 = vmatpush.bf16.msra.mxu0 0
      %3385 = vmatpush.bf16.msra.mxu0 0
      %3386 = vmatpush.bf16.msra.mxu0 %v3299
      %3387 = vmatmul.bf16.gmra.mxu0 %v3278
      %v3388 = vpop.f32.mrf.mxu0
      %v3389 = vadd.f32 0.0, %v3388
      %v3390 = vpop.f32.mrf.mxu0
      %3391 = vdwg.mxu0
      %v3392 = vadd.f32 %v3223, %v3311
      %v3393 = vadd.f32 %v3224, %v3324
      %v3394 = vadd.f32 %v3225, %v3337
      %v3395 = vadd.f32 %v3226, %v3350
      %v3396 = vadd.f32 %v3227, %v3363
      %v3397 = vadd.f32 %v3228, %v3376
      %v3398 = vadd.f32 %v3229, %v3389
      %s3399 = scalar_lea.vmem %s1, 76
      %v3400 = vld [vmem:[%s3399] sm:$0xf]
      %3401 = vst [vmem:[#allocation1] ss:$4 sm:$0xff] %v272
      %s3402 = scalar_lea.vmem [#allocation1], 32
      %3403 = vst [vmem:[%s3402] ss:$4 sm:$0xff] %v273
      %v3404 = vld.sshfl [vmem:[#allocation1 + $0x8] sm:$0xff pattern:$0x73625140]
      %v3406 = vld.sshfl [vmem:[#allocation1 + $0x10] sm:$0xff pattern:$0x73625140]
      %v3408 = vld.sshfl [vmem:[#allocation1 + $0x18] sm:$0xff pattern:$0x73625140]
      %v3410 = vld.sshfl [vmem:[#allocation1 + $0x20] sm:$0xff pattern:$0x73625140]
      %v3412 = vld.sshfl [vmem:[#allocation1 + $0x28] sm:$0xff pattern:$0x73625140]
      %v3414 = vld.sshfl [vmem:[#allocation1 + $0x30] sm:$0xff pattern:$0x73625140]
      %v3416 = vld.sshfl [vmem:[#allocation1 + $0x38] sm:$0xff pattern:$0x73625140]
      %3418 = vst [vmem:[#allocation1] ss:$4 sm:$0xff] %v274
      %v3419 = vld.sshfl [vmem:[#allocation1] sm:$0xff pattern:$0x73625140]
      %3421 = vrot.lane.b32.xlu0 %v3404, 55
      %v3422 = vpop.permute.xlu0 %3421
      %3423 = vrot.lane.b32.xlu0 %v3406, 55
      %v3424 = vpop.permute.xlu0 %3423
      %3425 = vrot.lane.b32.xlu0 %v3408, 55
      %v3426 = vpop.permute.xlu0 %3425
      %3427 = vrot.lane.b32.xlu0 %v3410, 55
      %v3428 = vpop.permute.xlu0 %3427
      %3429 = vrot.lane.b32.xlu0 %v3412, 55
      %v3430 = vpop.permute.xlu0 %3429
      %3431 = vrot.lane.b32.xlu0 %v3414, 55
      %v3432 = vpop.permute.xlu0 %3431
      %3433 = vrot.lane.b32.xlu0 %v3416, 55
      %v3434 = vpop.permute.xlu0 %3433
      %3435 = vrot.lane.b32.xlu0 %v3419, 55
      %v3436 = vpop.permute.xlu0 %3435
      %vm3437 = vcmask 449536
      %v3438 = vsel %vm3437, %v3422, %v3424
      %v3439 = vsel %vm3437, %v3424, %v3426
      %v3440 = vsel %vm3437, %v3426, %v3428
      %v3441 = vsel %vm3437, %v3428, %v3430
      %v3442 = vsel %vm3437, %v3430, %v3432
      %v3443 = vsel %vm3437, %v3432, %v3434
      %v3444 = vsel %vm3437, %v3434, %v3436
      %v3446 = vsel %vm323, %v3400, 0
      %v3449 = vsel %vm327, %v3438, 0
      %v3452 = vsel %vm327, %v3439, 0
      %v3455 = vsel %vm327, %v3440, 0
      %v3458 = vsel %vm327, %v3441, 0
      %v3461 = vsel %vm327, %v3442, 0
      %v3464 = vsel %vm327, %v3443, 0
      %v3467 = vsel %vm327, %v3444, 0
      %3469 = vmatpush.bf16.msra.mxu0 0
      %3470 = vmatpush.bf16.msra.mxu0 0
      %3471 = vmatpush.bf16.msra.mxu0 0
      %3472 = vmatpush.bf16.msra.mxu0 0
      %3473 = vmatpush.bf16.msra.mxu0 0
      %3474 = vmatpush.bf16.msra.mxu0 0
      %3475 = vmatpush.bf16.msra.mxu0 0
      %3476 = vmatpush.bf16.msra.mxu0 %v3449
      %3477 = vmatmul.bf16.gmra.mxu0 %v3446
      %v3478 = vpop.f32.mrf.mxu0
      %v3479 = vadd.f32 0.0, %v3478
      %v3480 = vpop.f32.mrf.mxu0
      %3481 = vdwg.mxu0
      %3482 = vmatpush.bf16.msra.mxu0 0
      %3483 = vmatpush.bf16.msra.mxu0 0
      %3484 = vmatpush.bf16.msra.mxu0 0
      %3485 = vmatpush.bf16.msra.mxu0 0
      %3486 = vmatpush.bf16.msra.mxu0 0
      %3487 = vmatpush.bf16.msra.mxu0 0
      %3488 = vmatpush.bf16.msra.mxu0 0
      %3489 = vmatpush.bf16.msra.mxu0 %v3452
      %3490 = vmatmul.bf16.gmra.mxu0 %v3446
      %v3491 = vpop.f32.mrf.mxu0
      %v3492 = vadd.f32 0.0, %v3491
      %v3493 = vpop.f32.mrf.mxu0
      %3494 = vdwg.mxu0
      %3495 = vmatpush.bf16.msra.mxu0 0
      %3496 = vmatpush.bf16.msra.mxu0 0
      %3497 = vmatpush.bf16.msra.mxu0 0
      %3498 = vmatpush.bf16.msra.mxu0 0
      %3499 = vmatpush.bf16.msra.mxu0 0
      %3500 = vmatpush.bf16.msra.mxu0 0
      %3501 = vmatpush.bf16.msra.mxu0 0
      %3502 = vmatpush.bf16.msra.mxu0 %v3455
      %3503 = vmatmul.bf16.gmra.mxu0 %v3446
      %v3504 = vpop.f32.mrf.mxu0
      %v3505 = vadd.f32 0.0, %v3504
      %v3506 = vpop.f32.mrf.mxu0
      %3507 = vdwg.mxu0
      %3508 = vmatpush.bf16.msra.mxu0 0
      %3509 = vmatpush.bf16.msra.mxu0 0
      %3510 = vmatpush.bf16.msra.mxu0 0
      %3511 = vmatpush.bf16.msra.mxu0 0
      %3512 = vmatpush.bf16.msra.mxu0 0
      %3513 = vmatpush.bf16.msra.mxu0 0
      %3514 = vmatpush.bf16.msra.mxu0 0
      %3515 = vmatpush.bf16.msra.mxu0 %v3458
      %3516 = vmatmul.bf16.gmra.mxu0 %v3446
      %v3517 = vpop.f32.mrf.mxu0
      %v3518 = vadd.f32 0.0, %v3517
      %v3519 = vpop.f32.mrf.mxu0
      %3520 = vdwg.mxu0
      %3521 = vmatpush.bf16.msra.mxu0 0
      %3522 = vmatpush.bf16.msra.mxu0 0
      %3523 = vmatpush.bf16.msra.mxu0 0
      %3524 = vmatpush.bf16.msra.mxu0 0
      %3525 = vmatpush.bf16.msra.mxu0 0
      %3526 = vmatpush.bf16.msra.mxu0 0
      %3527 = vmatpush.bf16.msra.mxu0 0
      %3528 = vmatpush.bf16.msra.mxu0 %v3461
      %3529 = vmatmul.bf16.gmra.mxu0 %v3446
      %v3530 = vpop.f32.mrf.mxu0
      %v3531 = vadd.f32 0.0, %v3530
      %v3532 = vpop.f32.mrf.mxu0
      %3533 = vdwg.mxu0
      %3534 = vmatpush.bf16.msra.mxu0 0
      %3535 = vmatpush.bf16.msra.mxu0 0
      %3536 = vmatpush.bf16.msra.mxu0 0
      %3537 = vmatpush.bf16.msra.mxu0 0
      %3538 = vmatpush.bf16.msra.mxu0 0
      %3539 = vmatpush.bf16.msra.mxu0 0
      %3540 = vmatpush.bf16.msra.mxu0 0
      %3541 = vmatpush.bf16.msra.mxu0 %v3464
      %3542 = vmatmul.bf16.gmra.mxu0 %v3446
      %v3543 = vpop.f32.mrf.mxu0
      %v3544 = vadd.f32 0.0, %v3543
      %v3545 = vpop.f32.mrf.mxu0
      %3546 = vdwg.mxu0
      %3547 = vmatpush.bf16.msra.mxu0 0
      %3548 = vmatpush.bf16.msra.mxu0 0
      %3549 = vmatpush.bf16.msra.mxu0 0
      %3550 = vmatpush.bf16.msra.mxu0 0
      %3551 = vmatpush.bf16.msra.mxu0 0
      %3552 = vmatpush.bf16.msra.mxu0 0
      %3553 = vmatpush.bf16.msra.mxu0 0
      %3554 = vmatpush.bf16.msra.mxu0 %v3467
      %3555 = vmatmul.bf16.gmra.mxu0 %v3446
      %v3556 = vpop.f32.mrf.mxu0
      %v3557 = vadd.f32 0.0, %v3556
      %v3558 = vpop.f32.mrf.mxu0
      %3559 = vdwg.mxu0
      %v3560 = vadd.f32 %v3392, %v3479
      %v3561 = vadd.f32 %v3393, %v3492
      %v3562 = vadd.f32 %v3394, %v3505
      %v3563 = vadd.f32 %v3395, %v3518
      %v3564 = vadd.f32 %v3396, %v3531
      %v3565 = vadd.f32 %v3397, %v3544
      %v3566 = vadd.f32 %v3398, %v3557
      %s3567 = scalar_lea.vmem %s1, 80
      %v3568 = vld [vmem:[%s3567] sm:$0xf]
      %3569 = vst [vmem:[#allocation1] ss:$4 sm:$0xff] %v272
      %s3570 = scalar_lea.vmem [#allocation1], 32
      %3571 = vst [vmem:[%s3570] ss:$4 sm:$0xff] %v273
      %v3572 = vld.sshfl [vmem:[#allocation1 + $0x8] sm:$0xff pattern:$0x73625140]
      %v3574 = vld.sshfl [vmem:[#allocation1 + $0x10] sm:$0xff pattern:$0x73625140]
      %v3576 = vld.sshfl [vmem:[#allocation1 + $0x18] sm:$0xff pattern:$0x73625140]
      %v3578 = vld.sshfl [vmem:[#allocation1 + $0x20] sm:$0xff pattern:$0x73625140]
      %v3580 = vld.sshfl [vmem:[#allocation1 + $0x28] sm:$0xff pattern:$0x73625140]
      %v3582 = vld.sshfl [vmem:[#allocation1 + $0x30] sm:$0xff pattern:$0x73625140]
      %v3584 = vld.sshfl [vmem:[#allocation1 + $0x38] sm:$0xff pattern:$0x73625140]
      %3586 = vst [vmem:[#allocation1] ss:$4 sm:$0xff] %v274
      %v3587 = vld.sshfl [vmem:[#allocation1] sm:$0xff pattern:$0x73625140]
      %3589 = vrot.lane.b32.xlu0 %v3572, 54
      %v3590 = vpop.permute.xlu0 %3589
      %3591 = vrot.lane.b32.xlu0 %v3574, 54
      %v3592 = vpop.permute.xlu0 %3591
      %3593 = vrot.lane.b32.xlu0 %v3576, 54
      %v3594 = vpop.permute.xlu0 %3593
      %3595 = vrot.lane.b32.xlu0 %v3578, 54
      %v3596 = vpop.permute.xlu0 %3595
      %3597 = vrot.lane.b32.xlu0 %v3580, 54
      %v3598 = vpop.permute.xlu0 %3597
      %3599 = vrot.lane.b32.xlu0 %v3582, 54
      %v3600 = vpop.permute.xlu0 %3599
      %3601 = vrot.lane.b32.xlu0 %v3584, 54
      %v3602 = vpop.permute.xlu0 %3601
      %3603 = vrot.lane.b32.xlu0 %v3587, 54
      %v3604 = vpop.permute.xlu0 %3603
      %vm3605 = vcmask 441344
      %v3606 = vsel %vm3605, %v3590, %v3592
      %v3607 = vsel %vm3605, %v3592, %v3594
      %v3608 = vsel %vm3605, %v3594, %v3596
      %v3609 = vsel %vm3605, %v3596, %v3598
      %v3610 = vsel %vm3605, %v3598, %v3600
      %v3611 = vsel %vm3605, %v3600, %v3602
      %v3612 = vsel %vm3605, %v3602, %v3604
      %v3614 = vsel %vm323, %v3568, 0
      %v3617 = vsel %vm327, %v3606, 0
      %v3620 = vsel %vm327, %v3607, 0
      %v3623 = vsel %vm327, %v3608, 0
      %v3626 = vsel %vm327, %v3609, 0
      %v3629 = vsel %vm327, %v3610, 0
      %v3632 = vsel %vm327, %v3611, 0
      %v3635 = vsel %vm327, %v3612, 0
      %3637 = vmatpush.bf16.msra.mxu0 0
      %3638 = vmatpush.bf16.msra.mxu0 0
      %3639 = vmatpush.bf16.msra.mxu0 0
      %3640 = vmatpush.bf16.msra.mxu0 0
      %3641 = vmatpush.bf16.msra.mxu0 0
      %3642 = vmatpush.bf16.msra.mxu0 0
      %3643 = vmatpush.bf16.msra.mxu0 0
      %3644 = vmatpush.bf16.msra.mxu0 %v3617
      %3645 = vmatmul.bf16.gmra.mxu0 %v3614
      %v3646 = vpop.f32.mrf.mxu0
      %v3647 = vadd.f32 0.0, %v3646
      %v3648 = vpop.f32.mrf.mxu0
      %3649 = vdwg.mxu0
      %3650 = vmatpush.bf16.msra.mxu0 0
      %3651 = vmatpush.bf16.msra.mxu0 0
      %3652 = vmatpush.bf16.msra.mxu0 0
      %3653 = vmatpush.bf16.msra.mxu0 0
      %3654 = vmatpush.bf16.msra.mxu0 0
      %3655 = vmatpush.bf16.msra.mxu0 0
      %3656 = vmatpush.bf16.msra.mxu0 0
      %3657 = vmatpush.bf16.msra.mxu0 %v3620
      %3658 = vmatmul.bf16.gmra.mxu0 %v3614
      %v3659 = vpop.f32.mrf.mxu0
      %v3660 = vadd.f32 0.0, %v3659
      %v3661 = vpop.f32.mrf.mxu0
      %3662 = vdwg.mxu0
      %3663 = vmatpush.bf16.msra.mxu0 0
      %3664 = vmatpush.bf16.msra.mxu0 0
      %3665 = vmatpush.bf16.msra.mxu0 0
      %3666 = vmatpush.bf16.msra.mxu0 0
      %3667 = vmatpush.bf16.msra.mxu0 0
      %3668 = vmatpush.bf16.msra.mxu0 0
      %3669 = vmatpush.bf16.msra.mxu0 0
      %3670 = vmatpush.bf16.msra.mxu0 %v3623
      %3671 = vmatmul.bf16.gmra.mxu0 %v3614
      %v3672 = vpop.f32.mrf.mxu0
      %v3673 = vadd.f32 0.0, %v3672
      %v3674 = vpop.f32.mrf.mxu0
      %3675 = vdwg.mxu0
      %3676 = vmatpush.bf16.msra.mxu0 0
      %3677 = vmatpush.bf16.msra.mxu0 0
      %3678 = vmatpush.bf16.msra.mxu0 0
      %3679 = vmatpush.bf16.msra.mxu0 0
      %3680 = vmatpush.bf16.msra.mxu0 0
      %3681 = vmatpush.bf16.msra.mxu0 0
      %3682 = vmatpush.bf16.msra.mxu0 0
      %3683 = vmatpush.bf16.msra.mxu0 %v3626
      %3684 = vmatmul.bf16.gmra.mxu0 %v3614
      %v3685 = vpop.f32.mrf.mxu0
      %v3686 = vadd.f32 0.0, %v3685
      %v3687 = vpop.f32.mrf.mxu0
      %3688 = vdwg.mxu0
      %3689 = vmatpush.bf16.msra.mxu0 0
      %3690 = vmatpush.bf16.msra.mxu0 0
      %3691 = vmatpush.bf16.msra.mxu0 0
      %3692 = vmatpush.bf16.msra.mxu0 0
      %3693 = vmatpush.bf16.msra.mxu0 0
      %3694 = vmatpush.bf16.msra.mxu0 0
      %3695 = vmatpush.bf16.msra.mxu0 0
      %3696 = vmatpush.bf16.msra.mxu0 %v3629
      %3697 = vmatmul.bf16.gmra.mxu0 %v3614
      %v3698 = vpop.f32.mrf.mxu0
      %v3699 = vadd.f32 0.0, %v3698
      %v3700 = vpop.f32.mrf.mxu0
      %3701 = vdwg.mxu0
      %3702 = vmatpush.bf16.msra.mxu0 0
      %3703 = vmatpush.bf16.msra.mxu0 0
      %3704 = vmatpush.bf16.msra.mxu0 0
      %3705 = vmatpush.bf16.msra.mxu0 0
      %3706 = vmatpush.bf16.msra.mxu0 0
      %3707 = vmatpush.bf16.msra.mxu0 0
      %3708 = vmatpush.bf16.msra.mxu0 0
      %3709 = vmatpush.bf16.msra.mxu0 %v3632
      %3710 = vmatmul.bf16.gmra.mxu0 %v3614
      %v3711 = vpop.f32.mrf.mxu0
      %v3712 = vadd.f32 0.0, %v3711
      %v3713 = vpop.f32.mrf.mxu0
      %3714 = vdwg.mxu0
      %3715 = vmatpush.bf16.msra.mxu0 0
      %3716 = vmatpush.bf16.msra.mxu0 0
      %3717 = vmatpush.bf16.msra.mxu0 0
      %3718 = vmatpush.bf16.msra.mxu0 0
      %3719 = vmatpush.bf16.msra.mxu0 0
      %3720 = vmatpush.bf16.msra.mxu0 0
      %3721 = vmatpush.bf16.msra.mxu0 0
      %3722 = vmatpush.bf16.msra.mxu0 %v3635
      %3723 = vmatmul.bf16.gmra.mxu0 %v3614
      %v3724 = vpop.f32.mrf.mxu0
      %v3725 = vadd.f32 0.0, %v3724
      %v3726 = vpop.f32.mrf.mxu0
      %3727 = vdwg.mxu0
      %v3728 = vadd.f32 %v3560, %v3647
      %v3729 = vadd.f32 %v3561, %v3660
      %v3730 = vadd.f32 %v3562, %v3673
      %v3731 = vadd.f32 %v3563, %v3686
      %v3732 = vadd.f32 %v3564, %v3699
      %v3733 = vadd.f32 %v3565, %v3712
      %v3734 = vadd.f32 %v3566, %v3725
      %s3735 = scalar_lea.vmem %s1, 84
      %v3736 = vld [vmem:[%s3735] sm:$0xf]
      %3737 = vst [vmem:[#allocation1] ss:$4 sm:$0xff] %v272
      %s3738 = scalar_lea.vmem [#allocation1], 32
      %3739 = vst [vmem:[%s3738] ss:$4 sm:$0xff] %v273
      %v3740 = vld.sshfl [vmem:[#allocation1 + $0x8] sm:$0xff pattern:$0x73625140]
      %v3742 = vld.sshfl [vmem:[#allocation1 + $0x10] sm:$0xff pattern:$0x73625140]
      %v3744 = vld.sshfl [vmem:[#allocation1 + $0x18] sm:$0xff pattern:$0x73625140]
      %v3746 = vld.sshfl [vmem:[#allocation1 + $0x20] sm:$0xff pattern:$0x73625140]
      %v3748 = vld.sshfl [vmem:[#allocation1 + $0x28] sm:$0xff pattern:$0x73625140]
      %v3750 = vld.sshfl [vmem:[#allocation1 + $0x30] sm:$0xff pattern:$0x73625140]
      %v3752 = vld.sshfl [vmem:[#allocation1 + $0x38] sm:$0xff pattern:$0x73625140]
      %3754 = vst [vmem:[#allocation1] ss:$4 sm:$0xff] %v274
      %v3755 = vld.sshfl [vmem:[#allocation1] sm:$0xff pattern:$0x73625140]
      %3757 = vrot.lane.b32.xlu0 %v3740, 46
      %v3758 = vpop.permute.xlu0 %3757
      %3759 = vrot.lane.b32.xlu0 %v3742, 46
      %v3760 = vpop.permute.xlu0 %3759
      %3761 = vrot.lane.b32.xlu0 %v3744, 46
      %v3762 = vpop.permute.xlu0 %3761
      %3763 = vrot.lane.b32.xlu0 %v3746, 46
      %v3764 = vpop.permute.xlu0 %3763
      %3765 = vrot.lane.b32.xlu0 %v3748, 46
      %v3766 = vpop.permute.xlu0 %3765
      %3767 = vrot.lane.b32.xlu0 %v3750, 46
      %v3768 = vpop.permute.xlu0 %3767
      %3769 = vrot.lane.b32.xlu0 %v3752, 46
      %v3770 = vpop.permute.xlu0 %3769
      %3771 = vrot.lane.b32.xlu0 %v3755, 46
      %v3772 = vpop.permute.xlu0 %3771
      %vm3773 = vcmask 375808
      %v3774 = vsel %vm3773, %v3758, %v3760
      %v3775 = vsel %vm3773, %v3760, %v3762
      %v3776 = vsel %vm3773, %v3762, %v3764
      %v3777 = vsel %vm3773, %v3764, %v3766
      %v3778 = vsel %vm3773, %v3766, %v3768
      %v3779 = vsel %vm3773, %v3768, %v3770
      %v3780 = vsel %vm3773, %v3770, %v3772
      %v3782 = vsel %vm323, %v3736, 0
      %v3785 = vsel %vm327, %v3774, 0
      %v3788 = vsel %vm327, %v3775, 0
      %v3791 = vsel %vm327, %v3776, 0
      %v3794 = vsel %vm327, %v3777, 0
      %v3797 = vsel %vm327, %v3778, 0
      %v3800 = vsel %vm327, %v3779, 0
      %v3803 = vsel %vm327, %v3780, 0
      %3805 = vmatpush.bf16.msra.mxu0 0
      %3806 = vmatpush.bf16.msra.mxu0 0
      %3807 = vmatpush.bf16.msra.mxu0 0
      %3808 = vmatpush.bf16.msra.mxu0 0
      %3809 = vmatpush.bf16.msra.mxu0 0
      %3810 = vmatpush.bf16.msra.mxu0 0
      %3811 = vmatpush.bf16.msra.mxu0 0
      %3812 = vmatpush.bf16.msra.mxu0 %v3785
      %3813 = vmatmul.bf16.gmra.mxu0 %v3782
      %v3814 = vpop.f32.mrf.mxu0
      %v3815 = vadd.f32 0.0, %v3814
      %v3816 = vpop.f32.mrf.mxu0
      %3817 = vdwg.mxu0
      %3818 = vmatpush.bf16.msra.mxu0 0
      %3819 = vmatpush.bf16.msra.mxu0 0
      %3820 = vmatpush.bf16.msra.mxu0 0
      %3821 = vmatpush.bf16.msra.mxu0 0
      %3822 = vmatpush.bf16.msra.mxu0 0
      %3823 = vmatpush.bf16.msra.mxu0 0
      %3824 = vmatpush.bf16.msra.mxu0 0
      %3825 = vmatpush.bf16.msra.mxu0 %v3788
      %3826 = vmatmul.bf16.gmra.mxu0 %v3782
      %v3827 = vpop.f32.mrf.mxu0
      %v3828 = vadd.f32 0.0, %v3827
      %v3829 = vpop.f32.mrf.mxu0
      %3830 = vdwg.mxu0
      %3831 = vmatpush.bf16.msra.mxu0 0
      %3832 = vmatpush.bf16.msra.mxu0 0
      %3833 = vmatpush.bf16.msra.mxu0 0
      %3834 = vmatpush.bf16.msra.mxu0 0
      %3835 = vmatpush.bf16.msra.mxu0 0
      %3836 = vmatpush.bf16.msra.mxu0 0
      %3837 = vmatpush.bf16.msra.mxu0 0
      %3838 = vmatpush.bf16.msra.mxu0 %v3791
      %3839 = vmatmul.bf16.gmra.mxu0 %v3782
      %v3840 = vpop.f32.mrf.mxu0
      %v3841 = vadd.f32 0.0, %v3840
      %v3842 = vpop.f32.mrf.mxu0
      %3843 = vdwg.mxu0
      %3844 = vmatpush.bf16.msra.mxu0 0
      %3845 = vmatpush.bf16.msra.mxu0 0
      %3846 = vmatpush.bf16.msra.mxu0 0
      %3847 = vmatpush.bf16.msra.mxu0 0
      %3848 = vmatpush.bf16.msra.mxu0 0
      %3849 = vmatpush.bf16.msra.mxu0 0
      %3850 = vmatpush.bf16.msra.mxu0 0
      %3851 = vmatpush.bf16.msra.mxu0 %v3794
      %3852 = vmatmul.bf16.gmra.mxu0 %v3782
      %v3853 = vpop.f32.mrf.mxu0
      %v3854 = vadd.f32 0.0, %v3853
      %v3855 = vpop.f32.mrf.mxu0
      %3856 = vdwg.mxu0
      %3857 = vmatpush.bf16.msra.mxu0 0
      %3858 = vmatpush.bf16.msra.mxu0 0
      %3859 = vmatpush.bf16.msra.mxu0 0
      %3860 = vmatpush.bf16.msra.mxu0 0
      %3861 = vmatpush.bf16.msra.mxu0 0
      %3862 = vmatpush.bf16.msra.mxu0 0
      %3863 = vmatpush.bf16.msra.mxu0 0
      %3864 = vmatpush.bf16.msra.mxu0 %v3797
      %3865 = vmatmul.bf16.gmra.mxu0 %v3782
      %v3866 = vpop.f32.mrf.mxu0
      %v3867 = vadd.f32 0.0, %v3866
      %v3868 = vpop.f32.mrf.mxu0
      %3869 = vdwg.mxu0
      %3870 = vmatpush.bf16.msra.mxu0 0
      %3871 = vmatpush.bf16.msra.mxu0 0
      %3872 = vmatpush.bf16.msra.mxu0 0
      %3873 = vmatpush.bf16.msra.mxu0 0
      %3874 = vmatpush.bf16.msra.mxu0 0
      %3875 = vmatpush.bf16.msra.mxu0 0
      %3876 = vmatpush.bf16.msra.mxu0 0
      %3877 = vmatpush.bf16.msra.mxu0 %v3800
      %3878 = vmatmul.bf16.gmra.mxu0 %v3782
      %v3879 = vpop.f32.mrf.mxu0
      %v3880 = vadd.f32 0.0, %v3879
      %v3881 = vpop.f32.mrf.mxu0
      %3882 = vdwg.mxu0
      %3883 = vmatpush.bf16.msra.mxu0 0
      %3884 = vmatpush.bf16.msra.mxu0 0
      %3885 = vmatpush.bf16.msra.mxu0 0
      %3886 = vmatpush.bf16.msra.mxu0 0
      %3887 = vmatpush.bf16.msra.mxu0 0
      %3888 = vmatpush.bf16.msra.mxu0 0
      %3889 = vmatpush.bf16.msra.mxu0 0
      %3890 = vmatpush.bf16.msra.mxu0 %v3803
      %3891 = vmatmul.bf16.gmra.mxu0 %v3782
      %v3892 = vpop.f32.mrf.mxu0
      %v3893 = vadd.f32 0.0, %v3892
      %v3894 = vpop.f32.mrf.mxu0
      %3895 = vdwg.mxu0
      %v3896 = vadd.f32 %v3728, %v3815
      %v3897 = vadd.f32 %v3729, %v3828
      %v3898 = vadd.f32 %v3730, %v3841
      %v3899 = vadd.f32 %v3731, %v3854
      %v3900 = vadd.f32 %v3732, %v3867
      %v3901 = vadd.f32 %v3733, %v3880
      %v3902 = vadd.f32 %v3734, %v3893
      %s3903 = scalar_lea.vmem %s1, 88
      %v3904 = vld [vmem:[%s3903] sm:$0xf]
      %3905 = vst [vmem:[#allocation1] ss:$4 sm:$0xff] %v272
      %s3906 = scalar_lea.vmem [#allocation1], 32
      %3907 = vst [vmem:[%s3906] ss:$4 sm:$0xff] %v273
      %v3908 = vld.sshfl [vmem:[#allocation1 + $0x8] sm:$0xff pattern:$0x73625140]
      %v3910 = vld.sshfl [vmem:[#allocation1 + $0x10] sm:$0xff pattern:$0x73625140]
      %v3912 = vld.sshfl [vmem:[#allocation1 + $0x18] sm:$0xff pattern:$0x73625140]
      %v3914 = vld.sshfl [vmem:[#allocation1 + $0x20] sm:$0xff pattern:$0x73625140]
      %v3916 = vld.sshfl [vmem:[#allocation1 + $0x28] sm:$0xff pattern:$0x73625140]
      %v3918 = vld.sshfl [vmem:[#allocation1 + $0x30] sm:$0xff pattern:$0x73625140]
      %v3920 = vld.sshfl [vmem:[#allocation1 + $0x38] sm:$0xff pattern:$0x73625140]
      %3922 = vst [vmem:[#allocation1] ss:$4 sm:$0xff] %v274
      %v3923 = vld.sshfl [vmem:[#allocation1] sm:$0xff pattern:$0x73625140]
      %3925 = vrot.lane.b32.xlu0 %v3908, 45
      %v3926 = vpop.permute.xlu0 %3925
      %3927 = vrot.lane.b32.xlu0 %v3910, 45
      %v3928 = vpop.permute.xlu0 %3927
      %3929 = vrot.lane.b32.xlu0 %v3912, 45
      %v3930 = vpop.permute.xlu0 %3929
      %3931 = vrot.lane.b32.xlu0 %v3914, 45
      %v3932 = vpop.permute.xlu0 %3931
      %3933 = vrot.lane.b32.xlu0 %v3916, 45
      %v3934 = vpop.permute.xlu0 %3933
      %3935 = vrot.lane.b32.xlu0 %v3918, 45
      %v3936 = vpop.permute.xlu0 %3935
      %3937 = vrot.lane.b32.xlu0 %v3920, 45
      %v3938 = vpop.permute.xlu0 %3937
      %3939 = vrot.lane.b32.xlu0 %v3923, 45
      %v3940 = vpop.permute.xlu0 %3939
      %vm3941 = vcmask 367616
      %v3942 = vsel %vm3941, %v3926, %v3928
      %v3943 = vsel %vm3941, %v3928, %v3930
      %v3944 = vsel %vm3941, %v3930, %v3932
      %v3945 = vsel %vm3941, %v3932, %v3934
      %v3946 = vsel %vm3941, %v3934, %v3936
      %v3947 = vsel %vm3941, %v3936, %v3938
      %v3948 = vsel %vm3941, %v3938, %v3940
      %v3950 = vsel %vm323, %v3904, 0
      %v3953 = vsel %vm327, %v3942, 0
      %v3956 = vsel %vm327, %v3943, 0
      %v3959 = vsel %vm327, %v3944, 0
      %v3962 = vsel %vm327, %v3945, 0
      %v3965 = vsel %vm327, %v3946, 0
      %v3968 = vsel %vm327, %v3947, 0
      %v3971 = vsel %vm327, %v3948, 0
      %3973 = vmatpush.bf16.msra.mxu0 0
      %3974 = vmatpush.bf16.msra.mxu0 0
      %3975 = vmatpush.bf16.msra.mxu0 0
      %3976 = vmatpush.bf16.msra.mxu0 0
      %3977 = vmatpush.bf16.msra.mxu0 0
      %3978 = vmatpush.bf16.msra.mxu0 0
      %3979 = vmatpush.bf16.msra.mxu0 0
      %3980 = vmatpush.bf16.msra.mxu0 %v3953
      %3981 = vmatmul.bf16.gmra.mxu0 %v3950
      %v3982 = vpop.f32.mrf.mxu0
      %v3983 = vadd.f32 0.0, %v3982
      %v3984 = vpop.f32.mrf.mxu0
      %3985 = vdwg.mxu0
      %3986 = vmatpush.bf16.msra.mxu0 0
      %3987 = vmatpush.bf16.msra.mxu0 0
      %3988 = vmatpush.bf16.msra.mxu0 0
      %3989 = vmatpush.bf16.msra.mxu0 0
      %3990 = vmatpush.bf16.msra.mxu0 0
      %3991 = vmatpush.bf16.msra.mxu0 0
      %3992 = vmatpush.bf16.msra.mxu0 0
      %3993 = vmatpush.bf16.msra.mxu0 %v3956
      %3994 = vmatmul.bf16.gmra.mxu0 %v3950
      %v3995 = vpop.f32.mrf.mxu0
      %v3996 = vadd.f32 0.0, %v3995
      %v3997 = vpop.f32.mrf.mxu0
      %3998 = vdwg.mxu0
      %3999 = vmatpush.bf16.msra.mxu0 0
      %4000 = vmatpush.bf16.msra.mxu0 0
      %4001 = vmatpush.bf16.msra.mxu0 0
      %4002 = vmatpush.bf16.msra.mxu0 0
      %4003 = vmatpush.bf16.msra.mxu0 0
      %4004 = vmatpush.bf16.msra.mxu0 0
      %4005 = vmatpush.bf16.msra.mxu0 0
      %4006 = vmatpush.bf16.msra.mxu0 %v3959
      %4007 = vmatmul.bf16.gmra.mxu0 %v3950
      %v4008 = vpop.f32.mrf.mxu0
      %v4009 = vadd.f32 0.0, %v4008
      %v4010 = vpop.f32.mrf.mxu0
      %4011 = vdwg.mxu0
      %4012 = vmatpush.bf16.msra.mxu0 0
      %4013 = vmatpush.bf16.msra.mxu0 0
      %4014 = vmatpush.bf16.msra.mxu0 0
      %4015 = vmatpush.bf16.msra.mxu0 0
      %4016 = vmatpush.bf16.msra.mxu0 0
      %4017 = vmatpush.bf16.msra.mxu0 0
      %4018 = vmatpush.bf16.msra.mxu0 0
      %4019 = vmatpush.bf16.msra.mxu0 %v3962
      %4020 = vmatmul.bf16.gmra.mxu0 %v3950
      %v4021 = vpop.f32.mrf.mxu0
      %v4022 = vadd.f32 0.0, %v4021
      %v4023 = vpop.f32.mrf.mxu0
      %4024 = vdwg.mxu0
      %4025 = vmatpush.bf16.msra.mxu0 0
      %4026 = vmatpush.bf16.msra.mxu0 0
      %4027 = vmatpush.bf16.msra.mxu0 0
      %4028 = vmatpush.bf16.msra.mxu0 0
      %4029 = vmatpush.bf16.msra.mxu0 0
      %4030 = vmatpush.bf16.msra.mxu0 0
      %4031 = vmatpush.bf16.msra.mxu0 0
      %4032 = vmatpush.bf16.msra.mxu0 %v3965
      %4033 = vmatmul.bf16.gmra.mxu0 %v3950
      %v4034 = vpop.f32.mrf.mxu0
      %v4035 = vadd.f32 0.0, %v4034
      %v4036 = vpop.f32.mrf.mxu0
      %4037 = vdwg.mxu0
      %4038 = vmatpush.bf16.msra.mxu0 0
      %4039 = vmatpush.bf16.msra.mxu0 0
      %4040 = vmatpush.bf16.msra.mxu0 0
      %4041 = vmatpush.bf16.msra.mxu0 0
      %4042 = vmatpush.bf16.msra.mxu0 0
      %4043 = vmatpush.bf16.msra.mxu0 0
      %4044 = vmatpush.bf16.msra.mxu0 0
      %4045 = vmatpush.bf16.msra.mxu0 %v3968
      %4046 = vmatmul.bf16.gmra.mxu0 %v3950
      %v4047 = vpop.f32.mrf.mxu0
      %v4048 = vadd.f32 0.0, %v4047
      %v4049 = vpop.f32.mrf.mxu0
      %4050 = vdwg.mxu0
      %4051 = vmatpush.bf16.msra.mxu0 0
      %4052 = vmatpush.bf16.msra.mxu0 0
      %4053 = vmatpush.bf16.msra.mxu0 0
      %4054 = vmatpush.bf16.msra.mxu0 0
      %4055 = vmatpush.bf16.msra.mxu0 0
      %4056 = vmatpush.bf16.msra.mxu0 0
      %4057 = vmatpush.bf16.msra.mxu0 0
      %4058 = vmatpush.bf16.msra.mxu0 %v3971
      %4059 = vmatmul.bf16.gmra.mxu0 %v3950
      %v4060 = vpop.f32.mrf.mxu0
      %v4061 = vadd.f32 0.0, %v4060
      %v4062 = vpop.f32.mrf.mxu0
      %4063 = vdwg.mxu0
      %v4064 = vadd.f32 %v3896, %v3983
      %v4065 = vadd.f32 %v3897, %v3996
      %v4066 = vadd.f32 %v3898, %v4009
      %v4067 = vadd.f32 %v3899, %v4022
      %v4068 = vadd.f32 %v3900, %v4035
      %v4069 = vadd.f32 %v3901, %v4048
      %v4070 = vadd.f32 %v3902, %v4061
      %s4071 = scalar_lea.vmem %s1, 92
      %v4072 = vld [vmem:[%s4071] sm:$0xf]
      %4073 = vst [vmem:[#allocation1] ss:$4 sm:$0xff] %v272
      %s4074 = scalar_lea.vmem [#allocation1], 32
      %4075 = vst [vmem:[%s4074] ss:$4 sm:$0xff] %v273
      %v4076 = vld.sshfl [vmem:[#allocation1 + $0x8] sm:$0xff pattern:$0x73625140]
      %v4078 = vld.sshfl [vmem:[#allocation1 + $0x10] sm:$0xff pattern:$0x73625140]
      %v4080 = vld.sshfl [vmem:[#allocation1 + $0x18] sm:$0xff pattern:$0x73625140]
      %v4082 = vld.sshfl [vmem:[#allocation1 + $0x20] sm:$0xff pattern:$0x73625140]
      %v4084 = vld.sshfl [vmem:[#allocation1 + $0x28] sm:$0xff pattern:$0x73625140]
      %v4086 = vld.sshfl [vmem:[#allocation1 + $0x30] sm:$0xff pattern:$0x73625140]
      %v4088 = vld.sshfl [vmem:[#allocation1 + $0x38] sm:$0xff pattern:$0x73625140]
      %4090 = vst [vmem:[#allocation1] ss:$4 sm:$0xff] %v274
      %v4091 = vld.sshfl [vmem:[#allocation1] sm:$0xff pattern:$0x73625140]
      %4093 = vrot.lane.b32.xlu0 %v4076, 44
      %v4094 = vpop.permute.xlu0 %4093
      %4095 = vrot.lane.b32.xlu0 %v4078, 44
      %v4096 = vpop.permute.xlu0 %4095
      %4097 = vrot.lane.b32.xlu0 %v4080, 44
      %v4098 = vpop.permute.xlu0 %4097
      %4099 = vrot.lane.b32.xlu0 %v4082, 44
      %v4100 = vpop.permute.xlu0 %4099
      %4101 = vrot.lane.b32.xlu0 %v4084, 44
      %v4102 = vpop.permute.xlu0 %4101
      %4103 = vrot.lane.b32.xlu0 %v4086, 44
      %v4104 = vpop.permute.xlu0 %4103
      %4105 = vrot.lane.b32.xlu0 %v4088, 44
      %v4106 = vpop.permute.xlu0 %4105
      %4107 = vrot.lane.b32.xlu0 %v4091, 44
      %v4108 = vpop.permute.xlu0 %4107
      %vm4109 = vcmask 359424
      %v4110 = vsel %vm4109, %v4094, %v4096
      %v4111 = vsel %vm4109, %v4096, %v4098
      %v4112 = vsel %vm4109, %v4098, %v4100
      %v4113 = vsel %vm4109, %v4100, %v4102
      %v4114 = vsel %vm4109, %v4102, %v4104
      %v4115 = vsel %vm4109, %v4104, %v4106
      %v4116 = vsel %vm4109, %v4106, %v4108
      %v4118 = vsel %vm323, %v4072, 0
      %v4121 = vsel %vm327, %v4110, 0
      %v4124 = vsel %vm327, %v4111, 0
      %v4127 = vsel %vm327, %v4112, 0
      %v4130 = vsel %vm327, %v4113, 0
      %v4133 = vsel %vm327, %v4114, 0
      %v4136 = vsel %vm327, %v4115, 0
      %v4139 = vsel %vm327, %v4116, 0
      %4141 = vmatpush.bf16.msra.mxu0 0
      %4142 = vmatpush.bf16.msra.mxu0 0
      %4143 = vmatpush.bf16.msra.mxu0 0
      %4144 = vmatpush.bf16.msra.mxu0 0
      %4145 = vmatpush.bf16.msra.mxu0 0
      %4146 = vmatpush.bf16.msra.mxu0 0
      %4147 = vmatpush.bf16.msra.mxu0 0
      %4148 = vmatpush.bf16.msra.mxu0 %v4121
      %4149 = vmatmul.bf16.gmra.mxu0 %v4118
      %v4150 = vpop.f32.mrf.mxu0
      %v4151 = vadd.f32 0.0, %v4150
      %v4152 = vpop.f32.mrf.mxu0
      %4153 = vdwg.mxu0
      %4154 = vmatpush.bf16.msra.mxu0 0
      %4155 = vmatpush.bf16.msra.mxu0 0
      %4156 = vmatpush.bf16.msra.mxu0 0
      %4157 = vmatpush.bf16.msra.mxu0 0
      %4158 = vmatpush.bf16.msra.mxu0 0
      %4159 = vmatpush.bf16.msra.mxu0 0
      %4160 = vmatpush.bf16.msra.mxu0 0
      %4161 = vmatpush.bf16.msra.mxu0 %v4124
      %4162 = vmatmul.bf16.gmra.mxu0 %v4118
      %v4163 = vpop.f32.mrf.mxu0
      %v4164 = vadd.f32 0.0, %v4163
      %v4165 = vpop.f32.mrf.mxu0
      %4166 = vdwg.mxu0
      %4167 = vmatpush.bf16.msra.mxu0 0
      %4168 = vmatpush.bf16.msra.mxu0 0
      %4169 = vmatpush.bf16.msra.mxu0 0
      %4170 = vmatpush.bf16.msra.mxu0 0
      %4171 = vmatpush.bf16.msra.mxu0 0
      %4172 = vmatpush.bf16.msra.mxu0 0
      %4173 = vmatpush.bf16.msra.mxu0 0
      %4174 = vmatpush.bf16.msra.mxu0 %v4127
      %4175 = vmatmul.bf16.gmra.mxu0 %v4118
      %v4176 = vpop.f32.mrf.mxu0
      %v4177 = vadd.f32 0.0, %v4176
      %v4178 = vpop.f32.mrf.mxu0
      %4179 = vdwg.mxu0
      %4180 = vmatpush.bf16.msra.mxu0 0
      %4181 = vmatpush.bf16.msra.mxu0 0
      %4182 = vmatpush.bf16.msra.mxu0 0
      %4183 = vmatpush.bf16.msra.mxu0 0
      %4184 = vmatpush.bf16.msra.mxu0 0
      %4185 = vmatpush.bf16.msra.mxu0 0
      %4186 = vmatpush.bf16.msra.mxu0 0
      %4187 = vmatpush.bf16.msra.mxu0 %v4130
      %4188 = vmatmul.bf16.gmra.mxu0 %v4118
      %v4189 = vpop.f32.mrf.mxu0
      %v4190 = vadd.f32 0.0, %v4189
      %v4191 = vpop.f32.mrf.mxu0
      %4192 = vdwg.mxu0
      %4193 = vmatpush.bf16.msra.mxu0 0
      %4194 = vmatpush.bf16.msra.mxu0 0
      %4195 = vmatpush.bf16.msra.mxu0 0
      %4196 = vmatpush.bf16.msra.mxu0 0
      %4197 = vmatpush.bf16.msra.mxu0 0
      %4198 = vmatpush.bf16.msra.mxu0 0
      %4199 = vmatpush.bf16.msra.mxu0 0
      %4200 = vmatpush.bf16.msra.mxu0 %v4133
      %4201 = vmatmul.bf16.gmra.mxu0 %v4118
      %v4202 = vpop.f32.mrf.mxu0
      %v4203 = vadd.f32 0.0, %v4202
      %v4204 = vpop.f32.mrf.mxu0
      %4205 = vdwg.mxu0
      %4206 = vmatpush.bf16.msra.mxu0 0
      %4207 = vmatpush.bf16.msra.mxu0 0
      %4208 = vmatpush.bf16.msra.mxu0 0
      %4209 = vmatpush.bf16.msra.mxu0 0
      %4210 = vmatpush.bf16.msra.mxu0 0
      %4211 = vmatpush.bf16.msra.mxu0 0
      %4212 = vmatpush.bf16.msra.mxu0 0
      %4213 = vmatpush.bf16.msra.mxu0 %v4136
      %4214 = vmatmul.bf16.gmra.mxu0 %v4118
      %v4215 = vpop.f32.mrf.mxu0
      %v4216 = vadd.f32 0.0, %v4215
      %v4217 = vpop.f32.mrf.mxu0
      %4218 = vdwg.mxu0
      %4219 = vmatpush.bf16.msra.mxu0 0
      %4220 = vmatpush.bf16.msra.mxu0 0
      %4221 = vmatpush.bf16.msra.mxu0 0
      %4222 = vmatpush.bf16.msra.mxu0 0
      %4223 = vmatpush.bf16.msra.mxu0 0
      %4224 = vmatpush.bf16.msra.mxu0 0
      %4225 = vmatpush.bf16.msra.mxu0 0
      %4226 = vmatpush.bf16.msra.mxu0 %v4139
      %4227 = vmatmul.bf16.gmra.mxu0 %v4118
      %v4228 = vpop.f32.mrf.mxu0
      %v4229 = vadd.f32 0.0, %v4228
      %v4230 = vpop.f32.mrf.mxu0
      %4231 = vdwg.mxu0
      %v4232 = vadd.f32 %v4064, %v4151
      %v4233 = vadd.f32 %v4065, %v4164
      %v4234 = vadd.f32 %v4066, %v4177
      %v4235 = vadd.f32 %v4067, %v4190
      %v4236 = vadd.f32 %v4068, %v4203
      %v4237 = vadd.f32 %v4069, %v4216
      %v4238 = vadd.f32 %v4070, %v4229
      %s4239 = scalar_lea.vmem %s1, 96
      %v4240 = vld [vmem:[%s4239] sm:$0xf]
      %4241 = vst [vmem:[#allocation1] ss:$4 sm:$0xff] %v272
      %s4242 = scalar_lea.vmem [#allocation1], 32
      %4243 = vst [vmem:[%s4242] ss:$4 sm:$0xff] %v273
      %v4244 = vld.sshfl [vmem:[#allocation1 + $0x8] sm:$0xff pattern:$0x73625140]
      %v4246 = vld.sshfl [vmem:[#allocation1 + $0x10] sm:$0xff pattern:$0x73625140]
      %v4248 = vld.sshfl [vmem:[#allocation1 + $0x18] sm:$0xff pattern:$0x73625140]
      %v4250 = vld.sshfl [vmem:[#allocation1 + $0x20] sm:$0xff pattern:$0x73625140]
      %v4252 = vld.sshfl [vmem:[#allocation1 + $0x28] sm:$0xff pattern:$0x73625140]
      %v4254 = vld.sshfl [vmem:[#allocation1 + $0x30] sm:$0xff pattern:$0x73625140]
      %v4256 = vld.sshfl [vmem:[#allocation1 + $0x38] sm:$0xff pattern:$0x73625140]
      %4258 = vst [vmem:[#allocation1] ss:$4 sm:$0xff] %v274
      %v4259 = vld.sshfl [vmem:[#allocation1] sm:$0xff pattern:$0x73625140]
      %4261 = vrot.lane.b32.xlu0 %v4244, 36
      %v4262 = vpop.permute.xlu0 %4261
      %4263 = vrot.lane.b32.xlu0 %v4246, 36
      %v4264 = vpop.permute.xlu0 %4263
      %4265 = vrot.lane.b32.xlu0 %v4248, 36
      %v4266 = vpop.permute.xlu0 %4265
      %4267 = vrot.lane.b32.xlu0 %v4250, 36
      %v4268 = vpop.permute.xlu0 %4267
      %4269 = vrot.lane.b32.xlu0 %v4252, 36
      %v4270 = vpop.permute.xlu0 %4269
      %4271 = vrot.lane.b32.xlu0 %v4254, 36
      %v4272 = vpop.permute.xlu0 %4271
      %4273 = vrot.lane.b32.xlu0 %v4256, 36
      %v4274 = vpop.permute.xlu0 %4273
      %4275 = vrot.lane.b32.xlu0 %v4259, 36
      %v4276 = vpop.permute.xlu0 %4275
      %vm4277 = vcmask 293888
      %v4278 = vsel %vm4277, %v4262, %v4264
      %v4279 = vsel %vm4277, %v4264, %v4266
      %v4280 = vsel %vm4277, %v4266, %v4268
      %v4281 = vsel %vm4277, %v4268, %v4270
      %v4282 = vsel %vm4277, %v4270, %v4272
      %v4283 = vsel %vm4277, %v4272, %v4274
      %v4284 = vsel %vm4277, %v4274, %v4276
      %v4286 = vsel %vm323, %v4240, 0
      %v4289 = vsel %vm327, %v4278, 0
      %v4292 = vsel %vm327, %v4279, 0
      %v4295 = vsel %vm327, %v4280, 0
      %v4298 = vsel %vm327, %v4281, 0
      %v4301 = vsel %vm327, %v4282, 0
      %v4304 = vsel %vm327, %v4283, 0
      %v4307 = vsel %vm327, %v4284, 0
      %4309 = vmatpush.bf16.msra.mxu0 0
      %4310 = vmatpush.bf16.msra.mxu0 0
      %4311 = vmatpush.bf16.msra.mxu0 0
      %4312 = vmatpush.bf16.msra.mxu0 0
      %4313 = vmatpush.bf16.msra.mxu0 0
      %4314 = vmatpush.bf16.msra.mxu0 0
      %4315 = vmatpush.bf16.msra.mxu0 0
      %4316 = vmatpush.bf16.msra.mxu0 %v4289
      %4317 = vmatmul.bf16.gmra.mxu0 %v4286
      %v4318 = vpop.f32.mrf.mxu0
      %v4319 = vadd.f32 0.0, %v4318
      %v4320 = vpop.f32.mrf.mxu0
      %4321 = vdwg.mxu0
      %4322 = vmatpush.bf16.msra.mxu0 0
      %4323 = vmatpush.bf16.msra.mxu0 0
      %4324 = vmatpush.bf16.msra.mxu0 0
      %4325 = vmatpush.bf16.msra.mxu0 0
      %4326 = vmatpush.bf16.msra.mxu0 0
      %4327 = vmatpush.bf16.msra.mxu0 0
      %4328 = vmatpush.bf16.msra.mxu0 0
      %4329 = vmatpush.bf16.msra.mxu0 %v4292
      %4330 = vmatmul.bf16.gmra.mxu0 %v4286
      %v4331 = vpop.f32.mrf.mxu0
      %v4332 = vadd.f32 0.0, %v4331
      %v4333 = vpop.f32.mrf.mxu0
      %4334 = vdwg.mxu0
      %4335 = vmatpush.bf16.msra.mxu0 0
      %4336 = vmatpush.bf16.msra.mxu0 0
      %4337 = vmatpush.bf16.msra.mxu0 0
      %4338 = vmatpush.bf16.msra.mxu0 0
      %4339 = vmatpush.bf16.msra.mxu0 0
      %4340 = vmatpush.bf16.msra.mxu0 0
      %4341 = vmatpush.bf16.msra.mxu0 0
      %4342 = vmatpush.bf16.msra.mxu0 %v4295
      %4343 = vmatmul.bf16.gmra.mxu0 %v4286
      %v4344 = vpop.f32.mrf.mxu0
      %v4345 = vadd.f32 0.0, %v4344
      %v4346 = vpop.f32.mrf.mxu0
      %4347 = vdwg.mxu0
      %4348 = vmatpush.bf16.msra.mxu0 0
      %4349 = vmatpush.bf16.msra.mxu0 0
      %4350 = vmatpush.bf16.msra.mxu0 0
      %4351 = vmatpush.bf16.msra.mxu0 0
      %4352 = vmatpush.bf16.msra.mxu0 0
      %4353 = vmatpush.bf16.msra.mxu0 0
      %4354 = vmatpush.bf16.msra.mxu0 0
      %4355 = vmatpush.bf16.msra.mxu0 %v4298
      %4356 = vmatmul.bf16.gmra.mxu0 %v4286
      %v4357 = vpop.f32.mrf.mxu0
      %v4358 = vadd.f32 0.0, %v4357
      %v4359 = vpop.f32.mrf.mxu0
      %4360 = vdwg.mxu0
      %4361 = vmatpush.bf16.msra.mxu0 0
      %4362 = vmatpush.bf16.msra.mxu0 0
      %4363 = vmatpush.bf16.msra.mxu0 0
      %4364 = vmatpush.bf16.msra.mxu0 0
      %4365 = vmatpush.bf16.msra.mxu0 0
      %4366 = vmatpush.bf16.msra.mxu0 0
      %4367 = vmatpush.bf16.msra.mxu0 0
      %4368 = vmatpush.bf16.msra.mxu0 %v4301
      %4369 = vmatmul.bf16.gmra.mxu0 %v4286
      %v4370 = vpop.f32.mrf.mxu0
      %v4371 = vadd.f32 0.0, %v4370
      %v4372 = vpop.f32.mrf.mxu0
      %4373 = vdwg.mxu0
      %4374 = vmatpush.bf16.msra.mxu0 0
      %4375 = vmatpush.bf16.msra.mxu0 0
      %4376 = vmatpush.bf16.msra.mxu0 0
      %4377 = vmatpush.bf16.msra.mxu0 0
      %4378 = vmatpush.bf16.msra.mxu0 0
      %4379 = vmatpush.bf16.msra.mxu0 0
      %4380 = vmatpush.bf16.msra.mxu0 0
      %4381 = vmatpush.bf16.msra.mxu0 %v4304
      %4382 = vmatmul.bf16.gmra.mxu0 %v4286
      %v4383 = vpop.f32.mrf.mxu0
      %v4384 = vadd.f32 0.0, %v4383
      %v4385 = vpop.f32.mrf.mxu0
      %4386 = vdwg.mxu0
      %4387 = vmatpush.bf16.msra.mxu0 0
      %4388 = vmatpush.bf16.msra.mxu0 0
      %4389 = vmatpush.bf16.msra.mxu0 0
      %4390 = vmatpush.bf16.msra.mxu0 0
      %4391 = vmatpush.bf16.msra.mxu0 0
      %4392 = vmatpush.bf16.msra.mxu0 0
      %4393 = vmatpush.bf16.msra.mxu0 0
      %4394 = vmatpush.bf16.msra.mxu0 %v4307
      %4395 = vmatmul.bf16.gmra.mxu0 %v4286
      %v4396 = vpop.f32.mrf.mxu0
      %v4397 = vadd.f32 0.0, %v4396
      %v4398 = vpop.f32.mrf.mxu0
      %4399 = vdwg.mxu0
      %v4400 = vadd.f32 %v4232, %v4319
      %v4401 = vadd.f32 %v4233, %v4332
      %v4402 = vadd.f32 %v4234, %v4345
      %v4403 = vadd.f32 %v4235, %v4358
      %v4404 = vadd.f32 %v4236, %v4371
      %v4405 = vadd.f32 %v4237, %v4384
      %v4406 = vadd.f32 %v4238, %v4397
      %s4407 = scalar_lea.vmem %s1, 100
      %v4408 = vld [vmem:[%s4407] sm:$0xf]
      %4409 = vst [vmem:[#allocation1] ss:$4 sm:$0xff] %v272
      %s4410 = scalar_lea.vmem [#allocation1], 32
      %4411 = vst [vmem:[%s4410] ss:$4 sm:$0xff] %v273
      %v4412 = vld.sshfl [vmem:[#allocation1 + $0x8] sm:$0xff pattern:$0x73625140]
      %v4414 = vld.sshfl [vmem:[#allocation1 + $0x10] sm:$0xff pattern:$0x73625140]
      %v4416 = vld.sshfl [vmem:[#allocation1 + $0x18] sm:$0xff pattern:$0x73625140]
      %v4418 = vld.sshfl [vmem:[#allocation1 + $0x20] sm:$0xff pattern:$0x73625140]
      %v4420 = vld.sshfl [vmem:[#allocation1 + $0x28] sm:$0xff pattern:$0x73625140]
      %v4422 = vld.sshfl [vmem:[#allocation1 + $0x30] sm:$0xff pattern:$0x73625140]
      %v4424 = vld.sshfl [vmem:[#allocation1 + $0x38] sm:$0xff pattern:$0x73625140]
      %4426 = vst [vmem:[#allocation1] ss:$4 sm:$0xff] %v274
      %v4427 = vld.sshfl [vmem:[#allocation1] sm:$0xff pattern:$0x73625140]
      %4429 = vrot.lane.b32.xlu0 %v4412, 35
      %v4430 = vpop.permute.xlu0 %4429
      %4431 = vrot.lane.b32.xlu0 %v4414, 35
      %v4432 = vpop.permute.xlu0 %4431
      %4433 = vrot.lane.b32.xlu0 %v4416, 35
      %v4434 = vpop.permute.xlu0 %4433
      %4435 = vrot.lane.b32.xlu0 %v4418, 35
      %v4436 = vpop.permute.xlu0 %4435
      %4437 = vrot.lane.b32.xlu0 %v4420, 35
      %v4438 = vpop.permute.xlu0 %4437
      %4439 = vrot.lane.b32.xlu0 %v4422, 35
      %v4440 = vpop.permute.xlu0 %4439
      %4441 = vrot.lane.b32.xlu0 %v4424, 35
      %v4442 = vpop.permute.xlu0 %4441
      %4443 = vrot.lane.b32.xlu0 %v4427, 35
      %v4444 = vpop.permute.xlu0 %4443
      %vm4445 = vcmask 285696
      %v4446 = vsel %vm4445, %v4430, %v4432
      %v4447 = vsel %vm4445, %v4432, %v4434
      %v4448 = vsel %vm4445, %v4434, %v4436
      %v4449 = vsel %vm4445, %v4436, %v4438
      %v4450 = vsel %vm4445, %v4438, %v4440
      %v4451 = vsel %vm4445, %v4440, %v4442
      %v4452 = vsel %vm4445, %v4442, %v4444
      %v4454 = vsel %vm323, %v4408, 0
      %v4457 = vsel %vm327, %v4446, 0
      %v4460 = vsel %vm327, %v4447, 0
      %v4463 = vsel %vm327, %v4448, 0
      %v4466 = vsel %vm327, %v4449, 0
      %v4469 = vsel %vm327, %v4450, 0
      %v4472 = vsel %vm327, %v4451, 0
      %v4475 = vsel %vm327, %v4452, 0
      %4477 = vmatpush.bf16.msra.mxu0 0
      %4478 = vmatpush.bf16.msra.mxu0 0
      %4479 = vmatpush.bf16.msra.mxu0 0
      %4480 = vmatpush.bf16.msra.mxu0 0
      %4481 = vmatpush.bf16.msra.mxu0 0
      %4482 = vmatpush.bf16.msra.mxu0 0
      %4483 = vmatpush.bf16.msra.mxu0 0
      %4484 = vmatpush.bf16.msra.mxu0 %v4457
      %4485 = vmatmul.bf16.gmra.mxu0 %v4454
      %v4486 = vpop.f32.mrf.mxu0
      %v4487 = vadd.f32 0.0, %v4486
      %v4488 = vpop.f32.mrf.mxu0
      %4489 = vdwg.mxu0
      %4490 = vmatpush.bf16.msra.mxu0 0
      %4491 = vmatpush.bf16.msra.mxu0 0
      %4492 = vmatpush.bf16.msra.mxu0 0
      %4493 = vmatpush.bf16.msra.mxu0 0
      %4494 = vmatpush.bf16.msra.mxu0 0
      %4495 = vmatpush.bf16.msra.mxu0 0
      %4496 = vmatpush.bf16.msra.mxu0 0
      %4497 = vmatpush.bf16.msra.mxu0 %v4460
      %4498 = vmatmul.bf16.gmra.mxu0 %v4454
      %v4499 = vpop.f32.mrf.mxu0
      %v4500 = vadd.f32 0.0, %v4499
      %v4501 = vpop.f32.mrf.mxu0
      %4502 = vdwg.mxu0
      %4503 = vmatpush.bf16.msra.mxu0 0
      %4504 = vmatpush.bf16.msra.mxu0 0
      %4505 = vmatpush.bf16.msra.mxu0 0
      %4506 = vmatpush.bf16.msra.mxu0 0
      %4507 = vmatpush.bf16.msra.mxu0 0
      %4508 = vmatpush.bf16.msra.mxu0 0
      %4509 = vmatpush.bf16.msra.mxu0 0
      %4510 = vmatpush.bf16.msra.mxu0 %v4463
      %4511 = vmatmul.bf16.gmra.mxu0 %v4454
      %v4512 = vpop.f32.mrf.mxu0
      %v4513 = vadd.f32 0.0, %v4512
      %v4514 = vpop.f32.mrf.mxu0
      %4515 = vdwg.mxu0
      %4516 = vmatpush.bf16.msra.mxu0 0
      %4517 = vmatpush.bf16.msra.mxu0 0
      %4518 = vmatpush.bf16.msra.mxu0 0
      %4519 = vmatpush.bf16.msra.mxu0 0
      %4520 = vmatpush.bf16.msra.mxu0 0
      %4521 = vmatpush.bf16.msra.mxu0 0
      %4522 = vmatpush.bf16.msra.mxu0 0
      %4523 = vmatpush.bf16.msra.mxu0 %v4466
      %4524 = vmatmul.bf16.gmra.mxu0 %v4454
      %v4525 = vpop.f32.mrf.mxu0
      %v4526 = vadd.f32 0.0, %v4525
      %v4527 = vpop.f32.mrf.mxu0
      %4528 = vdwg.mxu0
      %4529 = vmatpush.bf16.msra.mxu0 0
      %4530 = vmatpush.bf16.msra.mxu0 0
      %4531 = vmatpush.bf16.msra.mxu0 0
      %4532 = vmatpush.bf16.msra.mxu0 0
      %4533 = vmatpush.bf16.msra.mxu0 0
      %4534 = vmatpush.bf16.msra.mxu0 0
      %4535 = vmatpush.bf16.msra.mxu0 0
      %4536 = vmatpush.bf16.msra.mxu0 %v4469
      %4537 = vmatmul.bf16.gmra.mxu0 %v4454
      %v4538 = vpop.f32.mrf.mxu0
      %v4539 = vadd.f32 0.0, %v4538
      %v4540 = vpop.f32.mrf.mxu0
      %4541 = vdwg.mxu0
      %4542 = vmatpush.bf16.msra.mxu0 0
      %4543 = vmatpush.bf16.msra.mxu0 0
      %4544 = vmatpush.bf16.msra.mxu0 0
      %4545 = vmatpush.bf16.msra.mxu0 0
      %4546 = vmatpush.bf16.msra.mxu0 0
      %4547 = vmatpush.bf16.msra.mxu0 0
      %4548 = vmatpush.bf16.msra.mxu0 0
      %4549 = vmatpush.bf16.msra.mxu0 %v4472
      %4550 = vmatmul.bf16.gmra.mxu0 %v4454
      %v4551 = vpop.f32.mrf.mxu0
      %v4552 = vadd.f32 0.0, %v4551
      %v4553 = vpop.f32.mrf.mxu0
      %4554 = vdwg.mxu0
      %4555 = vmatpush.bf16.msra.mxu0 0
      %4556 = vmatpush.bf16.msra.mxu0 0
      %4557 = vmatpush.bf16.msra.mxu0 0
      %4558 = vmatpush.bf16.msra.mxu0 0
      %4559 = vmatpush.bf16.msra.mxu0 0
      %4560 = vmatpush.bf16.msra.mxu0 0
      %4561 = vmatpush.bf16.msra.mxu0 0
      %4562 = vmatpush.bf16.msra.mxu0 %v4475
      %4563 = vmatmul.bf16.gmra.mxu0 %v4454
      %v4564 = vpop.f32.mrf.mxu0
      %v4565 = vadd.f32 0.0, %v4564
      %v4566 = vpop.f32.mrf.mxu0
      %4567 = vdwg.mxu0
      %v4568 = vadd.f32 %v4400, %v4487
      %v4569 = vadd.f32 %v4401, %v4500
      %v4570 = vadd.f32 %v4402, %v4513
      %v4571 = vadd.f32 %v4403, %v4526
      %v4572 = vadd.f32 %v4404, %v4539
      %v4573 = vadd.f32 %v4405, %v4552
      %v4574 = vadd.f32 %v4406, %v4565
      %s4575 = scalar_lea.vmem %s1, 104
      %v4576 = vld [vmem:[%s4575] sm:$0xf]
      %4577 = vst [vmem:[#allocation1] ss:$4 sm:$0xff] %v272
      %s4578 = scalar_lea.vmem [#allocation1], 32
      %4579 = vst [vmem:[%s4578] ss:$4 sm:$0xff] %v273
      %v4580 = vld.sshfl [vmem:[#allocation1 + $0x8] sm:$0xff pattern:$0x73625140]
      %v4582 = vld.sshfl [vmem:[#allocation1 + $0x10] sm:$0xff pattern:$0x73625140]
      %v4584 = vld.sshfl [vmem:[#allocation1 + $0x18] sm:$0xff pattern:$0x73625140]
      %v4586 = vld.sshfl [vmem:[#allocation1 + $0x20] sm:$0xff pattern:$0x73625140]
      %v4588 = vld.sshfl [vmem:[#allocation1 + $0x28] sm:$0xff pattern:$0x73625140]
      %v4590 = vld.sshfl [vmem:[#allocation1 + $0x30] sm:$0xff pattern:$0x73625140]
      %v4592 = vld.sshfl [vmem:[#allocation1 + $0x38] sm:$0xff pattern:$0x73625140]
      %4594 = vst [vmem:[#allocation1] ss:$4 sm:$0xff] %v274
      %v4595 = vld.sshfl [vmem:[#allocation1] sm:$0xff pattern:$0x73625140]
      %4597 = vrot.lane.b32.xlu0 %v4580, 34
      %v4598 = vpop.permute.xlu0 %4597
      %4599 = vrot.lane.b32.xlu0 %v4582, 34
      %v4600 = vpop.permute.xlu0 %4599
      %4601 = vrot.lane.b32.xlu0 %v4584, 34
      %v4602 = vpop.permute.xlu0 %4601
      %4603 = vrot.lane.b32.xlu0 %v4586, 34
      %v4604 = vpop.permute.xlu0 %4603
      %4605 = vrot.lane.b32.xlu0 %v4588, 34
      %v4606 = vpop.permute.xlu0 %4605
      %4607 = vrot.lane.b32.xlu0 %v4590, 34
      %v4608 = vpop.permute.xlu0 %4607
      %4609 = vrot.lane.b32.xlu0 %v4592, 34
      %v4610 = vpop.permute.xlu0 %4609
      %4611 = vrot.lane.b32.xlu0 %v4595, 34
      %v4612 = vpop.permute.xlu0 %4611
      %vm4613 = vcmask 277504
      %v4614 = vsel %vm4613, %v4598, %v4600
      %v4615 = vsel %vm4613, %v4600, %v4602
      %v4616 = vsel %vm4613, %v4602, %v4604
      %v4617 = vsel %vm4613, %v4604, %v4606
      %v4618 = vsel %vm4613, %v4606, %v4608
      %v4619 = vsel %vm4613, %v4608, %v4610
      %v4620 = vsel %vm4613, %v4610, %v4612
      %v4622 = vsel %vm323, %v4576, 0
      %v4625 = vsel %vm327, %v4614, 0
      %v4628 = vsel %vm327, %v4615, 0
      %v4631 = vsel %vm327, %v4616, 0
      %v4634 = vsel %vm327, %v4617, 0
      %v4637 = vsel %vm327, %v4618, 0
      %v4640 = vsel %vm327, %v4619, 0
      %v4643 = vsel %vm327, %v4620, 0
      %4645 = vmatpush.bf16.msra.mxu0 0
      %4646 = vmatpush.bf16.msra.mxu0 0
      %4647 = vmatpush.bf16.msra.mxu0 0
      %4648 = vmatpush.bf16.msra.mxu0 0
      %4649 = vmatpush.bf16.msra.mxu0 0
      %4650 = vmatpush.bf16.msra.mxu0 0
      %4651 = vmatpush.bf16.msra.mxu0 0
      %4652 = vmatpush.bf16.msra.mxu0 %v4625
      %4653 = vmatmul.bf16.gmra.mxu0 %v4622
      %v4654 = vpop.f32.mrf.mxu0
      %v4655 = vadd.f32 0.0, %v4654
      %v4656 = vpop.f32.mrf.mxu0
      %4657 = vdwg.mxu0
      %4658 = vmatpush.bf16.msra.mxu0 0
      %4659 = vmatpush.bf16.msra.mxu0 0
      %4660 = vmatpush.bf16.msra.mxu0 0
      %4661 = vmatpush.bf16.msra.mxu0 0
      %4662 = vmatpush.bf16.msra.mxu0 0
      %4663 = vmatpush.bf16.msra.mxu0 0
      %4664 = vmatpush.bf16.msra.mxu0 0
      %4665 = vmatpush.bf16.msra.mxu0 %v4628
      %4666 = vmatmul.bf16.gmra.mxu0 %v4622
      %v4667 = vpop.f32.mrf.mxu0
      %v4668 = vadd.f32 0.0, %v4667
      %v4669 = vpop.f32.mrf.mxu0
      %4670 = vdwg.mxu0
      %4671 = vmatpush.bf16.msra.mxu0 0
      %4672 = vmatpush.bf16.msra.mxu0 0
      %4673 = vmatpush.bf16.msra.mxu0 0
      %4674 = vmatpush.bf16.msra.mxu0 0
      %4675 = vmatpush.bf16.msra.mxu0 0
      %4676 = vmatpush.bf16.msra.mxu0 0
      %4677 = vmatpush.bf16.msra.mxu0 0
      %4678 = vmatpush.bf16.msra.mxu0 %v4631
      %4679 = vmatmul.bf16.gmra.mxu0 %v4622
      %v4680 = vpop.f32.mrf.mxu0
      %v4681 = vadd.f32 0.0, %v4680
      %v4682 = vpop.f32.mrf.mxu0
      %4683 = vdwg.mxu0
      %4684 = vmatpush.bf16.msra.mxu0 0
      %4685 = vmatpush.bf16.msra.mxu0 0
      %4686 = vmatpush.bf16.msra.mxu0 0
      %4687 = vmatpush.bf16.msra.mxu0 0
      %4688 = vmatpush.bf16.msra.mxu0 0
      %4689 = vmatpush.bf16.msra.mxu0 0
      %4690 = vmatpush.bf16.msra.mxu0 0
      %4691 = vmatpush.bf16.msra.mxu0 %v4634
      %4692 = vmatmul.bf16.gmra.mxu0 %v4622
      %v4693 = vpop.f32.mrf.mxu0
      %v4694 = vadd.f32 0.0, %v4693
      %v4695 = vpop.f32.mrf.mxu0
      %4696 = vdwg.mxu0
      %4697 = vmatpush.bf16.msra.mxu0 0
      %4698 = vmatpush.bf16.msra.mxu0 0
      %4699 = vmatpush.bf16.msra.mxu0 0
      %4700 = vmatpush.bf16.msra.mxu0 0
      %4701 = vmatpush.bf16.msra.mxu0 0
      %4702 = vmatpush.bf16.msra.mxu0 0
      %4703 = vmatpush.bf16.msra.mxu0 0
      %4704 = vmatpush.bf16.msra.mxu0 %v4637
      %4705 = vmatmul.bf16.gmra.mxu0 %v4622
      %v4706 = vpop.f32.mrf.mxu0
      %v4707 = vadd.f32 0.0, %v4706
      %v4708 = vpop.f32.mrf.mxu0
      %4709 = vdwg.mxu0
      %4710 = vmatpush.bf16.msra.mxu0 0
      %4711 = vmatpush.bf16.msra.mxu0 0
      %4712 = vmatpush.bf16.msra.mxu0 0
      %4713 = vmatpush.bf16.msra.mxu0 0
      %4714 = vmatpush.bf16.msra.mxu0 0
      %4715 = vmatpush.bf16.msra.mxu0 0
      %4716 = vmatpush.bf16.msra.mxu0 0
      %4717 = vmatpush.bf16.msra.mxu0 %v4640
      %4718 = vmatmul.bf16.gmra.mxu0 %v4622
      %v4719 = vpop.f32.mrf.mxu0
      %v4720 = vadd.f32 0.0, %v4719
      %v4721 = vpop.f32.mrf.mxu0
      %4722 = vdwg.mxu0
      %4723 = vmatpush.bf16.msra.mxu0 0
      %4724 = vmatpush.bf16.msra.mxu0 0
      %4725 = vmatpush.bf16.msra.mxu0 0
      %4726 = vmatpush.bf16.msra.mxu0 0
      %4727 = vmatpush.bf16.msra.mxu0 0
      %4728 = vmatpush.bf16.msra.mxu0 0
      %4729 = vmatpush.bf16.msra.mxu0 0
      %4730 = vmatpush.bf16.msra.mxu0 %v4643
      %4731 = vmatmul.bf16.gmra.mxu0 %v4622
      %v4732 = vpop.f32.mrf.mxu0
      %v4733 = vadd.f32 0.0, %v4732
      %v4734 = vpop.f32.mrf.mxu0
      %4735 = vdwg.mxu0
      %v4736 = vadd.f32 %v4568, %v4655
      %v4737 = vadd.f32 %v4569, %v4668
      %v4738 = vadd.f32 %v4570, %v4681
      %v4739 = vadd.f32 %v4571, %v4694
      %v4740 = vadd.f32 %v4572, %v4707
      %v4741 = vadd.f32 %v4573, %v4720
      %v4742 = vadd.f32 %v4574, %v4733
      %v4743 = vpack.c.bf16 %v4737, %v4736
      %v4744 = vpack.c.bf16 %v4739, %v4738
      %v4745 = vpack.c.bf16 %v4741, %v4740
      %v4746 = vpack.c.bf16 %v4742, %v4742
      %4747 = vst [vmem:[%s262] sm:$0xff] %v4743
      %4748 = vst [vmem:[%s262 + $0x8] sm:$0xff] %v4744
      %4749 = vst [vmem:[%s262 + $0x10] sm:$0xff] %v4745
      %4750 = vst [vmem:[%s262 + $0x18] sm:$0xf] %v4746
      %v4751 = vld [vmem:[%s253] sm:$0xff]
      %v4753 = vperm.slane %v4751, 0
      %v4754 = vperm.slane %v4751, 1
      %v4755 = vperm.slane %v4751, 2
      %v4756 = vperm.slane %v4751, 3
      %v4757 = vperm.slane %v4751, 4
      %v4758 = vperm.slane %v4751, 5
      %v4759 = vperm.slane %v4751, 6
      %v4767 = vmul.f32 %v4736, %v4753
      %v4768 = vmul.f32 %v4737, %v4754
      %v4769 = vmul.f32 %v4738, %v4755
      %v4770 = vmul.f32 %v4739, %v4756
      %v4771 = vmul.f32 %v4740, %v4757
      %v4772 = vmul.f32 %v4741, %v4758
      %v4773 = vmul.f32 %v4742, %v4759
      %v4774 = vadd.f32 %v4767, %v4768
      %v4775 = vadd.f32 %v4774, %v4769
      %v4776 = vadd.f32 %v4775, %v4770
      %v4777 = vadd.f32 %v4776, %v4771
      %v4778 = vadd.f32 %v4777, %v4772
      %v4779 = vadd.f32 %v4778, %v4773
      %4780 = vadd.xlane.f32.xlu0 %v4779
      %v4781 = vpop.xlane.xlu0 %4780
      %v4782 = vmul.f32 %v4767, %v4736
      %v4783 = vmul.f32 %v4768, %v4737
      %v4784 = vmul.f32 %v4769, %v4738
      %v4785 = vmul.f32 %v4770, %v4739
      %v4786 = vmul.f32 %v4771, %v4740
      %v4787 = vmul.f32 %v4772, %v4741
      %v4788 = vmul.f32 %v4773, %v4742
      %v4789 = vadd.f32 %v4782, %v4783
      %v4790 = vadd.f32 %v4789, %v4784
      %v4791 = vadd.f32 %v4790, %v4785
      %v4792 = vadd.f32 %v4791, %v4786
      %v4793 = vadd.f32 %v4792, %v4787
      %v4794 = vadd.f32 %v4793, %v4788
      %4795 = vadd.xlane.f32.xlu0 %v4794
      %v4796 = vpop.xlane.xlu0 %4795
      %vm4797 = vcmask 7168
      %v4798 = vsel %vm4797, %v4781, %v4796
      %vm4799 = vcmask 15360
      %4800 = vst.msk [vmem:[%s270] sm:$0xff] %vm4799, %v4798
      %s4801 = smul.u32 7, %s21
      %p4802 = scmp.lt.s32.totalorder %s20, 1
      %s4803 = scalar_select %p4802, %s20, 1
      %p4804 = scmp.lt.s32.totalorder %s4801, 6
      %s4805 = scalar_select %p4804, %s4801, 6
      %s4806 = smul.addr %s4803, 7
      %s4807 = sadd.s32 %s4805, %s4806
      %s4808 = smul.addr %s4807, 4
      %s4809 = scalar_lea.vmem %s3, %s4808
      %p4810 = scmp.lt.s32.totalorder %s20, 1
      %s4811 = scalar_select %p4810, %s20, 1
      %p4812 = scmp.lt.s32.totalorder %s21, 0
      %s4813 = scalar_select %p4812, %s21, 0
      %s4814 = sadd.s32 %s4813, %s4811
      %s4815 = smul.addr %s4814, 8
      %s4816 = scalar_lea.vmem %s4, %s4815
      // Predicated region
      $region33: #{cbr_forward.2} parent=31 // pred_check
        %p4817 = pneg %p123
      $region34: #{cbr_forward.2} parent=31 // pred_check_branch
        %4819 = sbr.rel (%p4817) target = $region36
      $region35: #{cbr_forward.2} parent=31 // pred_region
        %s4820 = smul.u32 7, %s21
      $region36: #{cbr_forward.2} parent=31 // pred_fallthru
        _
      // Predicated region
      $region37: #{cbr_forward.2} parent=31 // pred_check
        %p4821 = pneg %p151
      $region38: #{cbr_forward.2} parent=31 // pred_check_branch
        %4823 = sbr.rel (%p4821) target = $region40
      $region39: #{cbr_forward.2} parent=31 // pred_region
        _
      $region40: #{cbr_forward.2} parent=31 // pred_fallthru
        _
    $region32: #{cbr_forward.2} parent=5 // pred_fallthru
      _
    %p4824 = scmp.le.s32.totalorder 2, %s11
    // Predicated region
    $region41: #{cbr_forward.2} parent=5 // pred_check
      %p4825 = pneg %p4824
    $region42: #{cbr_forward.2} parent=5 // pred_check_branch
      %4827 = sbr.rel (%p4825) target = $region44
    $region43: #{cbr_forward.2} parent=5 // pred_region
      %s4828 = ssub.s32 %s11, 2
      // Predicated region
      $region45: #{cbr_forward.2} parent=43 // pred_check
        %p4829 = pneg %p129
      $region46: #{cbr_forward.2} parent=43 // pred_check_branch
        %4831 = sbr.rel (%p4829) target = $region48
      $region47: #{cbr_forward.2} parent=43 // pred_region
        %s4832 = smul.u32 7, %s23
        %p4833 = scmp.lt.s32.totalorder %s22, 1
        %s4834 = scalar_select %p4833, %s22, 1
        %p4835 = scmp.lt.s32.totalorder %s4832, 6
        %s4836 = scalar_select %p4835, %s4832, 6
        %s4837 = smul.addr %s4834, 7
        %s4838 = sadd.s32 %s4836, %s4837
        %s4839 = smul.addr %s4838, 4
        %s4840 = scalar_lea.vmem %s3, %s4839
      $region48: #{cbr_forward.2} parent=43 // pred_fallthru
        _
      // Predicated region
      $region49: #{cbr_forward.2} parent=43 // pred_check
        %p4841 = pneg %p157
      $region50: #{cbr_forward.2} parent=43 // pred_check_branch
        %4843 = sbr.rel (%p4841) target = $region52
      $region51: #{cbr_forward.2} parent=43 // pred_region
        %p4844 = scmp.lt.s32.totalorder %s22, 1
        %s4845 = scalar_select %p4844, %s22, 1
        %p4846 = scmp.lt.s32.totalorder %s23, 0
        %s4847 = scalar_select %p4846, %s23, 0
        %s4848 = sadd.s32 %s4847, %s4845
        %s4849 = smul.addr %s4848, 8
        %s4850 = scalar_lea.vmem %s4, %s4849
      $region52: #{cbr_forward.2} parent=43 // pred_fallthru
        _
    $region44: #{cbr_forward.2} parent=5 // pred_fallthru
      _
  $region6: #{cbr_forward.2} parent=0 // loop_footer
    %s15 = sadd.s32 1, %s11
  $region7: #{cbr_forward.2} parent=0 // loop_footer_branch
    %10 = sbr.rel target = $region3
  $region8: #{cbr_forward.2} parent=0 // loop_exit
    _

</llo_original>
